<compile_context>
chip_gen: v7x
topology: tpu7x:2x2x1
jax: 0.10.0
libtpu: 0.0.40
codegen_flags: <defaults>
</compile_context>

<pallas_src>
import math
import jax
import jax.numpy as jnp
from jax.experimental import pallas as pl
from jax.experimental.pallas import tpu as pltpu


# ----------------------------------------------------------------------------
# Fused encoder kernel.
#   x0_ref   : (S, 2B, E)  time-major layer-0 input, rows 0:B = fwd stream,
#                          rows B:2B = "backward" stream (batch-flipped emb).
#   len_ref  : (2B, 1)     int32 valid lengths (same vector for both halves).
#   wih_ref  : (L, E, 6E)  bf16, [Wih_f | Wih_b], each (E, 3E) = [r|z|n] blocks.
#   whh_ref  : (L, E, 6E)  bf16, [Whh_f | Whh_b].
#   bih_ref  : (L, 1, 6E)  f32 input biases  (zeros under this init).
#   bhh_ref  : (L, 1, 6E)  f32 hidden biases (zeros under this init).
#   fcw_ref  : (2E, 2H)    bf16 fc_hidden weight (transposed for x @ W).
#   fcb_ref  : (1, 2H)     f32 fc_hidden bias.
#   out_ref  : (L, S, B, 2H) f32 final output (wrapper transposes to (L,B,S,2H)).
#   acts_ref : (L, S, 2B, E) f32 scratch — per-layer GRU outputs (stay in VMEM).
#   gx_ref   : (S, 2B, 3E)   f32 scratch — hoisted input-gate projections.
# Gate order matches PyTorch: r (reset), z (update), n (new).
# ----------------------------------------------------------------------------
def encoder_fused_kernel(x0_ref, len_ref, wih_ref, whh_ref, bih_ref, bhh_ref,
                         fcw_ref, fcb_ref, out_ref, acts_ref, gx_ref):
    S, B2, E = x0_ref.shape
    L = wih_ref.shape[0]
    B = B2 // 2
    E3 = 3 * E
    H2 = fcw_ref.shape[1]
    f32 = jnp.float32
    bf16 = jnp.bfloat16

    # Hoisted masks (JAX does not CSE broadcasts — build them once).
    dir_mask2 = jax.lax.broadcasted_iota(jnp.int32, (B2, 1), 0) < B       # (2B,1)
    dir_mask3 = jax.lax.broadcasted_iota(jnp.int32, (1, B2, 1), 1) < B    # (1,2B,1)
    len_col = len_ref[...]                                                # (2B,1)

    for l in range(L):                       # L is small & static: unrolled
        # ---- hoisted input projection: one (S*2B, E) @ (E, 6E) matmul ----
        x_in = x0_ref[...] if l == 0 else acts_ref[l - 1]                 # (S,2B,E)
        x_flat = x_in.reshape(S * B2, E).astype(bf16)
        gx_full = jnp.dot(x_flat, wih_ref[l],
                          preferred_element_type=f32) + bih_ref[l]        # (S*2B,6E)
        gx_full = gx_full.reshape(S, B2, 2 * E3)
        # forward rows take the fwd-weight half, backward rows the bwd half.
        gx_ref[...] = jnp.where(dir_mask3, gx_full[..., :E3], gx_full[..., E3:])

        whh_l = whh_ref[l]                                                # (E,6E) bf16
        bhh_l = bhh_ref[l]                                                # (1,6E)
        bhh_rows = jnp.where(dir_mask2, bhh_l[:, :E3], bhh_l[:, E3:])     # (2B,3E)

        # ---- recurrence: only h @ Whh on the serial path, fully unrolled ----
        h = jnp.zeros((B2, E), f32)
        for t in range(S):                   # S = 8, static: unrolled
            gh_full = jnp.dot(h.astype(bf16), whh_l,
                              preferred_element_type=f32)                 # (2B,6E)
            gh = jnp.where(dir_mask2, gh_full[:, :E3], gh_full[:, E3:]) + bhh_rows
            gx_t = gx_ref[t]                                              # (2B,3E)

            r = jax.nn.sigmoid(gx_t[:, :E] + gh[:, :E])
            z = jax.nn.sigmoid(gx_t[:, E:2 * E] + gh[:, E:2 * E])
            n = jnp.tanh(gx_t[:, 2 * E:] + r * gh[:, 2 * E:])
            h_new = (1.0 - z) * n + z * h

            valid = t < len_col                                           # (2B,1)
            h = jnp.where(valid, h_new, h)           # packed-seq: no update past length
            acts_ref[l, t] = jnp.where(valid, h_new, 0.0)   # pad_packed: zeros past len

    # ---- epilogue: cat(hidden_f[j], flip(hidden_b, layers)[j]) -> fc ----
    fcw = fcw_ref[...]                                                    # (2E,2H)
    fcb = fcb_ref[...]                                                    # (1,2H)
    for j in range(L):
        a_f = acts_ref[j]                                                 # (S,2B,E)
        a_b = acts_ref[L - 1 - j]                                         # layer flip
        cat = jnp.concatenate([a_f[:, :B, :], a_b[:, B:, :]], axis=-1)    # (S,B,2E)
        y = jnp.dot(cat.reshape(S * B, 2 * E).astype(bf16), fcw,
                    preferred_element_type=f32) + fcb                     # (S*B,2H)
        out_ref[j] = y.reshape(S, B, H2)


# ----------------------------------------------------------------------------
# Parameter init (deterministic, mirrors Encoder.weight_init: xavier_uniform
# on weights, zeros on biases), already in the fused kernel layout.
# ----------------------------------------------------------------------------
def xavier_uniform(key, shape):
    fan_out, fan_in = shape                   # PyTorch convention for 2-D weights
    bound = math.sqrt(6.0 / (fan_in + fan_out))
    return jax.random.uniform(key, shape, jnp.float32, -bound, bound)


def init_encoder_params(key, input_size, embedding_size, hidden_size, num_layers):
    E, H = embedding_size, hidden_size
    keys = jax.random.split(key, 2 + 4 * num_layers)
    it = iter(keys)

    params = {}
    params['embedding'] = xavier_uniform(next(it), (input_size, E))

    def gru_dir_weights():
        w_ih = xavier_uniform(next(it), (3 * E, E))     # PyTorch (3E, E): [r; z; n]
        w_hh = xavier_uniform(next(it), (3 * E, E))
        return w_ih.T, w_hh.T                           # (E, 3E): columns = [r|z|n]

    f_w = [gru_dir_weights() for _ in range(num_layers)]
    b_w = [gru_dir_weights() for _ in range(num_layers)]

    wih_cat = jnp.stack([jnp.concatenate([f_w[l][0], b_w[l][0]], axis=1)
                         for l in range(num_layers)], axis=0)             # (L,E,6E)
    whh_cat = jnp.stack([jnp.concatenate([f_w[l][1], b_w[l][1]], axis=1)
                         for l in range(num_layers)], axis=0)
    params['wih_cat'] = wih_cat.astype(jnp.bfloat16)    # bf16 MXU operands
    params['whh_cat'] = whh_cat.astype(jnp.bfloat16)
    params['bih_cat'] = jnp.zeros((num_layers, 1, 6 * E), jnp.float32)
    params['bhh_cat'] = jnp.zeros((num_layers, 1, 6 * E), jnp.float32)

    fc_w = xavier_uniform(next(it), (2 * H, 2 * E))     # Linear(2E -> 2H), (out,in)
    params['fc_w_t'] = fc_w.T.astype(jnp.bfloat16)      # (2E, 2H) for x @ W^T
    params['fc_b'] = jnp.zeros((1, 2 * H), jnp.float32)
    return params


# ----------------------------------------------------------------------------
# Encoder forward: embedding gather + direction stacking in JAX glue, the
# whole GRU stack + fc in a single Pallas kernel.
# ----------------------------------------------------------------------------
def encoder_forward(params, x_tokens, lengths):
    B, S = x_tokens.shape
    E = params['embedding'].shape[1]
    L = params['wih_cat'].shape[0]
    H2 = params['fc_w_t'].shape[1]

    emb = jnp.take(params['embedding'], x_tokens, axis=0)        # (B, S, E)
    # nn.Dropout: identity at inference time.
    emb_rev = jnp.flip(emb, axis=0)          # torch.flip(embedding, [0]) (batch axis)
    # Time-major, directions stacked on the batch/sublane axis: (S, 2B, E).
    x0 = jnp.transpose(jnp.concatenate([emb, emb_rev], axis=0), (1, 0, 2))
    # Both halves are masked with the SAME (un-flipped) length vector, exactly
    # as pack_padded_sequence is called in the PyTorch module.
    len2 = jnp.concatenate([lengths, lengths]).reshape(2 * B, 1).astype(jnp.int32)

    out = pl.pallas_call(
        encoder_fused_kernel,
        out_shape=jax.ShapeDtypeStruct((L, S, B, H2), jnp.float32),
        in_specs=[pl.BlockSpec(memory_space=pltpu.MemorySpace.VMEM)] * 8,
        out_specs=pl.BlockSpec(memory_space=pltpu.MemorySpace.VMEM),
        scratch_shapes=[pltpu.VMEM((L, S, 2 * B, E), jnp.float32),
                        pltpu.VMEM((S, 2 * B, 3 * E), jnp.float32)],
    )(x0, len2, params['wih_cat'], params['whh_cat'],
      params['bih_cat'], params['bhh_cat'], params['fc_w_t'], params['fc_b'])

    # Single tiny layout fix at the very end: (L, S, B, 2H) -> (L, B, S, 2H).
    return jnp.transpose(out, (0, 2, 1, 3))


if __name__ == "__main__":
    # Small, module-consistent sizes.
    input_size = 50        # vocab
    embedding_size = 32
    hidden_size = 32
    output_size = 16       # unused in forward (as in the PyTorch module)
    num_layers = 2
    p = 0.1                # dropout prob (identity at inference)

    B, S = 4, 8

    key = jax.random.PRNGKey(0)
    k_param, k_tok = jax.random.split(key)

    params = init_encoder_params(k_param, input_size, embedding_size,
                                 hidden_size, num_layers)

    x_tokens = jax.random.randint(k_tok, (B, S), 0, input_size, jnp.int32)
    # pack_padded_sequence(enforce_sorted=True) requires descending lengths.
    lengths = jnp.array([8, 7, 5, 3], dtype=jnp.int32)

    fwd = jax.jit(encoder_forward)
    out = jax.block_until_ready(fwd(params, x_tokens, lengths))

    assert out.shape == (num_layers, B, S, 2 * hidden_size), out.shape
    assert out.dtype == jnp.float32
    assert bool(jnp.all(jnp.isfinite(out)))
    # pad_packed semantics: batch item 3 has length 3 -> positions 3: are
    # exactly zero (fc bias is zero under this init).
    assert bool(jnp.all(out[:, 3, 3:, :] == 0.0))
    print("KERNEL_OK")
</pallas_src>

<mosaic_0001>
module attributes {stable_mosaic.version = 11 : i64} {
  func.func @encoder_fused_kernel(%arg0: memref<8x8x32xf32, #tpu.memory_space<vmem>>, %arg1: memref<8x1xi32, #tpu.memory_space<vmem>>, %arg2: memref<2x32x192xbf16, #tpu.memory_space<vmem>>, %arg3: memref<2x32x192xbf16, #tpu.memory_space<vmem>>, %arg4: memref<2x1x192xf32, #tpu.memory_space<vmem>>, %arg5: memref<2x1x192xf32, #tpu.memory_space<vmem>>, %arg6: memref<64x64xbf16, #tpu.memory_space<vmem>>, %arg7: memref<1x64xf32, #tpu.memory_space<vmem>>, %arg8: memref<2x8x4x64xf32, #tpu.memory_space<vmem>>, %arg9: memref<2x8x8x32xf32, #tpu.memory_space<vmem>>, %arg10: memref<8x8x96xf32, #tpu.memory_space<vmem>>) attributes {dimension_semantics = [], scalar_prefetch = 0 : i64, scratch_operands = 2 : i64, tpu.core_type = #tpu.core_type<tc>} {
    %0 = tpu.iota {dimensions = array<i32: 0>} : vector<8x1xi32>
    %c4_i32 = arith.constant 4 : i32
    %1 = vector.broadcast %c4_i32 : i32 to vector<8x1xi32>
    %2 = arith.cmpi slt, %0, %1 : vector<8x1xi32>
    %3 = tpu.iota {dimensions = array<i32: 1>} : vector<1x8x1xi32>
    %c4_i32_0 = arith.constant 4 : i32
    %4 = vector.broadcast %c4_i32_0 : i32 to vector<1x8x1xi32>
    %5 = arith.cmpi slt, %3, %4 : vector<1x8x1xi32>
    %c0 = arith.constant 0 : index
    %c0_1 = arith.constant 0 : index
    %6 = vector.load %arg1[%c0, %c0_1] : memref<8x1xi32, #tpu.memory_space<vmem>>, vector<8x1xi32>
    %c0_2 = arith.constant 0 : index
    %c0_3 = arith.constant 0 : index
    %c0_4 = arith.constant 0 : index
    %7 = vector.load %arg0[%c0_2, %c0_3, %c0_4] : memref<8x8x32xf32, #tpu.memory_space<vmem>>, vector<8x8x32xf32>
    %8 = vector.shape_cast %7 : vector<8x8x32xf32> to vector<64x32xf32>
    %9 = arith.truncf %8 : vector<64x32xf32> to vector<64x32xbf16>
    %c0_5 = arith.constant 0 : index
    %c0_6 = arith.constant 0 : index
    %c0_7 = arith.constant 0 : index
    %10 = vector.load %arg2[%c0_5, %c0_6, %c0_7] : memref<2x32x192xbf16, #tpu.memory_space<vmem>>, vector<1x32x192xbf16>
    %11 = vector.shape_cast %10 : vector<1x32x192xbf16> to vector<32x192xbf16>
    %cst = arith.constant dense<0.000000e+00> : vector<64x192xf32>
    %12 = tpu.matmul %9, %11, %cst {dimension_numbers = #tpu.dot_dimension_numbers<[1], [0], [0], [1], [0, 0, 1, 1], [], []>} : vector<64x32xbf16>, vector<32x192xbf16>, vector<64x192xf32> -> vector<64x192xf32>
    %c0_8 = arith.constant 0 : index
    %c0_9 = arith.constant 0 : index
    %c0_10 = arith.constant 0 : index
    %13 = vector.load %arg4[%c0_8, %c0_9, %c0_10] : memref<2x1x192xf32, #tpu.memory_space<vmem>>, vector<1x1x192xf32>
    %14 = vector.shape_cast %13 : vector<1x1x192xf32> to vector<1x192xf32>
    %15 = vector.broadcast %14 : vector<1x192xf32> to vector<64x192xf32>
    %16 = arith.addf %12, %15 : vector<64x192xf32>
    %17 = vector.shape_cast %16 : vector<64x192xf32> to vector<8x8x192xf32>
    %18 = vector.extract_strided_slice %17 {offsets = [0, 0, 0], sizes = [8, 8, 96], strides = [1, 1, 1]} : vector<8x8x192xf32> to vector<8x8x96xf32>
    %19 = vector.extract_strided_slice %17 {offsets = [0, 0, 96], sizes = [8, 8, 96], strides = [1, 1, 1]} : vector<8x8x192xf32> to vector<8x8x96xf32>
    %20 = vector.shape_cast %5 : vector<1x8x1xi1> to vector<1x8x1xi1>
    %21 = vector.broadcast %20 : vector<1x8x1xi1> to vector<8x8x96xi1>
    %22 = arith.select %21, %18, %19 : vector<8x8x96xi1>, vector<8x8x96xf32>
    %c0_11 = arith.constant 0 : index
    %c0_12 = arith.constant 0 : index
    %c0_13 = arith.constant 0 : index
    %23 = vector.load %arg10[%c0_11, %c0_12, %c0_13] : memref<8x8x96xf32, #tpu.memory_space<vmem>>, vector<8x8x96xf32>
    tpu.vector_store %arg10[%c0_11, %c0_12, %c0_13], %22 {strides = array<i32>} : memref<8x8x96xf32, #tpu.memory_space<vmem>>, vector<8x8x96xf32>,
    %c0_14 = arith.constant 0 : index
    %c0_15 = arith.constant 0 : index
    %c0_16 = arith.constant 0 : index
    %24 = vector.load %arg3[%c0_14, %c0_15, %c0_16] : memref<2x32x192xbf16, #tpu.memory_space<vmem>>, vector<1x32x192xbf16>
    %25 = vector.shape_cast %24 : vector<1x32x192xbf16> to vector<32x192xbf16>
    %c0_17 = arith.constant 0 : index
    %c0_18 = arith.constant 0 : index
    %c0_19 = arith.constant 0 : index
    %26 = vector.load %arg5[%c0_17, %c0_18, %c0_19] : memref<2x1x192xf32, #tpu.memory_space<vmem>>, vector<1x1x192xf32>
    %27 = vector.shape_cast %26 : vector<1x1x192xf32> to vector<1x192xf32>
    %28 = vector.extract_strided_slice %27 {offsets = [0, 0], sizes = [1, 96], strides = [1, 1]} : vector<1x192xf32> to vector<1x96xf32>
    %29 = vector.extract_strided_slice %27 {offsets = [0, 96], sizes = [1, 96], strides = [1, 1]} : vector<1x192xf32> to vector<1x96xf32>
    %30 = vector.shape_cast %2 : vector<8x1xi1> to vector<8x1xi1>
    %31 = vector.broadcast %30 : vector<8x1xi1> to vector<8x96xi1>
    %32 = vector.shape_cast %28 : vector<1x96xf32> to vector<1x96xf32>
    %33 = vector.broadcast %32 : vector<1x96xf32> to vector<8x96xf32>
    %34 = vector.shape_cast %29 : vector<1x96xf32> to vector<1x96xf32>
    %35 = vector.broadcast %34 : vector<1x96xf32> to vector<8x96xf32>
    %36 = arith.select %31, %33, %35 : vector<8x96xi1>, vector<8x96xf32>
    %cst_20 = arith.constant 0.000000e+00 : f32
    %37 = vector.broadcast %cst_20 : f32 to vector<8x32xf32>
    %38 = arith.truncf %37 : vector<8x32xf32> to vector<8x32xbf16>
    %cst_21 = arith.constant dense<0.000000e+00> : vector<8x192xf32>
    %39 = tpu.matmul %38, %25, %cst_21 {dimension_numbers = #tpu.dot_dimension_numbers<[1], [0], [0], [1], [0, 0, 1, 1], [], []>} : vector<8x32xbf16>, vector<32x192xbf16>, vector<8x192xf32> -> vector<8x192xf32>
    %40 = vector.extract_strided_slice %39 {offsets = [0, 0], sizes = [8, 96], strides = [1, 1]} : vector<8x192xf32> to vector<8x96xf32>
    %41 = vector.extract_strided_slice %39 {offsets = [0, 96], sizes = [8, 96], strides = [1, 1]} : vector<8x192xf32> to vector<8x96xf32>
    %42 = vector.shape_cast %2 : vector<8x1xi1> to vector<8x1xi1>
    %43 = vector.broadcast %42 : vector<8x1xi1> to vector<8x96xi1>
    %44 = arith.select %43, %40, %41 : vector<8x96xi1>, vector<8x96xf32>
    %45 = arith.addf %44, %36 : vector<8x96xf32>
    %c0_22 = arith.constant 0 : index
    %c0_23 = arith.constant 0 : index
    %c0_24 = arith.constant 0 : index
    %46 = vector.load %arg10[%c0_22, %c0_23, %c0_24] : memref<8x8x96xf32, #tpu.memory_space<vmem>>, vector<1x8x96xf32>
    %47 = vector.shape_cast %46 : vector<1x8x96xf32> to vector<8x96xf32>
    %48 = vector.extract_strided_slice %47 {offsets = [0, 0], sizes = [8, 32], strides = [1, 1]} : vector<8x96xf32> to vector<8x32xf32>
    %49 = vector.extract_strided_slice %45 {offsets = [0, 0], sizes = [8, 32], strides = [1, 1]} : vector<8x96xf32> to vector<8x32xf32>
    %50 = arith.addf %48, %49 : vector<8x32xf32>
    %51 = arith.negf %50 : vector<8x32xf32>
    %52 = math.exp %51 : vector<8x32xf32>
    %cst_25 = arith.constant 1.000000e+00 : f32
    %53 = vector.broadcast %cst_25 : f32 to vector<8x32xf32>
    %54 = arith.addf %53, %52 : vector<8x32xf32>
    %55 = arith.divf %53, %54 : vector<8x32xf32>
    %56 = vector.extract_strided_slice %47 {offsets = [0, 32], sizes = [8, 32], strides = [1, 1]} : vector<8x96xf32> to vector<8x32xf32>
    %57 = vector.extract_strided_slice %45 {offsets = [0, 32], sizes = [8, 32], strides = [1, 1]} : vector<8x96xf32> to vector<8x32xf32>
    %58 = arith.addf %56, %57 : vector<8x32xf32>
    %59 = arith.negf %58 : vector<8x32xf32>
    %60 = math.exp %59 : vector<8x32xf32>
    %cst_26 = arith.constant 1.000000e+00 : f32
    %61 = vector.broadcast %cst_26 : f32 to vector<8x32xf32>
    %62 = arith.addf %61, %60 : vector<8x32xf32>
    %63 = arith.divf %61, %62 : vector<8x32xf32>
    %64 = vector.extract_strided_slice %47 {offsets = [0, 64], sizes = [8, 32], strides = [1, 1]} : vector<8x96xf32> to vector<8x32xf32>
    %65 = vector.extract_strided_slice %45 {offsets = [0, 64], sizes = [8, 32], strides = [1, 1]} : vector<8x96xf32> to vector<8x32xf32>
    %66 = arith.mulf %55, %65 : vector<8x32xf32>
    %67 = arith.addf %64, %66 : vector<8x32xf32>
    %68 = math.tanh %67 : vector<8x32xf32>
    %cst_27 = arith.constant 1.000000e+00 : f32
    %69 = vector.broadcast %cst_27 : f32 to vector<8x32xf32>
    %70 = arith.subf %69, %63 : vector<8x32xf32>
    %71 = arith.mulf %70, %68 : vector<8x32xf32>
    %72 = arith.mulf %63, %37 : vector<8x32xf32>
    %73 = arith.addf %71, %72 : vector<8x32xf32>
    %c0_i32 = arith.constant 0 : i32
    %74 = vector.broadcast %c0_i32 : i32 to vector<8x1xi32>
    %75 = arith.cmpi sgt, %6, %74 : vector<8x1xi32>
    %76 = vector.shape_cast %75 : vector<8x1xi1> to vector<8x1xi1>
    %77 = vector.broadcast %76 : vector<8x1xi1> to vector<8x32xi1>
    %78 = arith.select %77, %73, %37 : vector<8x32xi1>, vector<8x32xf32>
    %cst_28 = arith.constant 0.000000e+00 : f32
    %79 = vector.shape_cast %75 : vector<8x1xi1> to vector<8x1xi1>
    %80 = vector.broadcast %79 : vector<8x1xi1> to vector<8x32xi1>
    %81 = vector.broadcast %cst_28 : f32 to vector<8x32xf32>
    %82 = arith.select %80, %73, %81 : vector<8x32xi1>, vector<8x32xf32>
    %c0_29 = arith.constant 0 : index
    %c0_30 = arith.constant 0 : index
    %c0_31 = arith.constant 0 : index
    %c0_32 = arith.constant 0 : index
    %83 = vector.load %arg9[%c0_29, %c0_30, %c0_31, %c0_32] : memref<2x8x8x32xf32, #tpu.memory_space<vmem>>, vector<1x1x8x32xf32>
    %84 = vector.shape_cast %83 : vector<1x1x8x32xf32> to vector<8x32xf32>
    %85 = vector.shape_cast %82 : vector<8x32xf32> to vector<1x1x8x32xf32>
    tpu.vector_store %arg9[%c0_29, %c0_30, %c0_31, %c0_32], %85 {strides = array<i32>} : memref<2x8x8x32xf32, #tpu.memory_space<vmem>>, vector<1x1x8x32xf32>,
    %86 = arith.truncf %78 : vector<8x32xf32> to vector<8x32xbf16>
    %cst_33 = arith.constant dense<0.000000e+00> : vector<8x192xf32>
    %87 = tpu.matmul %86, %25, %cst_33 {dimension_numbers = #tpu.dot_dimension_numbers<[1], [0], [0], [1], [0, 0, 1, 1], [], []>} : vector<8x32xbf16>, vector<32x192xbf16>, vector<8x192xf32> -> vector<8x192xf32>
    %88 = vector.extract_strided_slice %87 {offsets = [0, 0], sizes = [8, 96], strides = [1, 1]} : vector<8x192xf32> to vector<8x96xf32>
    %89 = vector.extract_strided_slice %87 {offsets = [0, 96], sizes = [8, 96], strides = [1, 1]} : vector<8x192xf32> to vector<8x96xf32>
    %90 = vector.shape_cast %2 : vector<8x1xi1> to vector<8x1xi1>
    %91 = vector.broadcast %90 : vector<8x1xi1> to vector<8x96xi1>
    %92 = arith.select %91, %88, %89 : vector<8x96xi1>, vector<8x96xf32>
    %93 = arith.addf %92, %36 : vector<8x96xf32>
    %c1 = arith.constant 1 : index
    %c0_34 = arith.constant 0 : index
    %c0_35 = arith.constant 0 : index
    %94 = vector.load %arg10[%c1, %c0_34, %c0_35] : memref<8x8x96xf32, #tpu.memory_space<vmem>>, vector<1x8x96xf32>
    %95 = vector.shape_cast %94 : vector<1x8x96xf32> to vector<8x96xf32>
    %96 = vector.extract_strided_slice %95 {offsets = [0, 0], sizes = [8, 32], strides = [1, 1]} : vector<8x96xf32> to vector<8x32xf32>
    %97 = vector.extract_strided_slice %93 {offsets = [0, 0], sizes = [8, 32], strides = [1, 1]} : vector<8x96xf32> to vector<8x32xf32>
    %98 = arith.addf %96, %97 : vector<8x32xf32>
    %99 = arith.negf %98 : vector<8x32xf32>
    %100 = math.exp %99 : vector<8x32xf32>
    %cst_36 = arith.constant 1.000000e+00 : f32
    %101 = vector.broadcast %cst_36 : f32 to vector<8x32xf32>
    %102 = arith.addf %101, %100 : vector<8x32xf32>
    %103 = arith.divf %101, %102 : vector<8x32xf32>
    %104 = vector.extract_strided_slice %95 {offsets = [0, 32], sizes = [8, 32], strides = [1, 1]} : vector<8x96xf32> to vector<8x32xf32>
    %105 = vector.extract_strided_slice %93 {offsets = [0, 32], sizes = [8, 32], strides = [1, 1]} : vector<8x96xf32> to vector<8x32xf32>
    %106 = arith.addf %104, %105 : vector<8x32xf32>
    %107 = arith.negf %106 : vector<8x32xf32>
    %108 = math.exp %107 : vector<8x32xf32>
    %cst_37 = arith.constant 1.000000e+00 : f32
    %109 = vector.broadcast %cst_37 : f32 to vector<8x32xf32>
    %110 = arith.addf %109, %108 : vector<8x32xf32>
    %111 = arith.divf %109, %110 : vector<8x32xf32>
    %112 = vector.extract_strided_slice %95 {offsets = [0, 64], sizes = [8, 32], strides = [1, 1]} : vector<8x96xf32> to vector<8x32xf32>
    %113 = vector.extract_strided_slice %93 {offsets = [0, 64], sizes = [8, 32], strides = [1, 1]} : vector<8x96xf32> to vector<8x32xf32>
    %114 = arith.mulf %103, %113 : vector<8x32xf32>
    %115 = arith.addf %112, %114 : vector<8x32xf32>
    %116 = math.tanh %115 : vector<8x32xf32>
    %cst_38 = arith.constant 1.000000e+00 : f32
    %117 = vector.broadcast %cst_38 : f32 to vector<8x32xf32>
    %118 = arith.subf %117, %111 : vector<8x32xf32>
    %119 = arith.mulf %118, %116 : vector<8x32xf32>
    %120 = arith.mulf %111, %78 : vector<8x32xf32>
    %121 = arith.addf %119, %120 : vector<8x32xf32>
    %c1_i32 = arith.constant 1 : i32
    %122 = vector.broadcast %c1_i32 : i32 to vector<8x1xi32>
    %123 = arith.cmpi sgt, %6, %122 : vector<8x1xi32>
    %124 = vector.shape_cast %123 : vector<8x1xi1> to vector<8x1xi1>
    %125 = vector.broadcast %124 : vector<8x1xi1> to vector<8x32xi1>
    %126 = arith.select %125, %121, %78 : vector<8x32xi1>, vector<8x32xf32>
    %cst_39 = arith.constant 0.000000e+00 : f32
    %127 = vector.shape_cast %123 : vector<8x1xi1> to vector<8x1xi1>
    %128 = vector.broadcast %127 : vector<8x1xi1> to vector<8x32xi1>
    %129 = vector.broadcast %cst_39 : f32 to vector<8x32xf32>
    %130 = arith.select %128, %121, %129 : vector<8x32xi1>, vector<8x32xf32>
    %c0_40 = arith.constant 0 : index
    %c1_41 = arith.constant 1 : index
    %c0_42 = arith.constant 0 : index
    %c0_43 = arith.constant 0 : index
    %131 = vector.load %arg9[%c0_40, %c1_41, %c0_42, %c0_43] : memref<2x8x8x32xf32, #tpu.memory_space<vmem>>, vector<1x1x8x32xf32>
    %132 = vector.shape_cast %131 : vector<1x1x8x32xf32> to vector<8x32xf32>
    %133 = vector.shape_cast %130 : vector<8x32xf32> to vector<1x1x8x32xf32>
    tpu.vector_store %arg9[%c0_40, %c1_41, %c0_42, %c0_43], %133 {strides = array<i32>} : memref<2x8x8x32xf32, #tpu.memory_space<vmem>>, vector<1x1x8x32xf32>,
    %134 = arith.truncf %126 : vector<8x32xf32> to vector<8x32xbf16>
    %cst_44 = arith.constant dense<0.000000e+00> : vector<8x192xf32>
    %135 = tpu.matmul %134, %25, %cst_44 {dimension_numbers = #tpu.dot_dimension_numbers<[1], [0], [0], [1], [0, 0, 1, 1], [], []>} : vector<8x32xbf16>, vector<32x192xbf16>, vector<8x192xf32> -> vector<8x192xf32>
    %136 = vector.extract_strided_slice %135 {offsets = [0, 0], sizes = [8, 96], strides = [1, 1]} : vector<8x192xf32> to vector<8x96xf32>
    %137 = vector.extract_strided_slice %135 {offsets = [0, 96], sizes = [8, 96], strides = [1, 1]} : vector<8x192xf32> to vector<8x96xf32>
    %138 = vector.shape_cast %2 : vector<8x1xi1> to vector<8x1xi1>
    %139 = vector.broadcast %138 : vector<8x1xi1> to vector<8x96xi1>
    %140 = arith.select %139, %136, %137 : vector<8x96xi1>, vector<8x96xf32>
    %141 = arith.addf %140, %36 : vector<8x96xf32>
    %c2 = arith.constant 2 : index
    %c0_45 = arith.constant 0 : index
    %c0_46 = arith.constant 0 : index
    %142 = vector.load %arg10[%c2, %c0_45, %c0_46] : memref<8x8x96xf32, #tpu.memory_space<vmem>>, vector<1x8x96xf32>
    %143 = vector.shape_cast %142 : vector<1x8x96xf32> to vector<8x96xf32>
    %144 = vector.extract_strided_slice %143 {offsets = [0, 0], sizes = [8, 32], strides = [1, 1]} : vector<8x96xf32> to vector<8x32xf32>
    %145 = vector.extract_strided_slice %141 {offsets = [0, 0], sizes = [8, 32], strides = [1, 1]} : vector<8x96xf32> to vector<8x32xf32>
    %146 = arith.addf %144, %145 : vector<8x32xf32>
    %147 = arith.negf %146 : vector<8x32xf32>
    %148 = math.exp %147 : vector<8x32xf32>
    %cst_47 = arith.constant 1.000000e+00 : f32
    %149 = vector.broadcast %cst_47 : f32 to vector<8x32xf32>
    %150 = arith.addf %149, %148 : vector<8x32xf32>
    %151 = arith.divf %149, %150 : vector<8x32xf32>
    %152 = vector.extract_strided_slice %143 {offsets = [0, 32], sizes = [8, 32], strides = [1, 1]} : vector<8x96xf32> to vector<8x32xf32>
    %153 = vector.extract_strided_slice %141 {offsets = [0, 32], sizes = [8, 32], strides = [1, 1]} : vector<8x96xf32> to vector<8x32xf32>
    %154 = arith.addf %152, %153 : vector<8x32xf32>
    %155 = arith.negf %154 : vector<8x32xf32>
    %156 = math.exp %155 : vector<8x32xf32>
    %cst_48 = arith.constant 1.000000e+00 : f32
    %157 = vector.broadcast %cst_48 : f32 to vector<8x32xf32>
    %158 = arith.addf %157, %156 : vector<8x32xf32>
    %159 = arith.divf %157, %158 : vector<8x32xf32>
    %160 = vector.extract_strided_slice %143 {offsets = [0, 64], sizes = [8, 32], strides = [1, 1]} : vector<8x96xf32> to vector<8x32xf32>
    %161 = vector.extract_strided_slice %141 {offsets = [0, 64], sizes = [8, 32], strides = [1, 1]} : vector<8x96xf32> to vector<8x32xf32>
    %162 = arith.mulf %151, %161 : vector<8x32xf32>
    %163 = arith.addf %160, %162 : vector<8x32xf32>
    %164 = math.tanh %163 : vector<8x32xf32>
    %cst_49 = arith.constant 1.000000e+00 : f32
    %165 = vector.broadcast %cst_49 : f32 to vector<8x32xf32>
    %166 = arith.subf %165, %159 : vector<8x32xf32>
    %167 = arith.mulf %166, %164 : vector<8x32xf32>
    %168 = arith.mulf %159, %126 : vector<8x32xf32>
    %169 = arith.addf %167, %168 : vector<8x32xf32>
    %c2_i32 = arith.constant 2 : i32
    %170 = vector.broadcast %c2_i32 : i32 to vector<8x1xi32>
    %171 = arith.cmpi sgt, %6, %170 : vector<8x1xi32>
    %172 = vector.shape_cast %171 : vector<8x1xi1> to vector<8x1xi1>
    %173 = vector.broadcast %172 : vector<8x1xi1> to vector<8x32xi1>
    %174 = arith.select %173, %169, %126 : vector<8x32xi1>, vector<8x32xf32>
    %cst_50 = arith.constant 0.000000e+00 : f32
    %175 = vector.shape_cast %171 : vector<8x1xi1> to vector<8x1xi1>
    %176 = vector.broadcast %175 : vector<8x1xi1> to vector<8x32xi1>
    %177 = vector.broadcast %cst_50 : f32 to vector<8x32xf32>
    %178 = arith.select %176, %169, %177 : vector<8x32xi1>, vector<8x32xf32>
    %c0_51 = arith.constant 0 : index
    %c2_52 = arith.constant 2 : index
    %c0_53 = arith.constant 0 : index
    %c0_54 = arith.constant 0 : index
    %179 = vector.load %arg9[%c0_51, %c2_52, %c0_53, %c0_54] : memref<2x8x8x32xf32, #tpu.memory_space<vmem>>, vector<1x1x8x32xf32>
    %180 = vector.shape_cast %179 : vector<1x1x8x32xf32> to vector<8x32xf32>
    %181 = vector.shape_cast %178 : vector<8x32xf32> to vector<1x1x8x32xf32>
    tpu.vector_store %arg9[%c0_51, %c2_52, %c0_53, %c0_54], %181 {strides = array<i32>} : memref<2x8x8x32xf32, #tpu.memory_space<vmem>>, vector<1x1x8x32xf32>,
    %182 = arith.truncf %174 : vector<8x32xf32> to vector<8x32xbf16>
    %cst_55 = arith.constant dense<0.000000e+00> : vector<8x192xf32>
    %183 = tpu.matmul %182, %25, %cst_55 {dimension_numbers = #tpu.dot_dimension_numbers<[1], [0], [0], [1], [0, 0, 1, 1], [], []>} : vector<8x32xbf16>, vector<32x192xbf16>, vector<8x192xf32> -> vector<8x192xf32>
    %184 = vector.extract_strided_slice %183 {offsets = [0, 0], sizes = [8, 96], strides = [1, 1]} : vector<8x192xf32> to vector<8x96xf32>
    %185 = vector.extract_strided_slice %183 {offsets = [0, 96], sizes = [8, 96], strides = [1, 1]} : vector<8x192xf32> to vector<8x96xf32>
    %186 = vector.shape_cast %2 : vector<8x1xi1> to vector<8x1xi1>
    %187 = vector.broadcast %186 : vector<8x1xi1> to vector<8x96xi1>
    %188 = arith.select %187, %184, %185 : vector<8x96xi1>, vector<8x96xf32>
    %189 = arith.addf %188, %36 : vector<8x96xf32>
    %c3 = arith.constant 3 : index
    %c0_56 = arith.constant 0 : index
    %c0_57 = arith.constant 0 : index
    %190 = vector.load %arg10[%c3, %c0_56, %c0_57] : memref<8x8x96xf32, #tpu.memory_space<vmem>>, vector<1x8x96xf32>
    %191 = vector.shape_cast %190 : vector<1x8x96xf32> to vector<8x96xf32>
    %192 = vector.extract_strided_slice %191 {offsets = [0, 0], sizes = [8, 32], strides = [1, 1]} : vector<8x96xf32> to vector<8x32xf32>
    %193 = vector.extract_strided_slice %189 {offsets = [0, 0], sizes = [8, 32], strides = [1, 1]} : vector<8x96xf32> to vector<8x32xf32>
    %194 = arith.addf %192, %193 : vector<8x32xf32>
    %195 = arith.negf %194 : vector<8x32xf32>
    %196 = math.exp %195 : vector<8x32xf32>
    %cst_58 = arith.constant 1.000000e+00 : f32
    %197 = vector.broadcast %cst_58 : f32 to vector<8x32xf32>
    %198 = arith.addf %197, %196 : vector<8x32xf32>
    %199 = arith.divf %197, %198 : vector<8x32xf32>
    %200 = vector.extract_strided_slice %191 {offsets = [0, 32], sizes = [8, 32], strides = [1, 1]} : vector<8x96xf32> to vector<8x32xf32>
    %201 = vector.extract_strided_slice %189 {offsets = [0, 32], sizes = [8, 32], strides = [1, 1]} : vector<8x96xf32> to vector<8x32xf32>
    %202 = arith.addf %200, %201 : vector<8x32xf32>
    %203 = arith.negf %202 : vector<8x32xf32>
    %204 = math.exp %203 : vector<8x32xf32>
    %cst_59 = arith.constant 1.000000e+00 : f32
    %205 = vector.broadcast %cst_59 : f32 to vector<8x32xf32>
    %206 = arith.addf %205, %204 : vector<8x32xf32>
    %207 = arith.divf %205, %206 : vector<8x32xf32>
    %208 = vector.extract_strided_slice %191 {offsets = [0, 64], sizes = [8, 32], strides = [1, 1]} : vector<8x96xf32> to vector<8x32xf32>
    %209 = vector.extract_strided_slice %189 {offsets = [0, 64], sizes = [8, 32], strides = [1, 1]} : vector<8x96xf32> to vector<8x32xf32>
    %210 = arith.mulf %199, %209 : vector<8x32xf32>
    %211 = arith.addf %208, %210 : vector<8x32xf32>
    %212 = math.tanh %211 : vector<8x32xf32>
    %cst_60 = arith.constant 1.000000e+00 : f32
    %213 = vector.broadcast %cst_60 : f32 to vector<8x32xf32>
    %214 = arith.subf %213, %207 : vector<8x32xf32>
    %215 = arith.mulf %214, %212 : vector<8x32xf32>
    %216 = arith.mulf %207, %174 : vector<8x32xf32>
    %217 = arith.addf %215, %216 : vector<8x32xf32>
    %c3_i32 = arith.constant 3 : i32
    %218 = vector.broadcast %c3_i32 : i32 to vector<8x1xi32>
    %219 = arith.cmpi sgt, %6, %218 : vector<8x1xi32>
    %220 = vector.shape_cast %219 : vector<8x1xi1> to vector<8x1xi1>
    %221 = vector.broadcast %220 : vector<8x1xi1> to vector<8x32xi1>
    %222 = arith.select %221, %217, %174 : vector<8x32xi1>, vector<8x32xf32>
    %cst_61 = arith.constant 0.000000e+00 : f32
    %223 = vector.shape_cast %219 : vector<8x1xi1> to vector<8x1xi1>
    %224 = vector.broadcast %223 : vector<8x1xi1> to vector<8x32xi1>
    %225 = vector.broadcast %cst_61 : f32 to vector<8x32xf32>
    %226 = arith.select %224, %217, %225 : vector<8x32xi1>, vector<8x32xf32>
    %c0_62 = arith.constant 0 : index
    %c3_63 = arith.constant 3 : index
    %c0_64 = arith.constant 0 : index
    %c0_65 = arith.constant 0 : index
    %227 = vector.load %arg9[%c0_62, %c3_63, %c0_64, %c0_65] : memref<2x8x8x32xf32, #tpu.memory_space<vmem>>, vector<1x1x8x32xf32>
    %228 = vector.shape_cast %227 : vector<1x1x8x32xf32> to vector<8x32xf32>
    %229 = vector.shape_cast %226 : vector<8x32xf32> to vector<1x1x8x32xf32>
    tpu.vector_store %arg9[%c0_62, %c3_63, %c0_64, %c0_65], %229 {strides = array<i32>} : memref<2x8x8x32xf32, #tpu.memory_space<vmem>>, vector<1x1x8x32xf32>,
    %230 = arith.truncf %222 : vector<8x32xf32> to vector<8x32xbf16>
    %cst_66 = arith.constant dense<0.000000e+00> : vector<8x192xf32>
    %231 = tpu.matmul %230, %25, %cst_66 {dimension_numbers = #tpu.dot_dimension_numbers<[1], [0], [0], [1], [0, 0, 1, 1], [], []>} : vector<8x32xbf16>, vector<32x192xbf16>, vector<8x192xf32> -> vector<8x192xf32>
    %232 = vector.extract_strided_slice %231 {offsets = [0, 0], sizes = [8, 96], strides = [1, 1]} : vector<8x192xf32> to vector<8x96xf32>
    %233 = vector.extract_strided_slice %231 {offsets = [0, 96], sizes = [8, 96], strides = [1, 1]} : vector<8x192xf32> to vector<8x96xf32>
    %234 = vector.shape_cast %2 : vector<8x1xi1> to vector<8x1xi1>
    %235 = vector.broadcast %234 : vector<8x1xi1> to vector<8x96xi1>
    %236 = arith.select %235, %232, %233 : vector<8x96xi1>, vector<8x96xf32>
    %237 = arith.addf %236, %36 : vector<8x96xf32>
    %c4 = arith.constant 4 : index
    %c0_67 = arith.constant 0 : index
    %c0_68 = arith.constant 0 : index
    %238 = vector.load %arg10[%c4, %c0_67, %c0_68] : memref<8x8x96xf32, #tpu.memory_space<vmem>>, vector<1x8x96xf32>
    %239 = vector.shape_cast %238 : vector<1x8x96xf32> to vector<8x96xf32>
    %240 = vector.extract_strided_slice %239 {offsets = [0, 0], sizes = [8, 32], strides = [1, 1]} : vector<8x96xf32> to vector<8x32xf32>
    %241 = vector.extract_strided_slice %237 {offsets = [0, 0], sizes = [8, 32], strides = [1, 1]} : vector<8x96xf32> to vector<8x32xf32>
    %242 = arith.addf %240, %241 : vector<8x32xf32>
    %243 = arith.negf %242 : vector<8x32xf32>
    %244 = math.exp %243 : vector<8x32xf32>
    %cst_69 = arith.constant 1.000000e+00 : f32
    %245 = vector.broadcast %cst_69 : f32 to vector<8x32xf32>
    %246 = arith.addf %245, %244 : vector<8x32xf32>
    %247 = arith.divf %245, %246 : vector<8x32xf32>
    %248 = vector.extract_strided_slice %239 {offsets = [0, 32], sizes = [8, 32], strides = [1, 1]} : vector<8x96xf32> to vector<8x32xf32>
    %249 = vector.extract_strided_slice %237 {offsets = [0, 32], sizes = [8, 32], strides = [1, 1]} : vector<8x96xf32> to vector<8x32xf32>
    %250 = arith.addf %248, %249 : vector<8x32xf32>
    %251 = arith.negf %250 : vector<8x32xf32>
    %252 = math.exp %251 : vector<8x32xf32>
    %cst_70 = arith.constant 1.000000e+00 : f32
    %253 = vector.broadcast %cst_70 : f32 to vector<8x32xf32>
    %254 = arith.addf %253, %252 : vector<8x32xf32>
    %255 = arith.divf %253, %254 : vector<8x32xf32>
    %256 = vector.extract_strided_slice %239 {offsets = [0, 64], sizes = [8, 32], strides = [1, 1]} : vector<8x96xf32> to vector<8x32xf32>
    %257 = vector.extract_strided_slice %237 {offsets = [0, 64], sizes = [8, 32], strides = [1, 1]} : vector<8x96xf32> to vector<8x32xf32>
    %258 = arith.mulf %247, %257 : vector<8x32xf32>
    %259 = arith.addf %256, %258 : vector<8x32xf32>
    %260 = math.tanh %259 : vector<8x32xf32>
    %cst_71 = arith.constant 1.000000e+00 : f32
    %261 = vector.broadcast %cst_71 : f32 to vector<8x32xf32>
    %262 = arith.subf %261, %255 : vector<8x32xf32>
    %263 = arith.mulf %262, %260 : vector<8x32xf32>
    %264 = arith.mulf %255, %222 : vector<8x32xf32>
    %265 = arith.addf %263, %264 : vector<8x32xf32>
    %c4_i32_72 = arith.constant 4 : i32
    %266 = vector.broadcast %c4_i32_72 : i32 to vector<8x1xi32>
    %267 = arith.cmpi sgt, %6, %266 : vector<8x1xi32>
    %268 = vector.shape_cast %267 : vector<8x1xi1> to vector<8x1xi1>
    %269 = vector.broadcast %268 : vector<8x1xi1> to vector<8x32xi1>
    %270 = arith.select %269, %265, %222 : vector<8x32xi1>, vector<8x32xf32>
    %cst_73 = arith.constant 0.000000e+00 : f32
    %271 = vector.shape_cast %267 : vector<8x1xi1> to vector<8x1xi1>
    %272 = vector.broadcast %271 : vector<8x1xi1> to vector<8x32xi1>
    %273 = vector.broadcast %cst_73 : f32 to vector<8x32xf32>
    %274 = arith.select %272, %265, %273 : vector<8x32xi1>, vector<8x32xf32>
    %c0_74 = arith.constant 0 : index
    %c4_75 = arith.constant 4 : index
    %c0_76 = arith.constant 0 : index
    %c0_77 = arith.constant 0 : index
    %275 = vector.load %arg9[%c0_74, %c4_75, %c0_76, %c0_77] : memref<2x8x8x32xf32, #tpu.memory_space<vmem>>, vector<1x1x8x32xf32>
    %276 = vector.shape_cast %275 : vector<1x1x8x32xf32> to vector<8x32xf32>
    %277 = vector.shape_cast %274 : vector<8x32xf32> to vector<1x1x8x32xf32>
    tpu.vector_store %arg9[%c0_74, %c4_75, %c0_76, %c0_77], %277 {strides = array<i32>} : memref<2x8x8x32xf32, #tpu.memory_space<vmem>>, vector<1x1x8x32xf32>,
    %278 = arith.truncf %270 : vector<8x32xf32> to vector<8x32xbf16>
    %cst_78 = arith.constant dense<0.000000e+00> : vector<8x192xf32>
    %279 = tpu.matmul %278, %25, %cst_78 {dimension_numbers = #tpu.dot_dimension_numbers<[1], [0], [0], [1], [0, 0, 1, 1], [], []>} : vector<8x32xbf16>, vector<32x192xbf16>, vector<8x192xf32> -> vector<8x192xf32>
    %280 = vector.extract_strided_slice %279 {offsets = [0, 0], sizes = [8, 96], strides = [1, 1]} : vector<8x192xf32> to vector<8x96xf32>
    %281 = vector.extract_strided_slice %279 {offsets = [0, 96], sizes = [8, 96], strides = [1, 1]} : vector<8x192xf32> to vector<8x96xf32>
    %282 = vector.shape_cast %2 : vector<8x1xi1> to vector<8x1xi1>
    %283 = vector.broadcast %282 : vector<8x1xi1> to vector<8x96xi1>
    %284 = arith.select %283, %280, %281 : vector<8x96xi1>, vector<8x96xf32>
    %285 = arith.addf %284, %36 : vector<8x96xf32>
    %c5 = arith.constant 5 : index
    %c0_79 = arith.constant 0 : index
    %c0_80 = arith.constant 0 : index
    %286 = vector.load %arg10[%c5, %c0_79, %c0_80] : memref<8x8x96xf32, #tpu.memory_space<vmem>>, vector<1x8x96xf32>
    %287 = vector.shape_cast %286 : vector<1x8x96xf32> to vector<8x96xf32>
    %288 = vector.extract_strided_slice %287 {offsets = [0, 0], sizes = [8, 32], strides = [1, 1]} : vector<8x96xf32> to vector<8x32xf32>
    %289 = vector.extract_strided_slice %285 {offsets = [0, 0], sizes = [8, 32], strides = [1, 1]} : vector<8x96xf32> to vector<8x32xf32>
    %290 = arith.addf %288, %289 : vector<8x32xf32>
    %291 = arith.negf %290 : vector<8x32xf32>
    %292 = math.exp %291 : vector<8x32xf32>
    %cst_81 = arith.constant 1.000000e+00 : f32
    %293 = vector.broadcast %cst_81 : f32 to vector<8x32xf32>
    %294 = arith.addf %293, %292 : vector<8x32xf32>
    %295 = arith.divf %293, %294 : vector<8x32xf32>
    %296 = vector.extract_strided_slice %287 {offsets = [0, 32], sizes = [8, 32], strides = [1, 1]} : vector<8x96xf32> to vector<8x32xf32>
    %297 = vector.extract_strided_slice %285 {offsets = [0, 32], sizes = [8, 32], strides = [1, 1]} : vector<8x96xf32> to vector<8x32xf32>
    %298 = arith.addf %296, %297 : vector<8x32xf32>
    %299 = arith.negf %298 : vector<8x32xf32>
    %300 = math.exp %299 : vector<8x32xf32>
    %cst_82 = arith.constant 1.000000e+00 : f32
    %301 = vector.broadcast %cst_82 : f32 to vector<8x32xf32>
    %302 = arith.addf %301, %300 : vector<8x32xf32>
    %303 = arith.divf %301, %302 : vector<8x32xf32>
    %304 = vector.extract_strided_slice %287 {offsets = [0, 64], sizes = [8, 32], strides = [1, 1]} : vector<8x96xf32> to vector<8x32xf32>
    %305 = vector.extract_strided_slice %285 {offsets = [0, 64], sizes = [8, 32], strides = [1, 1]} : vector<8x96xf32> to vector<8x32xf32>
    %306 = arith.mulf %295, %305 : vector<8x32xf32>
    %307 = arith.addf %304, %306 : vector<8x32xf32>
    %308 = math.tanh %307 : vector<8x32xf32>
    %cst_83 = arith.constant 1.000000e+00 : f32
    %309 = vector.broadcast %cst_83 : f32 to vector<8x32xf32>
    %310 = arith.subf %309, %303 : vector<8x32xf32>
    %311 = arith.mulf %310, %308 : vector<8x32xf32>
    %312 = arith.mulf %303, %270 : vector<8x32xf32>
    %313 = arith.addf %311, %312 : vector<8x32xf32>
    %c5_i32 = arith.constant 5 : i32
    %314 = vector.broadcast %c5_i32 : i32 to vector<8x1xi32>
    %315 = arith.cmpi sgt, %6, %314 : vector<8x1xi32>
    %316 = vector.shape_cast %315 : vector<8x1xi1> to vector<8x1xi1>
    %317 = vector.broadcast %316 : vector<8x1xi1> to vector<8x32xi1>
    %318 = arith.select %317, %313, %270 : vector<8x32xi1>, vector<8x32xf32>
    %cst_84 = arith.constant 0.000000e+00 : f32
    %319 = vector.shape_cast %315 : vector<8x1xi1> to vector<8x1xi1>
    %320 = vector.broadcast %319 : vector<8x1xi1> to vector<8x32xi1>
    %321 = vector.broadcast %cst_84 : f32 to vector<8x32xf32>
    %322 = arith.select %320, %313, %321 : vector<8x32xi1>, vector<8x32xf32>
    %c0_85 = arith.constant 0 : index
    %c5_86 = arith.constant 5 : index
    %c0_87 = arith.constant 0 : index
    %c0_88 = arith.constant 0 : index
    %323 = vector.load %arg9[%c0_85, %c5_86, %c0_87, %c0_88] : memref<2x8x8x32xf32, #tpu.memory_space<vmem>>, vector<1x1x8x32xf32>
    %324 = vector.shape_cast %323 : vector<1x1x8x32xf32> to vector<8x32xf32>
    %325 = vector.shape_cast %322 : vector<8x32xf32> to vector<1x1x8x32xf32>
    tpu.vector_store %arg9[%c0_85, %c5_86, %c0_87, %c0_88], %325 {strides = array<i32>} : memref<2x8x8x32xf32, #tpu.memory_space<vmem>>, vector<1x1x8x32xf32>,
    %326 = arith.truncf %318 : vector<8x32xf32> to vector<8x32xbf16>
    %cst_89 = arith.constant dense<0.000000e+00> : vector<8x192xf32>
    %327 = tpu.matmul %326, %25, %cst_89 {dimension_numbers = #tpu.dot_dimension_numbers<[1], [0], [0], [1], [0, 0, 1, 1], [], []>} : vector<8x32xbf16>, vector<32x192xbf16>, vector<8x192xf32> -> vector<8x192xf32>
    %328 = vector.extract_strided_slice %327 {offsets = [0, 0], sizes = [8, 96], strides = [1, 1]} : vector<8x192xf32> to vector<8x96xf32>
    %329 = vector.extract_strided_slice %327 {offsets = [0, 96], sizes = [8, 96], strides = [1, 1]} : vector<8x192xf32> to vector<8x96xf32>
    %330 = vector.shape_cast %2 : vector<8x1xi1> to vector<8x1xi1>
    %331 = vector.broadcast %330 : vector<8x1xi1> to vector<8x96xi1>
    %332 = arith.select %331, %328, %329 : vector<8x96xi1>, vector<8x96xf32>
    %333 = arith.addf %332, %36 : vector<8x96xf32>
    %c6 = arith.constant 6 : index
    %c0_90 = arith.constant 0 : index
    %c0_91 = arith.constant 0 : index
    %334 = vector.load %arg10[%c6, %c0_90, %c0_91] : memref<8x8x96xf32, #tpu.memory_space<vmem>>, vector<1x8x96xf32>
    %335 = vector.shape_cast %334 : vector<1x8x96xf32> to vector<8x96xf32>
    %336 = vector.extract_strided_slice %335 {offsets = [0, 0], sizes = [8, 32], strides = [1, 1]} : vector<8x96xf32> to vector<8x32xf32>
    %337 = vector.extract_strided_slice %333 {offsets = [0, 0], sizes = [8, 32], strides = [1, 1]} : vector<8x96xf32> to vector<8x32xf32>
    %338 = arith.addf %336, %337 : vector<8x32xf32>
    %339 = arith.negf %338 : vector<8x32xf32>
    %340 = math.exp %339 : vector<8x32xf32>
    %cst_92 = arith.constant 1.000000e+00 : f32
    %341 = vector.broadcast %cst_92 : f32 to vector<8x32xf32>
    %342 = arith.addf %341, %340 : vector<8x32xf32>
    %343 = arith.divf %341, %342 : vector<8x32xf32>
    %344 = vector.extract_strided_slice %335 {offsets = [0, 32], sizes = [8, 32], strides = [1, 1]} : vector<8x96xf32> to vector<8x32xf32>
    %345 = vector.extract_strided_slice %333 {offsets = [0, 32], sizes = [8, 32], strides = [1, 1]} : vector<8x96xf32> to vector<8x32xf32>
    %346 = arith.addf %344, %345 : vector<8x32xf32>
    %347 = arith.negf %346 : vector<8x32xf32>
    %348 = math.exp %347 : vector<8x32xf32>
    %cst_93 = arith.constant 1.000000e+00 : f32
    %349 = vector.broadcast %cst_93 : f32 to vector<8x32xf32>
    %350 = arith.addf %349, %348 : vector<8x32xf32>
    %351 = arith.divf %349, %350 : vector<8x32xf32>
    %352 = vector.extract_strided_slice %335 {offsets = [0, 64], sizes = [8, 32], strides = [1, 1]} : vector<8x96xf32> to vector<8x32xf32>
    %353 = vector.extract_strided_slice %333 {offsets = [0, 64], sizes = [8, 32], strides = [1, 1]} : vector<8x96xf32> to vector<8x32xf32>
    %354 = arith.mulf %343, %353 : vector<8x32xf32>
    %355 = arith.addf %352, %354 : vector<8x32xf32>
    %356 = math.tanh %355 : vector<8x32xf32>
    %cst_94 = arith.constant 1.000000e+00 : f32
    %357 = vector.broadcast %cst_94 : f32 to vector<8x32xf32>
    %358 = arith.subf %357, %351 : vector<8x32xf32>
    %359 = arith.mulf %358, %356 : vector<8x32xf32>
    %360 = arith.mulf %351, %318 : vector<8x32xf32>
    %361 = arith.addf %359, %360 : vector<8x32xf32>
    %c6_i32 = arith.constant 6 : i32
    %362 = vector.broadcast %c6_i32 : i32 to vector<8x1xi32>
    %363 = arith.cmpi sgt, %6, %362 : vector<8x1xi32>
    %364 = vector.shape_cast %363 : vector<8x1xi1> to vector<8x1xi1>
    %365 = vector.broadcast %364 : vector<8x1xi1> to vector<8x32xi1>
    %366 = arith.select %365, %361, %318 : vector<8x32xi1>, vector<8x32xf32>
    %cst_95 = arith.constant 0.000000e+00 : f32
    %367 = vector.shape_cast %363 : vector<8x1xi1> to vector<8x1xi1>
    %368 = vector.broadcast %367 : vector<8x1xi1> to vector<8x32xi1>
    %369 = vector.broadcast %cst_95 : f32 to vector<8x32xf32>
    %370 = arith.select %368, %361, %369 : vector<8x32xi1>, vector<8x32xf32>
    %c0_96 = arith.constant 0 : index
    %c6_97 = arith.constant 6 : index
    %c0_98 = arith.constant 0 : index
    %c0_99 = arith.constant 0 : index
    %371 = vector.load %arg9[%c0_96, %c6_97, %c0_98, %c0_99] : memref<2x8x8x32xf32, #tpu.memory_space<vmem>>, vector<1x1x8x32xf32>
    %372 = vector.shape_cast %371 : vector<1x1x8x32xf32> to vector<8x32xf32>
    %373 = vector.shape_cast %370 : vector<8x32xf32> to vector<1x1x8x32xf32>
    tpu.vector_store %arg9[%c0_96, %c6_97, %c0_98, %c0_99], %373 {strides = array<i32>} : memref<2x8x8x32xf32, #tpu.memory_space<vmem>>, vector<1x1x8x32xf32>,
    %374 = arith.truncf %366 : vector<8x32xf32> to vector<8x32xbf16>
    %cst_100 = arith.constant dense<0.000000e+00> : vector<8x192xf32>
    %375 = tpu.matmul %374, %25, %cst_100 {dimension_numbers = #tpu.dot_dimension_numbers<[1], [0], [0], [1], [0, 0, 1, 1], [], []>} : vector<8x32xbf16>, vector<32x192xbf16>, vector<8x192xf32> -> vector<8x192xf32>
    %376 = vector.extract_strided_slice %375 {offsets = [0, 0], sizes = [8, 96], strides = [1, 1]} : vector<8x192xf32> to vector<8x96xf32>
    %377 = vector.extract_strided_slice %375 {offsets = [0, 96], sizes = [8, 96], strides = [1, 1]} : vector<8x192xf32> to vector<8x96xf32>
    %378 = vector.shape_cast %2 : vector<8x1xi1> to vector<8x1xi1>
    %379 = vector.broadcast %378 : vector<8x1xi1> to vector<8x96xi1>
    %380 = arith.select %379, %376, %377 : vector<8x96xi1>, vector<8x96xf32>
    %381 = arith.addf %380, %36 : vector<8x96xf32>
    %c7 = arith.constant 7 : index
    %c0_101 = arith.constant 0 : index
    %c0_102 = arith.constant 0 : index
    %382 = vector.load %arg10[%c7, %c0_101, %c0_102] : memref<8x8x96xf32, #tpu.memory_space<vmem>>, vector<1x8x96xf32>
    %383 = vector.shape_cast %382 : vector<1x8x96xf32> to vector<8x96xf32>
    %384 = vector.extract_strided_slice %383 {offsets = [0, 0], sizes = [8, 32], strides = [1, 1]} : vector<8x96xf32> to vector<8x32xf32>
    %385 = vector.extract_strided_slice %381 {offsets = [0, 0], sizes = [8, 32], strides = [1, 1]} : vector<8x96xf32> to vector<8x32xf32>
    %386 = arith.addf %384, %385 : vector<8x32xf32>
    %387 = arith.negf %386 : vector<8x32xf32>
    %388 = math.exp %387 : vector<8x32xf32>
    %cst_103 = arith.constant 1.000000e+00 : f32
    %389 = vector.broadcast %cst_103 : f32 to vector<8x32xf32>
    %390 = arith.addf %389, %388 : vector<8x32xf32>
    %391 = arith.divf %389, %390 : vector<8x32xf32>
    %392 = vector.extract_strided_slice %383 {offsets = [0, 32], sizes = [8, 32], strides = [1, 1]} : vector<8x96xf32> to vector<8x32xf32>
    %393 = vector.extract_strided_slice %381 {offsets = [0, 32], sizes = [8, 32], strides = [1, 1]} : vector<8x96xf32> to vector<8x32xf32>
    %394 = arith.addf %392, %393 : vector<8x32xf32>
    %395 = arith.negf %394 : vector<8x32xf32>
    %396 = math.exp %395 : vector<8x32xf32>
    %cst_104 = arith.constant 1.000000e+00 : f32
    %397 = vector.broadcast %cst_104 : f32 to vector<8x32xf32>
    %398 = arith.addf %397, %396 : vector<8x32xf32>
    %399 = arith.divf %397, %398 : vector<8x32xf32>
    %400 = vector.extract_strided_slice %383 {offsets = [0, 64], sizes = [8, 32], strides = [1, 1]} : vector<8x96xf32> to vector<8x32xf32>
    %401 = vector.extract_strided_slice %381 {offsets = [0, 64], sizes = [8, 32], strides = [1, 1]} : vector<8x96xf32> to vector<8x32xf32>
    %402 = arith.mulf %391, %401 : vector<8x32xf32>
    %403 = arith.addf %400, %402 : vector<8x32xf32>
    %404 = math.tanh %403 : vector<8x32xf32>
    %cst_105 = arith.constant 1.000000e+00 : f32
    %405 = vector.broadcast %cst_105 : f32 to vector<8x32xf32>
    %406 = arith.subf %405, %399 : vector<8x32xf32>
    %407 = arith.mulf %406, %404 : vector<8x32xf32>
    %408 = arith.mulf %399, %366 : vector<8x32xf32>
    %409 = arith.addf %407, %408 : vector<8x32xf32>
    %c7_i32 = arith.constant 7 : i32
    %410 = vector.broadcast %c7_i32 : i32 to vector<8x1xi32>
    %411 = arith.cmpi sgt, %6, %410 : vector<8x1xi32>
    %cst_106 = arith.constant 0.000000e+00 : f32
    %412 = vector.shape_cast %411 : vector<8x1xi1> to vector<8x1xi1>
    %413 = vector.broadcast %412 : vector<8x1xi1> to vector<8x32xi1>
    %414 = vector.broadcast %cst_106 : f32 to vector<8x32xf32>
    %415 = arith.select %413, %409, %414 : vector<8x32xi1>, vector<8x32xf32>
    %c0_107 = arith.constant 0 : index
    %c7_108 = arith.constant 7 : index
    %c0_109 = arith.constant 0 : index
    %c0_110 = arith.constant 0 : index
    %416 = vector.load %arg9[%c0_107, %c7_108, %c0_109, %c0_110] : memref<2x8x8x32xf32, #tpu.memory_space<vmem>>, vector<1x1x8x32xf32>
    %417 = vector.shape_cast %416 : vector<1x1x8x32xf32> to vector<8x32xf32>
    %418 = vector.shape_cast %415 : vector<8x32xf32> to vector<1x1x8x32xf32>
    tpu.vector_store %arg9[%c0_107, %c7_108, %c0_109, %c0_110], %418 {strides = array<i32>} : memref<2x8x8x32xf32, #tpu.memory_space<vmem>>, vector<1x1x8x32xf32>,
    %c0_111 = arith.constant 0 : index
    %c0_112 = arith.constant 0 : index
    %c0_113 = arith.constant 0 : index
    %c0_114 = arith.constant 0 : index
    %419 = vector.load %arg9[%c0_111, %c0_112, %c0_113, %c0_114] : memref<2x8x8x32xf32, #tpu.memory_space<vmem>>, vector<1x8x8x32xf32>
    %420 = vector.shape_cast %419 : vector<1x8x8x32xf32> to vector<8x8x32xf32>
    %421 = vector.shape_cast %420 : vector<8x8x32xf32> to vector<64x32xf32>
    %422 = arith.truncf %421 : vector<64x32xf32> to vector<64x32xbf16>
    %c1_115 = arith.constant 1 : index
    %c0_116 = arith.constant 0 : index
    %c0_117 = arith.constant 0 : index
    %423 = vector.load %arg2[%c1_115, %c0_116, %c0_117] : memref<2x32x192xbf16, #tpu.memory_space<vmem>>, vector<1x32x192xbf16>
    %424 = vector.shape_cast %423 : vector<1x32x192xbf16> to vector<32x192xbf16>
    %cst_118 = arith.constant dense<0.000000e+00> : vector<64x192xf32>
    %425 = tpu.matmul %422, %424, %cst_118 {dimension_numbers = #tpu.dot_dimension_numbers<[1], [0], [0], [1], [0, 0, 1, 1], [], []>} : vector<64x32xbf16>, vector<32x192xbf16>, vector<64x192xf32> -> vector<64x192xf32>
    %c1_119 = arith.constant 1 : index
    %c0_120 = arith.constant 0 : index
    %c0_121 = arith.constant 0 : index
    %426 = vector.load %arg4[%c1_119, %c0_120, %c0_121] : memref<2x1x192xf32, #tpu.memory_space<vmem>>, vector<1x1x192xf32>
    %427 = vector.shape_cast %426 : vector<1x1x192xf32> to vector<1x192xf32>
    %428 = vector.broadcast %427 : vector<1x192xf32> to vector<64x192xf32>
    %429 = arith.addf %425, %428 : vector<64x192xf32>
    %430 = vector.shape_cast %429 : vector<64x192xf32> to vector<8x8x192xf32>
    %431 = vector.extract_strided_slice %430 {offsets = [0, 0, 0], sizes = [8, 8, 96], strides = [1, 1, 1]} : vector<8x8x192xf32> to vector<8x8x96xf32>
    %432 = vector.extract_strided_slice %430 {offsets = [0, 0, 96], sizes = [8, 8, 96], strides = [1, 1, 1]} : vector<8x8x192xf32> to vector<8x8x96xf32>
    %433 = vector.shape_cast %5 : vector<1x8x1xi1> to vector<1x8x1xi1>
    %434 = vector.broadcast %433 : vector<1x8x1xi1> to vector<8x8x96xi1>
    %435 = arith.select %434, %431, %432 : vector<8x8x96xi1>, vector<8x8x96xf32>
    %c0_122 = arith.constant 0 : index
    %c0_123 = arith.constant 0 : index
    %c0_124 = arith.constant 0 : index
    %436 = vector.load %arg10[%c0_122, %c0_123, %c0_124] : memref<8x8x96xf32, #tpu.memory_space<vmem>>, vector<8x8x96xf32>
    tpu.vector_store %arg10[%c0_122, %c0_123, %c0_124], %435 {strides = array<i32>} : memref<8x8x96xf32, #tpu.memory_space<vmem>>, vector<8x8x96xf32>,
    %c1_125 = arith.constant 1 : index
    %c0_126 = arith.constant 0 : index
    %c0_127 = arith.constant 0 : index
    %437 = vector.load %arg3[%c1_125, %c0_126, %c0_127] : memref<2x32x192xbf16, #tpu.memory_space<vmem>>, vector<1x32x192xbf16>
    %438 = vector.shape_cast %437 : vector<1x32x192xbf16> to vector<32x192xbf16>
    %c1_128 = arith.constant 1 : index
    %c0_129 = arith.constant 0 : index
    %c0_130 = arith.constant 0 : index
    %439 = vector.load %arg5[%c1_128, %c0_129, %c0_130] : memref<2x1x192xf32, #tpu.memory_space<vmem>>, vector<1x1x192xf32>
    %440 = vector.shape_cast %439 : vector<1x1x192xf32> to vector<1x192xf32>
    %441 = vector.extract_strided_slice %440 {offsets = [0, 0], sizes = [1, 96], strides = [1, 1]} : vector<1x192xf32> to vector<1x96xf32>
    %442 = vector.extract_strided_slice %440 {offsets = [0, 96], sizes = [1, 96], strides = [1, 1]} : vector<1x192xf32> to vector<1x96xf32>
    %443 = vector.shape_cast %2 : vector<8x1xi1> to vector<8x1xi1>
    %444 = vector.broadcast %443 : vector<8x1xi1> to vector<8x96xi1>
    %445 = vector.shape_cast %441 : vector<1x96xf32> to vector<1x96xf32>
    %446 = vector.broadcast %445 : vector<1x96xf32> to vector<8x96xf32>
    %447 = vector.shape_cast %442 : vector<1x96xf32> to vector<1x96xf32>
    %448 = vector.broadcast %447 : vector<1x96xf32> to vector<8x96xf32>
    %449 = arith.select %444, %446, %448 : vector<8x96xi1>, vector<8x96xf32>
    %cst_131 = arith.constant 0.000000e+00 : f32
    %450 = vector.broadcast %cst_131 : f32 to vector<8x32xf32>
    %451 = arith.truncf %450 : vector<8x32xf32> to vector<8x32xbf16>
    %cst_132 = arith.constant dense<0.000000e+00> : vector<8x192xf32>
    %452 = tpu.matmul %451, %438, %cst_132 {dimension_numbers = #tpu.dot_dimension_numbers<[1], [0], [0], [1], [0, 0, 1, 1], [], []>} : vector<8x32xbf16>, vector<32x192xbf16>, vector<8x192xf32> -> vector<8x192xf32>
    %453 = vector.extract_strided_slice %452 {offsets = [0, 0], sizes = [8, 96], strides = [1, 1]} : vector<8x192xf32> to vector<8x96xf32>
    %454 = vector.extract_strided_slice %452 {offsets = [0, 96], sizes = [8, 96], strides = [1, 1]} : vector<8x192xf32> to vector<8x96xf32>
    %455 = vector.shape_cast %2 : vector<8x1xi1> to vector<8x1xi1>
    %456 = vector.broadcast %455 : vector<8x1xi1> to vector<8x96xi1>
    %457 = arith.select %456, %453, %454 : vector<8x96xi1>, vector<8x96xf32>
    %458 = arith.addf %457, %449 : vector<8x96xf32>
    %c0_133 = arith.constant 0 : index
    %c0_134 = arith.constant 0 : index
    %c0_135 = arith.constant 0 : index
    %459 = vector.load %arg10[%c0_133, %c0_134, %c0_135] : memref<8x8x96xf32, #tpu.memory_space<vmem>>, vector<1x8x96xf32>
    %460 = vector.shape_cast %459 : vector<1x8x96xf32> to vector<8x96xf32>
    %461 = vector.extract_strided_slice %460 {offsets = [0, 0], sizes = [8, 32], strides = [1, 1]} : vector<8x96xf32> to vector<8x32xf32>
    %462 = vector.extract_strided_slice %458 {offsets = [0, 0], sizes = [8, 32], strides = [1, 1]} : vector<8x96xf32> to vector<8x32xf32>
    %463 = arith.addf %461, %462 : vector<8x32xf32>
    %464 = arith.negf %463 : vector<8x32xf32>
    %465 = math.exp %464 : vector<8x32xf32>
    %cst_136 = arith.constant 1.000000e+00 : f32
    %466 = vector.broadcast %cst_136 : f32 to vector<8x32xf32>
    %467 = arith.addf %466, %465 : vector<8x32xf32>
    %468 = arith.divf %466, %467 : vector<8x32xf32>
    %469 = vector.extract_strided_slice %460 {offsets = [0, 32], sizes = [8, 32], strides = [1, 1]} : vector<8x96xf32> to vector<8x32xf32>
    %470 = vector.extract_strided_slice %458 {offsets = [0, 32], sizes = [8, 32], strides = [1, 1]} : vector<8x96xf32> to vector<8x32xf32>
    %471 = arith.addf %469, %470 : vector<8x32xf32>
    %472 = arith.negf %471 : vector<8x32xf32>
    %473 = math.exp %472 : vector<8x32xf32>
    %cst_137 = arith.constant 1.000000e+00 : f32
    %474 = vector.broadcast %cst_137 : f32 to vector<8x32xf32>
    %475 = arith.addf %474, %473 : vector<8x32xf32>
    %476 = arith.divf %474, %475 : vector<8x32xf32>
    %477 = vector.extract_strided_slice %460 {offsets = [0, 64], sizes = [8, 32], strides = [1, 1]} : vector<8x96xf32> to vector<8x32xf32>
    %478 = vector.extract_strided_slice %458 {offsets = [0, 64], sizes = [8, 32], strides = [1, 1]} : vector<8x96xf32> to vector<8x32xf32>
    %479 = arith.mulf %468, %478 : vector<8x32xf32>
    %480 = arith.addf %477, %479 : vector<8x32xf32>
    %481 = math.tanh %480 : vector<8x32xf32>
    %cst_138 = arith.constant 1.000000e+00 : f32
    %482 = vector.broadcast %cst_138 : f32 to vector<8x32xf32>
    %483 = arith.subf %482, %476 : vector<8x32xf32>
    %484 = arith.mulf %483, %481 : vector<8x32xf32>
    %485 = arith.mulf %476, %450 : vector<8x32xf32>
    %486 = arith.addf %484, %485 : vector<8x32xf32>
    %c0_i32_139 = arith.constant 0 : i32
    %487 = vector.broadcast %c0_i32_139 : i32 to vector<8x1xi32>
    %488 = arith.cmpi sgt, %6, %487 : vector<8x1xi32>
    %489 = vector.shape_cast %488 : vector<8x1xi1> to vector<8x1xi1>
    %490 = vector.broadcast %489 : vector<8x1xi1> to vector<8x32xi1>
    %491 = arith.select %490, %486, %450 : vector<8x32xi1>, vector<8x32xf32>
    %cst_140 = arith.constant 0.000000e+00 : f32
    %492 = vector.shape_cast %488 : vector<8x1xi1> to vector<8x1xi1>
    %493 = vector.broadcast %492 : vector<8x1xi1> to vector<8x32xi1>
    %494 = vector.broadcast %cst_140 : f32 to vector<8x32xf32>
    %495 = arith.select %493, %486, %494 : vector<8x32xi1>, vector<8x32xf32>
    %c1_141 = arith.constant 1 : index
    %c0_142 = arith.constant 0 : index
    %c0_143 = arith.constant 0 : index
    %c0_144 = arith.constant 0 : index
    %496 = vector.load %arg9[%c1_141, %c0_142, %c0_143, %c0_144] : memref<2x8x8x32xf32, #tpu.memory_space<vmem>>, vector<1x1x8x32xf32>
    %497 = vector.shape_cast %496 : vector<1x1x8x32xf32> to vector<8x32xf32>
    %498 = vector.shape_cast %495 : vector<8x32xf32> to vector<1x1x8x32xf32>
    tpu.vector_store %arg9[%c1_141, %c0_142, %c0_143, %c0_144], %498 {strides = array<i32>} : memref<2x8x8x32xf32, #tpu.memory_space<vmem>>, vector<1x1x8x32xf32>,
    %499 = arith.truncf %491 : vector<8x32xf32> to vector<8x32xbf16>
    %cst_145 = arith.constant dense<0.000000e+00> : vector<8x192xf32>
    %500 = tpu.matmul %499, %438, %cst_145 {dimension_numbers = #tpu.dot_dimension_numbers<[1], [0], [0], [1], [0, 0, 1, 1], [], []>} : vector<8x32xbf16>, vector<32x192xbf16>, vector<8x192xf32> -> vector<8x192xf32>
    %501 = vector.extract_strided_slice %500 {offsets = [0, 0], sizes = [8, 96], strides = [1, 1]} : vector<8x192xf32> to vector<8x96xf32>
    %502 = vector.extract_strided_slice %500 {offsets = [0, 96], sizes = [8, 96], strides = [1, 1]} : vector<8x192xf32> to vector<8x96xf32>
    %503 = vector.shape_cast %2 : vector<8x1xi1> to vector<8x1xi1>
    %504 = vector.broadcast %503 : vector<8x1xi1> to vector<8x96xi1>
    %505 = arith.select %504, %501, %502 : vector<8x96xi1>, vector<8x96xf32>
    %506 = arith.addf %505, %449 : vector<8x96xf32>
    %c1_146 = arith.constant 1 : index
    %c0_147 = arith.constant 0 : index
    %c0_148 = arith.constant 0 : index
    %507 = vector.load %arg10[%c1_146, %c0_147, %c0_148] : memref<8x8x96xf32, #tpu.memory_space<vmem>>, vector<1x8x96xf32>
    %508 = vector.shape_cast %507 : vector<1x8x96xf32> to vector<8x96xf32>
    %509 = vector.extract_strided_slice %508 {offsets = [0, 0], sizes = [8, 32], strides = [1, 1]} : vector<8x96xf32> to vector<8x32xf32>
    %510 = vector.extract_strided_slice %506 {offsets = [0, 0], sizes = [8, 32], strides = [1, 1]} : vector<8x96xf32> to vector<8x32xf32>
    %511 = arith.addf %509, %510 : vector<8x32xf32>
    %512 = arith.negf %511 : vector<8x32xf32>
    %513 = math.exp %512 : vector<8x32xf32>
    %cst_149 = arith.constant 1.000000e+00 : f32
    %514 = vector.broadcast %cst_149 : f32 to vector<8x32xf32>
    %515 = arith.addf %514, %513 : vector<8x32xf32>
    %516 = arith.divf %514, %515 : vector<8x32xf32>
    %517 = vector.extract_strided_slice %508 {offsets = [0, 32], sizes = [8, 32], strides = [1, 1]} : vector<8x96xf32> to vector<8x32xf32>
    %518 = vector.extract_strided_slice %506 {offsets = [0, 32], sizes = [8, 32], strides = [1, 1]} : vector<8x96xf32> to vector<8x32xf32>
    %519 = arith.addf %517, %518 : vector<8x32xf32>
    %520 = arith.negf %519 : vector<8x32xf32>
    %521 = math.exp %520 : vector<8x32xf32>
    %cst_150 = arith.constant 1.000000e+00 : f32
    %522 = vector.broadcast %cst_150 : f32 to vector<8x32xf32>
    %523 = arith.addf %522, %521 : vector<8x32xf32>
    %524 = arith.divf %522, %523 : vector<8x32xf32>
    %525 = vector.extract_strided_slice %508 {offsets = [0, 64], sizes = [8, 32], strides = [1, 1]} : vector<8x96xf32> to vector<8x32xf32>
    %526 = vector.extract_strided_slice %506 {offsets = [0, 64], sizes = [8, 32], strides = [1, 1]} : vector<8x96xf32> to vector<8x32xf32>
    %527 = arith.mulf %516, %526 : vector<8x32xf32>
    %528 = arith.addf %525, %527 : vector<8x32xf32>
    %529 = math.tanh %528 : vector<8x32xf32>
    %cst_151 = arith.constant 1.000000e+00 : f32
    %530 = vector.broadcast %cst_151 : f32 to vector<8x32xf32>
    %531 = arith.subf %530, %524 : vector<8x32xf32>
    %532 = arith.mulf %531, %529 : vector<8x32xf32>
    %533 = arith.mulf %524, %491 : vector<8x32xf32>
    %534 = arith.addf %532, %533 : vector<8x32xf32>
    %c1_i32_152 = arith.constant 1 : i32
    %535 = vector.broadcast %c1_i32_152 : i32 to vector<8x1xi32>
    %536 = arith.cmpi sgt, %6, %535 : vector<8x1xi32>
    %537 = vector.shape_cast %536 : vector<8x1xi1> to vector<8x1xi1>
    %538 = vector.broadcast %537 : vector<8x1xi1> to vector<8x32xi1>
    %539 = arith.select %538, %534, %491 : vector<8x32xi1>, vector<8x32xf32>
    %cst_153 = arith.constant 0.000000e+00 : f32
    %540 = vector.shape_cast %536 : vector<8x1xi1> to vector<8x1xi1>
    %541 = vector.broadcast %540 : vector<8x1xi1> to vector<8x32xi1>
    %542 = vector.broadcast %cst_153 : f32 to vector<8x32xf32>
    %543 = arith.select %541, %534, %542 : vector<8x32xi1>, vector<8x32xf32>
    %c1_154 = arith.constant 1 : index
    %c1_155 = arith.constant 1 : index
    %c0_156 = arith.constant 0 : index
    %c0_157 = arith.constant 0 : index
    %544 = vector.load %arg9[%c1_154, %c1_155, %c0_156, %c0_157] : memref<2x8x8x32xf32, #tpu.memory_space<vmem>>, vector<1x1x8x32xf32>
    %545 = vector.shape_cast %544 : vector<1x1x8x32xf32> to vector<8x32xf32>
    %546 = vector.shape_cast %543 : vector<8x32xf32> to vector<1x1x8x32xf32>
    tpu.vector_store %arg9[%c1_154, %c1_155, %c0_156, %c0_157], %546 {strides = array<i32>} : memref<2x8x8x32xf32, #tpu.memory_space<vmem>>, vector<1x1x8x32xf32>,
    %547 = arith.truncf %539 : vector<8x32xf32> to vector<8x32xbf16>
    %cst_158 = arith.constant dense<0.000000e+00> : vector<8x192xf32>
    %548 = tpu.matmul %547, %438, %cst_158 {dimension_numbers = #tpu.dot_dimension_numbers<[1], [0], [0], [1], [0, 0, 1, 1], [], []>} : vector<8x32xbf16>, vector<32x192xbf16>, vector<8x192xf32> -> vector<8x192xf32>
    %549 = vector.extract_strided_slice %548 {offsets = [0, 0], sizes = [8, 96], strides = [1, 1]} : vector<8x192xf32> to vector<8x96xf32>
    %550 = vector.extract_strided_slice %548 {offsets = [0, 96], sizes = [8, 96], strides = [1, 1]} : vector<8x192xf32> to vector<8x96xf32>
    %551 = vector.shape_cast %2 : vector<8x1xi1> to vector<8x1xi1>
    %552 = vector.broadcast %551 : vector<8x1xi1> to vector<8x96xi1>
    %553 = arith.select %552, %549, %550 : vector<8x96xi1>, vector<8x96xf32>
    %554 = arith.addf %553, %449 : vector<8x96xf32>
    %c2_159 = arith.constant 2 : index
    %c0_160 = arith.constant 0 : index
    %c0_161 = arith.constant 0 : index
    %555 = vector.load %arg10[%c2_159, %c0_160, %c0_161] : memref<8x8x96xf32, #tpu.memory_space<vmem>>, vector<1x8x96xf32>
    %556 = vector.shape_cast %555 : vector<1x8x96xf32> to vector<8x96xf32>
    %557 = vector.extract_strided_slice %556 {offsets = [0, 0], sizes = [8, 32], strides = [1, 1]} : vector<8x96xf32> to vector<8x32xf32>
    %558 = vector.extract_strided_slice %554 {offsets = [0, 0], sizes = [8, 32], strides = [1, 1]} : vector<8x96xf32> to vector<8x32xf32>
    %559 = arith.addf %557, %558 : vector<8x32xf32>
    %560 = arith.negf %559 : vector<8x32xf32>
    %561 = math.exp %560 : vector<8x32xf32>
    %cst_162 = arith.constant 1.000000e+00 : f32
    %562 = vector.broadcast %cst_162 : f32 to vector<8x32xf32>
    %563 = arith.addf %562, %561 : vector<8x32xf32>
    %564 = arith.divf %562, %563 : vector<8x32xf32>
    %565 = vector.extract_strided_slice %556 {offsets = [0, 32], sizes = [8, 32], strides = [1, 1]} : vector<8x96xf32> to vector<8x32xf32>
    %566 = vector.extract_strided_slice %554 {offsets = [0, 32], sizes = [8, 32], strides = [1, 1]} : vector<8x96xf32> to vector<8x32xf32>
    %567 = arith.addf %565, %566 : vector<8x32xf32>
    %568 = arith.negf %567 : vector<8x32xf32>
    %569 = math.exp %568 : vector<8x32xf32>
    %cst_163 = arith.constant 1.000000e+00 : f32
    %570 = vector.broadcast %cst_163 : f32 to vector<8x32xf32>
    %571 = arith.addf %570, %569 : vector<8x32xf32>
    %572 = arith.divf %570, %571 : vector<8x32xf32>
    %573 = vector.extract_strided_slice %556 {offsets = [0, 64], sizes = [8, 32], strides = [1, 1]} : vector<8x96xf32> to vector<8x32xf32>
    %574 = vector.extract_strided_slice %554 {offsets = [0, 64], sizes = [8, 32], strides = [1, 1]} : vector<8x96xf32> to vector<8x32xf32>
    %575 = arith.mulf %564, %574 : vector<8x32xf32>
    %576 = arith.addf %573, %575 : vector<8x32xf32>
    %577 = math.tanh %576 : vector<8x32xf32>
    %cst_164 = arith.constant 1.000000e+00 : f32
    %578 = vector.broadcast %cst_164 : f32 to vector<8x32xf32>
    %579 = arith.subf %578, %572 : vector<8x32xf32>
    %580 = arith.mulf %579, %577 : vector<8x32xf32>
    %581 = arith.mulf %572, %539 : vector<8x32xf32>
    %582 = arith.addf %580, %581 : vector<8x32xf32>
    %c2_i32_165 = arith.constant 2 : i32
    %583 = vector.broadcast %c2_i32_165 : i32 to vector<8x1xi32>
    %584 = arith.cmpi sgt, %6, %583 : vector<8x1xi32>
    %585 = vector.shape_cast %584 : vector<8x1xi1> to vector<8x1xi1>
    %586 = vector.broadcast %585 : vector<8x1xi1> to vector<8x32xi1>
    %587 = arith.select %586, %582, %539 : vector<8x32xi1>, vector<8x32xf32>
    %cst_166 = arith.constant 0.000000e+00 : f32
    %588 = vector.shape_cast %584 : vector<8x1xi1> to vector<8x1xi1>
    %589 = vector.broadcast %588 : vector<8x1xi1> to vector<8x32xi1>
    %590 = vector.broadcast %cst_166 : f32 to vector<8x32xf32>
    %591 = arith.select %589, %582, %590 : vector<8x32xi1>, vector<8x32xf32>
    %c1_167 = arith.constant 1 : index
    %c2_168 = arith.constant 2 : index
    %c0_169 = arith.constant 0 : index
    %c0_170 = arith.constant 0 : index
    %592 = vector.load %arg9[%c1_167, %c2_168, %c0_169, %c0_170] : memref<2x8x8x32xf32, #tpu.memory_space<vmem>>, vector<1x1x8x32xf32>
    %593 = vector.shape_cast %592 : vector<1x1x8x32xf32> to vector<8x32xf32>
    %594 = vector.shape_cast %591 : vector<8x32xf32> to vector<1x1x8x32xf32>
    tpu.vector_store %arg9[%c1_167, %c2_168, %c0_169, %c0_170], %594 {strides = array<i32>} : memref<2x8x8x32xf32, #tpu.memory_space<vmem>>, vector<1x1x8x32xf32>,
    %595 = arith.truncf %587 : vector<8x32xf32> to vector<8x32xbf16>
    %cst_171 = arith.constant dense<0.000000e+00> : vector<8x192xf32>
    %596 = tpu.matmul %595, %438, %cst_171 {dimension_numbers = #tpu.dot_dimension_numbers<[1], [0], [0], [1], [0, 0, 1, 1], [], []>} : vector<8x32xbf16>, vector<32x192xbf16>, vector<8x192xf32> -> vector<8x192xf32>
    %597 = vector.extract_strided_slice %596 {offsets = [0, 0], sizes = [8, 96], strides = [1, 1]} : vector<8x192xf32> to vector<8x96xf32>
    %598 = vector.extract_strided_slice %596 {offsets = [0, 96], sizes = [8, 96], strides = [1, 1]} : vector<8x192xf32> to vector<8x96xf32>
    %599 = vector.shape_cast %2 : vector<8x1xi1> to vector<8x1xi1>
    %600 = vector.broadcast %599 : vector<8x1xi1> to vector<8x96xi1>
    %601 = arith.select %600, %597, %598 : vector<8x96xi1>, vector<8x96xf32>
    %602 = arith.addf %601, %449 : vector<8x96xf32>
    %c3_172 = arith.constant 3 : index
    %c0_173 = arith.constant 0 : index
    %c0_174 = arith.constant 0 : index
    %603 = vector.load %arg10[%c3_172, %c0_173, %c0_174] : memref<8x8x96xf32, #tpu.memory_space<vmem>>, vector<1x8x96xf32>
    %604 = vector.shape_cast %603 : vector<1x8x96xf32> to vector<8x96xf32>
    %605 = vector.extract_strided_slice %604 {offsets = [0, 0], sizes = [8, 32], strides = [1, 1]} : vector<8x96xf32> to vector<8x32xf32>
    %606 = vector.extract_strided_slice %602 {offsets = [0, 0], sizes = [8, 32], strides = [1, 1]} : vector<8x96xf32> to vector<8x32xf32>
    %607 = arith.addf %605, %606 : vector<8x32xf32>
    %608 = arith.negf %607 : vector<8x32xf32>
    %609 = math.exp %608 : vector<8x32xf32>
    %cst_175 = arith.constant 1.000000e+00 : f32
    %610 = vector.broadcast %cst_175 : f32 to vector<8x32xf32>
    %611 = arith.addf %610, %609 : vector<8x32xf32>
    %612 = arith.divf %610, %611 : vector<8x32xf32>
    %613 = vector.extract_strided_slice %604 {offsets = [0, 32], sizes = [8, 32], strides = [1, 1]} : vector<8x96xf32> to vector<8x32xf32>
    %614 = vector.extract_strided_slice %602 {offsets = [0, 32], sizes = [8, 32], strides = [1, 1]} : vector<8x96xf32> to vector<8x32xf32>
    %615 = arith.addf %613, %614 : vector<8x32xf32>
    %616 = arith.negf %615 : vector<8x32xf32>
    %617 = math.exp %616 : vector<8x32xf32>
    %cst_176 = arith.constant 1.000000e+00 : f32
    %618 = vector.broadcast %cst_176 : f32 to vector<8x32xf32>
    %619 = arith.addf %618, %617 : vector<8x32xf32>
    %620 = arith.divf %618, %619 : vector<8x32xf32>
    %621 = vector.extract_strided_slice %604 {offsets = [0, 64], sizes = [8, 32], strides = [1, 1]} : vector<8x96xf32> to vector<8x32xf32>
    %622 = vector.extract_strided_slice %602 {offsets = [0, 64], sizes = [8, 32], strides = [1, 1]} : vector<8x96xf32> to vector<8x32xf32>
    %623 = arith.mulf %612, %622 : vector<8x32xf32>
    %624 = arith.addf %621, %623 : vector<8x32xf32>
    %625 = math.tanh %624 : vector<8x32xf32>
    %cst_177 = arith.constant 1.000000e+00 : f32
    %626 = vector.broadcast %cst_177 : f32 to vector<8x32xf32>
    %627 = arith.subf %626, %620 : vector<8x32xf32>
    %628 = arith.mulf %627, %625 : vector<8x32xf32>
    %629 = arith.mulf %620, %587 : vector<8x32xf32>
    %630 = arith.addf %628, %629 : vector<8x32xf32>
    %c3_i32_178 = arith.constant 3 : i32
    %631 = vector.broadcast %c3_i32_178 : i32 to vector<8x1xi32>
    %632 = arith.cmpi sgt, %6, %631 : vector<8x1xi32>
    %633 = vector.shape_cast %632 : vector<8x1xi1> to vector<8x1xi1>
    %634 = vector.broadcast %633 : vector<8x1xi1> to vector<8x32xi1>
    %635 = arith.select %634, %630, %587 : vector<8x32xi1>, vector<8x32xf32>
    %cst_179 = arith.constant 0.000000e+00 : f32
    %636 = vector.shape_cast %632 : vector<8x1xi1> to vector<8x1xi1>
    %637 = vector.broadcast %636 : vector<8x1xi1> to vector<8x32xi1>
    %638 = vector.broadcast %cst_179 : f32 to vector<8x32xf32>
    %639 = arith.select %637, %630, %638 : vector<8x32xi1>, vector<8x32xf32>
    %c1_180 = arith.constant 1 : index
    %c3_181 = arith.constant 3 : index
    %c0_182 = arith.constant 0 : index
    %c0_183 = arith.constant 0 : index
    %640 = vector.load %arg9[%c1_180, %c3_181, %c0_182, %c0_183] : memref<2x8x8x32xf32, #tpu.memory_space<vmem>>, vector<1x1x8x32xf32>
    %641 = vector.shape_cast %640 : vector<1x1x8x32xf32> to vector<8x32xf32>
    %642 = vector.shape_cast %639 : vector<8x32xf32> to vector<1x1x8x32xf32>
    tpu.vector_store %arg9[%c1_180, %c3_181, %c0_182, %c0_183], %642 {strides = array<i32>} : memref<2x8x8x32xf32, #tpu.memory_space<vmem>>, vector<1x1x8x32xf32>,
    %643 = arith.truncf %635 : vector<8x32xf32> to vector<8x32xbf16>
    %cst_184 = arith.constant dense<0.000000e+00> : vector<8x192xf32>
    %644 = tpu.matmul %643, %438, %cst_184 {dimension_numbers = #tpu.dot_dimension_numbers<[1], [0], [0], [1], [0, 0, 1, 1], [], []>} : vector<8x32xbf16>, vector<32x192xbf16>, vector<8x192xf32> -> vector<8x192xf32>
    %645 = vector.extract_strided_slice %644 {offsets = [0, 0], sizes = [8, 96], strides = [1, 1]} : vector<8x192xf32> to vector<8x96xf32>
    %646 = vector.extract_strided_slice %644 {offsets = [0, 96], sizes = [8, 96], strides = [1, 1]} : vector<8x192xf32> to vector<8x96xf32>
    %647 = vector.shape_cast %2 : vector<8x1xi1> to vector<8x1xi1>
    %648 = vector.broadcast %647 : vector<8x1xi1> to vector<8x96xi1>
    %649 = arith.select %648, %645, %646 : vector<8x96xi1>, vector<8x96xf32>
    %650 = arith.addf %649, %449 : vector<8x96xf32>
    %c4_185 = arith.constant 4 : index
    %c0_186 = arith.constant 0 : index
    %c0_187 = arith.constant 0 : index
    %651 = vector.load %arg10[%c4_185, %c0_186, %c0_187] : memref<8x8x96xf32, #tpu.memory_space<vmem>>, vector<1x8x96xf32>
    %652 = vector.shape_cast %651 : vector<1x8x96xf32> to vector<8x96xf32>
    %653 = vector.extract_strided_slice %652 {offsets = [0, 0], sizes = [8, 32], strides = [1, 1]} : vector<8x96xf32> to vector<8x32xf32>
    %654 = vector.extract_strided_slice %650 {offsets = [0, 0], sizes = [8, 32], strides = [1, 1]} : vector<8x96xf32> to vector<8x32xf32>
    %655 = arith.addf %653, %654 : vector<8x32xf32>
    %656 = arith.negf %655 : vector<8x32xf32>
    %657 = math.exp %656 : vector<8x32xf32>
    %cst_188 = arith.constant 1.000000e+00 : f32
    %658 = vector.broadcast %cst_188 : f32 to vector<8x32xf32>
    %659 = arith.addf %658, %657 : vector<8x32xf32>
    %660 = arith.divf %658, %659 : vector<8x32xf32>
    %661 = vector.extract_strided_slice %652 {offsets = [0, 32], sizes = [8, 32], strides = [1, 1]} : vector<8x96xf32> to vector<8x32xf32>
    %662 = vector.extract_strided_slice %650 {offsets = [0, 32], sizes = [8, 32], strides = [1, 1]} : vector<8x96xf32> to vector<8x32xf32>
    %663 = arith.addf %661, %662 : vector<8x32xf32>
    %664 = arith.negf %663 : vector<8x32xf32>
    %665 = math.exp %664 : vector<8x32xf32>
    %cst_189 = arith.constant 1.000000e+00 : f32
    %666 = vector.broadcast %cst_189 : f32 to vector<8x32xf32>
    %667 = arith.addf %666, %665 : vector<8x32xf32>
    %668 = arith.divf %666, %667 : vector<8x32xf32>
    %669 = vector.extract_strided_slice %652 {offsets = [0, 64], sizes = [8, 32], strides = [1, 1]} : vector<8x96xf32> to vector<8x32xf32>
    %670 = vector.extract_strided_slice %650 {offsets = [0, 64], sizes = [8, 32], strides = [1, 1]} : vector<8x96xf32> to vector<8x32xf32>
    %671 = arith.mulf %660, %670 : vector<8x32xf32>
    %672 = arith.addf %669, %671 : vector<8x32xf32>
    %673 = math.tanh %672 : vector<8x32xf32>
    %cst_190 = arith.constant 1.000000e+00 : f32
    %674 = vector.broadcast %cst_190 : f32 to vector<8x32xf32>
    %675 = arith.subf %674, %668 : vector<8x32xf32>
    %676 = arith.mulf %675, %673 : vector<8x32xf32>
    %677 = arith.mulf %668, %635 : vector<8x32xf32>
    %678 = arith.addf %676, %677 : vector<8x32xf32>
    %c4_i32_191 = arith.constant 4 : i32
    %679 = vector.broadcast %c4_i32_191 : i32 to vector<8x1xi32>
    %680 = arith.cmpi sgt, %6, %679 : vector<8x1xi32>
    %681 = vector.shape_cast %680 : vector<8x1xi1> to vector<8x1xi1>
    %682 = vector.broadcast %681 : vector<8x1xi1> to vector<8x32xi1>
    %683 = arith.select %682, %678, %635 : vector<8x32xi1>, vector<8x32xf32>
    %cst_192 = arith.constant 0.000000e+00 : f32
    %684 = vector.shape_cast %680 : vector<8x1xi1> to vector<8x1xi1>
    %685 = vector.broadcast %684 : vector<8x1xi1> to vector<8x32xi1>
    %686 = vector.broadcast %cst_192 : f32 to vector<8x32xf32>
    %687 = arith.select %685, %678, %686 : vector<8x32xi1>, vector<8x32xf32>
    %c1_193 = arith.constant 1 : index
    %c4_194 = arith.constant 4 : index
    %c0_195 = arith.constant 0 : index
    %c0_196 = arith.constant 0 : index
    %688 = vector.load %arg9[%c1_193, %c4_194, %c0_195, %c0_196] : memref<2x8x8x32xf32, #tpu.memory_space<vmem>>, vector<1x1x8x32xf32>
    %689 = vector.shape_cast %688 : vector<1x1x8x32xf32> to vector<8x32xf32>
    %690 = vector.shape_cast %687 : vector<8x32xf32> to vector<1x1x8x32xf32>
    tpu.vector_store %arg9[%c1_193, %c4_194, %c0_195, %c0_196], %690 {strides = array<i32>} : memref<2x8x8x32xf32, #tpu.memory_space<vmem>>, vector<1x1x8x32xf32>,
    %691 = arith.truncf %683 : vector<8x32xf32> to vector<8x32xbf16>
    %cst_197 = arith.constant dense<0.000000e+00> : vector<8x192xf32>
    %692 = tpu.matmul %691, %438, %cst_197 {dimension_numbers = #tpu.dot_dimension_numbers<[1], [0], [0], [1], [0, 0, 1, 1], [], []>} : vector<8x32xbf16>, vector<32x192xbf16>, vector<8x192xf32> -> vector<8x192xf32>
    %693 = vector.extract_strided_slice %692 {offsets = [0, 0], sizes = [8, 96], strides = [1, 1]} : vector<8x192xf32> to vector<8x96xf32>
    %694 = vector.extract_strided_slice %692 {offsets = [0, 96], sizes = [8, 96], strides = [1, 1]} : vector<8x192xf32> to vector<8x96xf32>
    %695 = vector.shape_cast %2 : vector<8x1xi1> to vector<8x1xi1>
    %696 = vector.broadcast %695 : vector<8x1xi1> to vector<8x96xi1>
    %697 = arith.select %696, %693, %694 : vector<8x96xi1>, vector<8x96xf32>
    %698 = arith.addf %697, %449 : vector<8x96xf32>
    %c5_198 = arith.constant 5 : index
    %c0_199 = arith.constant 0 : index
    %c0_200 = arith.constant 0 : index
    %699 = vector.load %arg10[%c5_198, %c0_199, %c0_200] : memref<8x8x96xf32, #tpu.memory_space<vmem>>, vector<1x8x96xf32>
    %700 = vector.shape_cast %699 : vector<1x8x96xf32> to vector<8x96xf32>
    %701 = vector.extract_strided_slice %700 {offsets = [0, 0], sizes = [8, 32], strides = [1, 1]} : vector<8x96xf32> to vector<8x32xf32>
    %702 = vector.extract_strided_slice %698 {offsets = [0, 0], sizes = [8, 32], strides = [1, 1]} : vector<8x96xf32> to vector<8x32xf32>
    %703 = arith.addf %701, %702 : vector<8x32xf32>
    %704 = arith.negf %703 : vector<8x32xf32>
    %705 = math.exp %704 : vector<8x32xf32>
    %cst_201 = arith.constant 1.000000e+00 : f32
    %706 = vector.broadcast %cst_201 : f32 to vector<8x32xf32>
    %707 = arith.addf %706, %705 : vector<8x32xf32>
    %708 = arith.divf %706, %707 : vector<8x32xf32>
    %709 = vector.extract_strided_slice %700 {offsets = [0, 32], sizes = [8, 32], strides = [1, 1]} : vector<8x96xf32> to vector<8x32xf32>
    %710 = vector.extract_strided_slice %698 {offsets = [0, 32], sizes = [8, 32], strides = [1, 1]} : vector<8x96xf32> to vector<8x32xf32>
    %711 = arith.addf %709, %710 : vector<8x32xf32>
    %712 = arith.negf %711 : vector<8x32xf32>
    %713 = math.exp %712 : vector<8x32xf32>
    %cst_202 = arith.constant 1.000000e+00 : f32
    %714 = vector.broadcast %cst_202 : f32 to vector<8x32xf32>
    %715 = arith.addf %714, %713 : vector<8x32xf32>
    %716 = arith.divf %714, %715 : vector<8x32xf32>
    %717 = vector.extract_strided_slice %700 {offsets = [0, 64], sizes = [8, 32], strides = [1, 1]} : vector<8x96xf32> to vector<8x32xf32>
    %718 = vector.extract_strided_slice %698 {offsets = [0, 64], sizes = [8, 32], strides = [1, 1]} : vector<8x96xf32> to vector<8x32xf32>
    %719 = arith.mulf %708, %718 : vector<8x32xf32>
    %720 = arith.addf %717, %719 : vector<8x32xf32>
    %721 = math.tanh %720 : vector<8x32xf32>
    %cst_203 = arith.constant 1.000000e+00 : f32
    %722 = vector.broadcast %cst_203 : f32 to vector<8x32xf32>
    %723 = arith.subf %722, %716 : vector<8x32xf32>
    %724 = arith.mulf %723, %721 : vector<8x32xf32>
    %725 = arith.mulf %716, %683 : vector<8x32xf32>
    %726 = arith.addf %724, %725 : vector<8x32xf32>
    %c5_i32_204 = arith.constant 5 : i32
    %727 = vector.broadcast %c5_i32_204 : i32 to vector<8x1xi32>
    %728 = arith.cmpi sgt, %6, %727 : vector<8x1xi32>
    %729 = vector.shape_cast %728 : vector<8x1xi1> to vector<8x1xi1>
    %730 = vector.broadcast %729 : vector<8x1xi1> to vector<8x32xi1>
    %731 = arith.select %730, %726, %683 : vector<8x32xi1>, vector<8x32xf32>
    %cst_205 = arith.constant 0.000000e+00 : f32
    %732 = vector.shape_cast %728 : vector<8x1xi1> to vector<8x1xi1>
    %733 = vector.broadcast %732 : vector<8x1xi1> to vector<8x32xi1>
    %734 = vector.broadcast %cst_205 : f32 to vector<8x32xf32>
    %735 = arith.select %733, %726, %734 : vector<8x32xi1>, vector<8x32xf32>
    %c1_206 = arith.constant 1 : index
    %c5_207 = arith.constant 5 : index
    %c0_208 = arith.constant 0 : index
    %c0_209 = arith.constant 0 : index
    %736 = vector.load %arg9[%c1_206, %c5_207, %c0_208, %c0_209] : memref<2x8x8x32xf32, #tpu.memory_space<vmem>>, vector<1x1x8x32xf32>
    %737 = vector.shape_cast %736 : vector<1x1x8x32xf32> to vector<8x32xf32>
    %738 = vector.shape_cast %735 : vector<8x32xf32> to vector<1x1x8x32xf32>
    tpu.vector_store %arg9[%c1_206, %c5_207, %c0_208, %c0_209], %738 {strides = array<i32>} : memref<2x8x8x32xf32, #tpu.memory_space<vmem>>, vector<1x1x8x32xf32>,
    %739 = arith.truncf %731 : vector<8x32xf32> to vector<8x32xbf16>
    %cst_210 = arith.constant dense<0.000000e+00> : vector<8x192xf32>
    %740 = tpu.matmul %739, %438, %cst_210 {dimension_numbers = #tpu.dot_dimension_numbers<[1], [0], [0], [1], [0, 0, 1, 1], [], []>} : vector<8x32xbf16>, vector<32x192xbf16>, vector<8x192xf32> -> vector<8x192xf32>
    %741 = vector.extract_strided_slice %740 {offsets = [0, 0], sizes = [8, 96], strides = [1, 1]} : vector<8x192xf32> to vector<8x96xf32>
    %742 = vector.extract_strided_slice %740 {offsets = [0, 96], sizes = [8, 96], strides = [1, 1]} : vector<8x192xf32> to vector<8x96xf32>
    %743 = vector.shape_cast %2 : vector<8x1xi1> to vector<8x1xi1>
    %744 = vector.broadcast %743 : vector<8x1xi1> to vector<8x96xi1>
    %745 = arith.select %744, %741, %742 : vector<8x96xi1>, vector<8x96xf32>
    %746 = arith.addf %745, %449 : vector<8x96xf32>
    %c6_211 = arith.constant 6 : index
    %c0_212 = arith.constant 0 : index
    %c0_213 = arith.constant 0 : index
    %747 = vector.load %arg10[%c6_211, %c0_212, %c0_213] : memref<8x8x96xf32, #tpu.memory_space<vmem>>, vector<1x8x96xf32>
    %748 = vector.shape_cast %747 : vector<1x8x96xf32> to vector<8x96xf32>
    %749 = vector.extract_strided_slice %748 {offsets = [0, 0], sizes = [8, 32], strides = [1, 1]} : vector<8x96xf32> to vector<8x32xf32>
    %750 = vector.extract_strided_slice %746 {offsets = [0, 0], sizes = [8, 32], strides = [1, 1]} : vector<8x96xf32> to vector<8x32xf32>
    %751 = arith.addf %749, %750 : vector<8x32xf32>
    %752 = arith.negf %751 : vector<8x32xf32>
    %753 = math.exp %752 : vector<8x32xf32>
    %cst_214 = arith.constant 1.000000e+00 : f32
    %754 = vector.broadcast %cst_214 : f32 to vector<8x32xf32>
    %755 = arith.addf %754, %753 : vector<8x32xf32>
    %756 = arith.divf %754, %755 : vector<8x32xf32>
    %757 = vector.extract_strided_slice %748 {offsets = [0, 32], sizes = [8, 32], strides = [1, 1]} : vector<8x96xf32> to vector<8x32xf32>
    %758 = vector.extract_strided_slice %746 {offsets = [0, 32], sizes = [8, 32], strides = [1, 1]} : vector<8x96xf32> to vector<8x32xf32>
    %759 = arith.addf %757, %758 : vector<8x32xf32>
    %760 = arith.negf %759 : vector<8x32xf32>
    %761 = math.exp %760 : vector<8x32xf32>
    %cst_215 = arith.constant 1.000000e+00 : f32
    %762 = vector.broadcast %cst_215 : f32 to vector<8x32xf32>
    %763 = arith.addf %762, %761 : vector<8x32xf32>
    %764 = arith.divf %762, %763 : vector<8x32xf32>
    %765 = vector.extract_strided_slice %748 {offsets = [0, 64], sizes = [8, 32], strides = [1, 1]} : vector<8x96xf32> to vector<8x32xf32>
    %766 = vector.extract_strided_slice %746 {offsets = [0, 64], sizes = [8, 32], strides = [1, 1]} : vector<8x96xf32> to vector<8x32xf32>
    %767 = arith.mulf %756, %766 : vector<8x32xf32>
    %768 = arith.addf %765, %767 : vector<8x32xf32>
    %769 = math.tanh %768 : vector<8x32xf32>
    %cst_216 = arith.constant 1.000000e+00 : f32
    %770 = vector.broadcast %cst_216 : f32 to vector<8x32xf32>
    %771 = arith.subf %770, %764 : vector<8x32xf32>
    %772 = arith.mulf %771, %769 : vector<8x32xf32>
    %773 = arith.mulf %764, %731 : vector<8x32xf32>
    %774 = arith.addf %772, %773 : vector<8x32xf32>
    %c6_i32_217 = arith.constant 6 : i32
    %775 = vector.broadcast %c6_i32_217 : i32 to vector<8x1xi32>
    %776 = arith.cmpi sgt, %6, %775 : vector<8x1xi32>
    %777 = vector.shape_cast %776 : vector<8x1xi1> to vector<8x1xi1>
    %778 = vector.broadcast %777 : vector<8x1xi1> to vector<8x32xi1>
    %779 = arith.select %778, %774, %731 : vector<8x32xi1>, vector<8x32xf32>
    %cst_218 = arith.constant 0.000000e+00 : f32
    %780 = vector.shape_cast %776 : vector<8x1xi1> to vector<8x1xi1>
    %781 = vector.broadcast %780 : vector<8x1xi1> to vector<8x32xi1>
    %782 = vector.broadcast %cst_218 : f32 to vector<8x32xf32>
    %783 = arith.select %781, %774, %782 : vector<8x32xi1>, vector<8x32xf32>
    %c1_219 = arith.constant 1 : index
    %c6_220 = arith.constant 6 : index
    %c0_221 = arith.constant 0 : index
    %c0_222 = arith.constant 0 : index
    %784 = vector.load %arg9[%c1_219, %c6_220, %c0_221, %c0_222] : memref<2x8x8x32xf32, #tpu.memory_space<vmem>>, vector<1x1x8x32xf32>
    %785 = vector.shape_cast %784 : vector<1x1x8x32xf32> to vector<8x32xf32>
    %786 = vector.shape_cast %783 : vector<8x32xf32> to vector<1x1x8x32xf32>
    tpu.vector_store %arg9[%c1_219, %c6_220, %c0_221, %c0_222], %786 {strides = array<i32>} : memref<2x8x8x32xf32, #tpu.memory_space<vmem>>, vector<1x1x8x32xf32>,
    %787 = arith.truncf %779 : vector<8x32xf32> to vector<8x32xbf16>
    %cst_223 = arith.constant dense<0.000000e+00> : vector<8x192xf32>
    %788 = tpu.matmul %787, %438, %cst_223 {dimension_numbers = #tpu.dot_dimension_numbers<[1], [0], [0], [1], [0, 0, 1, 1], [], []>} : vector<8x32xbf16>, vector<32x192xbf16>, vector<8x192xf32> -> vector<8x192xf32>
    %789 = vector.extract_strided_slice %788 {offsets = [0, 0], sizes = [8, 96], strides = [1, 1]} : vector<8x192xf32> to vector<8x96xf32>
    %790 = vector.extract_strided_slice %788 {offsets = [0, 96], sizes = [8, 96], strides = [1, 1]} : vector<8x192xf32> to vector<8x96xf32>
    %791 = vector.shape_cast %2 : vector<8x1xi1> to vector<8x1xi1>
    %792 = vector.broadcast %791 : vector<8x1xi1> to vector<8x96xi1>
    %793 = arith.select %792, %789, %790 : vector<8x96xi1>, vector<8x96xf32>
    %794 = arith.addf %793, %449 : vector<8x96xf32>
    %c7_224 = arith.constant 7 : index
    %c0_225 = arith.constant 0 : index
    %c0_226 = arith.constant 0 : index
    %795 = vector.load %arg10[%c7_224, %c0_225, %c0_226] : memref<8x8x96xf32, #tpu.memory_space<vmem>>, vector<1x8x96xf32>
    %796 = vector.shape_cast %795 : vector<1x8x96xf32> to vector<8x96xf32>
    %797 = vector.extract_strided_slice %796 {offsets = [0, 0], sizes = [8, 32], strides = [1, 1]} : vector<8x96xf32> to vector<8x32xf32>
    %798 = vector.extract_strided_slice %794 {offsets = [0, 0], sizes = [8, 32], strides = [1, 1]} : vector<8x96xf32> to vector<8x32xf32>
    %799 = arith.addf %797, %798 : vector<8x32xf32>
    %800 = arith.negf %799 : vector<8x32xf32>
    %801 = math.exp %800 : vector<8x32xf32>
    %cst_227 = arith.constant 1.000000e+00 : f32
    %802 = vector.broadcast %cst_227 : f32 to vector<8x32xf32>
    %803 = arith.addf %802, %801 : vector<8x32xf32>
    %804 = arith.divf %802, %803 : vector<8x32xf32>
    %805 = vector.extract_strided_slice %796 {offsets = [0, 32], sizes = [8, 32], strides = [1, 1]} : vector<8x96xf32> to vector<8x32xf32>
    %806 = vector.extract_strided_slice %794 {offsets = [0, 32], sizes = [8, 32], strides = [1, 1]} : vector<8x96xf32> to vector<8x32xf32>
    %807 = arith.addf %805, %806 : vector<8x32xf32>
    %808 = arith.negf %807 : vector<8x32xf32>
    %809 = math.exp %808 : vector<8x32xf32>
    %cst_228 = arith.constant 1.000000e+00 : f32
    %810 = vector.broadcast %cst_228 : f32 to vector<8x32xf32>
    %811 = arith.addf %810, %809 : vector<8x32xf32>
    %812 = arith.divf %810, %811 : vector<8x32xf32>
    %813 = vector.extract_strided_slice %796 {offsets = [0, 64], sizes = [8, 32], strides = [1, 1]} : vector<8x96xf32> to vector<8x32xf32>
    %814 = vector.extract_strided_slice %794 {offsets = [0, 64], sizes = [8, 32], strides = [1, 1]} : vector<8x96xf32> to vector<8x32xf32>
    %815 = arith.mulf %804, %814 : vector<8x32xf32>
    %816 = arith.addf %813, %815 : vector<8x32xf32>
    %817 = math.tanh %816 : vector<8x32xf32>
    %cst_229 = arith.constant 1.000000e+00 : f32
    %818 = vector.broadcast %cst_229 : f32 to vector<8x32xf32>
    %819 = arith.subf %818, %812 : vector<8x32xf32>
    %820 = arith.mulf %819, %817 : vector<8x32xf32>
    %821 = arith.mulf %812, %779 : vector<8x32xf32>
    %822 = arith.addf %820, %821 : vector<8x32xf32>
    %c7_i32_230 = arith.constant 7 : i32
    %823 = vector.broadcast %c7_i32_230 : i32 to vector<8x1xi32>
    %824 = arith.cmpi sgt, %6, %823 : vector<8x1xi32>
    %cst_231 = arith.constant 0.000000e+00 : f32
    %825 = vector.shape_cast %824 : vector<8x1xi1> to vector<8x1xi1>
    %826 = vector.broadcast %825 : vector<8x1xi1> to vector<8x32xi1>
    %827 = vector.broadcast %cst_231 : f32 to vector<8x32xf32>
    %828 = arith.select %826, %822, %827 : vector<8x32xi1>, vector<8x32xf32>
    %c1_232 = arith.constant 1 : index
    %c7_233 = arith.constant 7 : index
    %c0_234 = arith.constant 0 : index
    %c0_235 = arith.constant 0 : index
    %829 = vector.load %arg9[%c1_232, %c7_233, %c0_234, %c0_235] : memref<2x8x8x32xf32, #tpu.memory_space<vmem>>, vector<1x1x8x32xf32>
    %830 = vector.shape_cast %829 : vector<1x1x8x32xf32> to vector<8x32xf32>
    %831 = vector.shape_cast %828 : vector<8x32xf32> to vector<1x1x8x32xf32>
    tpu.vector_store %arg9[%c1_232, %c7_233, %c0_234, %c0_235], %831 {strides = array<i32>} : memref<2x8x8x32xf32, #tpu.memory_space<vmem>>, vector<1x1x8x32xf32>,
    %c0_236 = arith.constant 0 : index
    %c0_237 = arith.constant 0 : index
    %832 = vector.load %arg6[%c0_236, %c0_237] : memref<64x64xbf16, #tpu.memory_space<vmem>>, vector<64x64xbf16>
    %c0_238 = arith.constant 0 : index
    %c0_239 = arith.constant 0 : index
    %833 = vector.load %arg7[%c0_238, %c0_239] : memref<1x64xf32, #tpu.memory_space<vmem>>, vector<1x64xf32>
    %c0_240 = arith.constant 0 : index
    %c0_241 = arith.constant 0 : index
    %c0_242 = arith.constant 0 : index
    %c0_243 = arith.constant 0 : index
    %834 = vector.load %arg9[%c0_240, %c0_241, %c0_242, %c0_243] : memref<2x8x8x32xf32, #tpu.memory_space<vmem>>, vector<1x8x8x32xf32>
    %835 = vector.shape_cast %834 : vector<1x8x8x32xf32> to vector<8x8x32xf32>
    %c1_244 = arith.constant 1 : index
    %c0_245 = arith.constant 0 : index
    %c0_246 = arith.constant 0 : index
    %c0_247 = arith.constant 0 : index
    %836 = vector.load %arg9[%c1_244, %c0_245, %c0_246, %c0_247] : memref<2x8x8x32xf32, #tpu.memory_space<vmem>>, vector<1x8x8x32xf32>
    %837 = vector.shape_cast %836 : vector<1x8x8x32xf32> to vector<8x8x32xf32>
    %838 = vector.extract_strided_slice %835 {offsets = [0, 0, 0], sizes = [8, 4, 32], strides = [1, 1, 1]} : vector<8x8x32xf32> to vector<8x4x32xf32>
    %839 = vector.extract_strided_slice %837 {offsets = [0, 4, 0], sizes = [8, 4, 32], strides = [1, 1, 1]} : vector<8x8x32xf32> to vector<8x4x32xf32>
    %840 = tpu.concatenate %838, %839 in 2 : vector<8x4x32xf32>, vector<8x4x32xf32> -> vector<8x4x64xf32>
    %841 = vector.shape_cast %840 : vector<8x4x64xf32> to vector<32x64xf32>
    %842 = arith.truncf %841 : vector<32x64xf32> to vector<32x64xbf16>
    %cst_248 = arith.constant dense<0.000000e+00> : vector<32x64xf32>
    %843 = tpu.matmul %842, %832, %cst_248 {dimension_numbers = #tpu.dot_dimension_numbers<[1], [0], [0], [1], [0, 0, 1, 1], [], []>} : vector<32x64xbf16>, vector<64x64xbf16>, vector<32x64xf32> -> vector<32x64xf32>
    %844 = vector.broadcast %833 : vector<1x64xf32> to vector<32x64xf32>
    %845 = arith.addf %843, %844 : vector<32x64xf32>
    %846 = vector.shape_cast %845 : vector<32x64xf32> to vector<8x4x64xf32>
    %c0_249 = arith.constant 0 : index
    %c0_250 = arith.constant 0 : index
    %c0_251 = arith.constant 0 : index
    %c0_252 = arith.constant 0 : index
    %847 = vector.load %arg8[%c0_249, %c0_250, %c0_251, %c0_252] : memref<2x8x4x64xf32, #tpu.memory_space<vmem>>, vector<1x8x4x64xf32>
    %848 = vector.shape_cast %847 : vector<1x8x4x64xf32> to vector<8x4x64xf32>
    %849 = vector.shape_cast %846 : vector<8x4x64xf32> to vector<1x8x4x64xf32>
    tpu.vector_store %arg8[%c0_249, %c0_250, %c0_251, %c0_252], %849 {strides = array<i32>} : memref<2x8x4x64xf32, #tpu.memory_space<vmem>>, vector<1x8x4x64xf32>,
    %c1_253 = arith.constant 1 : index
    %c0_254 = arith.constant 0 : index
    %c0_255 = arith.constant 0 : index
    %c0_256 = arith.constant 0 : index
    %850 = vector.load %arg9[%c1_253, %c0_254, %c0_255, %c0_256] : memref<2x8x8x32xf32, #tpu.memory_space<vmem>>, vector<1x8x8x32xf32>
    %851 = vector.shape_cast %850 : vector<1x8x8x32xf32> to vector<8x8x32xf32>
    %c0_257 = arith.constant 0 : index
    %c0_258 = arith.constant 0 : index
    %c0_259 = arith.constant 0 : index
    %c0_260 = arith.constant 0 : index
    %852 = vector.load %arg9[%c0_257, %c0_258, %c0_259, %c0_260] : memref<2x8x8x32xf32, #tpu.memory_space<vmem>>, vector<1x8x8x32xf32>
    %853 = vector.shape_cast %852 : vector<1x8x8x32xf32> to vector<8x8x32xf32>
    %854 = vector.extract_strided_slice %851 {offsets = [0, 0, 0], sizes = [8, 4, 32], strides = [1, 1, 1]} : vector<8x8x32xf32> to vector<8x4x32xf32>
    %855 = vector.extract_strided_slice %853 {offsets = [0, 4, 0], sizes = [8, 4, 32], strides = [1, 1, 1]} : vector<8x8x32xf32> to vector<8x4x32xf32>
    %856 = tpu.concatenate %854, %855 in 2 : vector<8x4x32xf32>, vector<8x4x32xf32> -> vector<8x4x64xf32>
    %857 = vector.shape_cast %856 : vector<8x4x64xf32> to vector<32x64xf32>
    %858 = arith.truncf %857 : vector<32x64xf32> to vector<32x64xbf16>
    %cst_261 = arith.constant dense<0.000000e+00> : vector<32x64xf32>
    %859 = tpu.matmul %858, %832, %cst_261 {dimension_numbers = #tpu.dot_dimension_numbers<[1], [0], [0], [1], [0, 0, 1, 1], [], []>} : vector<32x64xbf16>, vector<64x64xbf16>, vector<32x64xf32> -> vector<32x64xf32>
    %860 = vector.broadcast %833 : vector<1x64xf32> to vector<32x64xf32>
    %861 = arith.addf %859, %860 : vector<32x64xf32>
    %862 = vector.shape_cast %861 : vector<32x64xf32> to vector<8x4x64xf32>
    %c1_262 = arith.constant 1 : index
    %c0_263 = arith.constant 0 : index
    %c0_264 = arith.constant 0 : index
    %c0_265 = arith.constant 0 : index
    %863 = vector.load %arg8[%c1_262, %c0_263, %c0_264, %c0_265] : memref<2x8x4x64xf32, #tpu.memory_space<vmem>>, vector<1x8x4x64xf32>
    %864 = vector.shape_cast %863 : vector<1x8x4x64xf32> to vector<8x4x64xf32>
    %865 = vector.shape_cast %862 : vector<8x4x64xf32> to vector<1x8x4x64xf32>
    tpu.vector_store %arg8[%c1_262, %c0_263, %c0_264, %c0_265], %865 {strides = array<i32>} : memref<2x8x4x64xf32, #tpu.memory_space<vmem>>, vector<1x8x4x64xf32>,
    return
  }
}

</mosaic_0001>

<llo_original>
// kernel: encoder_forward.1
$region0: #{encoder_forward.1}
  #allocation0 [shape = 'u32[]', space=smem, size = 0x4, offset = 0x4, fixed_abs, tag = 'smem constant byte address 0x4 - core index']
  #allocation1 [shape = 'u32[144,128]{1,0:T(1,128)}', space=vmem, size = 0x12000, scoped, tag = 'internal scratch']
  #allocation2 [shape = 'f32[2,8,8,32]{3,2,1,0:T(8,128)}', space=vmem, size = 0x10000, scoped, tag = 'scratch operand']
  #allocation3 [shape = 'f32[8,8,96]{2,1,0:T(8,128)}', space=vmem, size = 0x8000, scoped, tag = 'scratch operand']
  %s0 = inlined_call_operand.vmem [shape: f32[8,8,32], index: 0, kind: input, shape index: {}]
  %s1 = inlined_call_operand.vmem [shape: s32[8,1], index: 1, kind: input, shape index: {}]
  %s2 = inlined_call_operand.vmem [shape: bf16[2,32,192], index: 2, kind: input, shape index: {}]
  %s3 = inlined_call_operand.vmem [shape: bf16[2,32,192], index: 3, kind: input, shape index: {}]
  %s4 = inlined_call_operand.vmem [shape: f32[2,1,192], index: 4, kind: input, shape index: {}]
  %s5 = inlined_call_operand.vmem [shape: f32[2,1,192], index: 5, kind: input, shape index: {}]
  %s6 = inlined_call_operand.vmem [shape: bf16[64,64], index: 6, kind: input, shape index: {}]
  %s7 = inlined_call_operand.vmem [shape: f32[1,64], index: 7, kind: input, shape index: {}]
  %s8 = inlined_call_operand.vmem [shape: f32[2,8,4,64], index: 8, kind: output, shape index: {}]
  %s9 = sld [smem:[#allocation0]]
  $region42: #{encoder_forward.1} parent=0
    _
  %s11 = ssub.s32 1, %s9
  %s12 = scalar_select 0, %s11, %s9
  // Predicated region
  $region2: #{encoder_forward.1} parent=0 // pred_check
    _
  $region3: #{encoder_forward.1} parent=0 // pred_check_branch
    %14 = sbr.rel (0) target = $region5
  $region4: #{encoder_forward.1} parent=0 // pred_region
    _
  $region5: #{encoder_forward.1} parent=0 // pred_fallthru
    _
  // Predicated region
  $region6: #{encoder_forward.1} parent=0 // pred_check
    _
  $region7: #{encoder_forward.1} parent=0 // pred_check_branch
    %16 = sbr.rel (0) target = $region9
  $region8: #{encoder_forward.1} parent=0 // pred_region
    _
  $region9: #{encoder_forward.1} parent=0 // pred_fallthru
    _
  // Predicated region
  $region10: #{encoder_forward.1} parent=0 // pred_check
    _
  $region11: #{encoder_forward.1} parent=0 // pred_check_branch
    %18 = sbr.rel (0) target = $region13
  $region12: #{encoder_forward.1} parent=0 // pred_region
    _
  $region13: #{encoder_forward.1} parent=0 // pred_fallthru
    _
  // Predicated region
  $region14: #{encoder_forward.1} parent=0 // pred_check
    _
  $region15: #{encoder_forward.1} parent=0 // pred_check_branch
    %20 = sbr.rel (0) target = $region17
  $region16: #{encoder_forward.1} parent=0 // pred_region
    _
  $region17: #{encoder_forward.1} parent=0 // pred_fallthru
    _
  // Predicated region
  $region18: #{encoder_forward.1} parent=0 // pred_check
    _
  $region19: #{encoder_forward.1} parent=0 // pred_check_branch
    %22 = sbr.rel (0) target = $region21
  $region20: #{encoder_forward.1} parent=0 // pred_region
    _
  $region21: #{encoder_forward.1} parent=0 // pred_fallthru
    _
  // Predicated region
  $region22: #{encoder_forward.1} parent=0 // pred_check
    _
  $region23: #{encoder_forward.1} parent=0 // pred_check_branch
    %24 = sbr.rel (0) target = $region25
  $region24: #{encoder_forward.1} parent=0 // pred_region
    _
  $region25: #{encoder_forward.1} parent=0 // pred_fallthru
    _
  // Predicated region
  $region26: #{encoder_forward.1} parent=0 // pred_check
    _
  $region27: #{encoder_forward.1} parent=0 // pred_check_branch
    %26 = sbr.rel (0) target = $region29
  $region28: #{encoder_forward.1} parent=0 // pred_region
    _
  $region29: #{encoder_forward.1} parent=0 // pred_fallthru
    _
  // Predicated region
  $region30: #{encoder_forward.1} parent=0 // pred_check
    _
  $region31: #{encoder_forward.1} parent=0 // pred_check_branch
    %28 = sbr.rel (0) target = $region33
  $region32: #{encoder_forward.1} parent=0 // pred_region
    _
  $region33: #{encoder_forward.1} parent=0 // pred_fallthru
    _
  %v30 = vlaneseq
  %v31 = vshrl.u32 %v30, 7
  %vm32 = vcmp.lt.s32.totalorder %v31, 4
  %v33 = vld [vmem:[%s1] sm:$0xff]
  %v34 = vld [vmem:[%s0] sm:$0xff]
  %v35 = vld [vmem:[%s0 + $0x8] sm:$0xff]
  %v36 = vld [vmem:[%s0 + $0x10] sm:$0xff]
  %v37 = vld [vmem:[%s0 + $0x18] sm:$0xff]
  %v38 = vld [vmem:[%s0 + $0x20] sm:$0xff]
  %v39 = vld [vmem:[%s0 + $0x28] sm:$0xff]
  %v40 = vld [vmem:[%s0 + $0x30] sm:$0xff]
  %v41 = vld [vmem:[%s0 + $0x38] sm:$0xff]
  %v42 = vpack.c.bf16 %v35, %v34
  %v43 = vpack.c.bf16 %v37, %v36
  %v44 = vpack.c.bf16 %v39, %v38
  %v45 = vpack.c.bf16 %v41, %v40
  %v46 = vld [vmem:[%s2] sm:$0xff]
  %v47 = vld [vmem:[%s2 + $0x8] sm:$0xff]
  %v48 = vld [vmem:[%s2 + $0x10] sm:$0xff]
  %v49 = vld [vmem:[%s2 + $0x18] sm:$0xff]
  %v50 = vld [vmem:[%s4] sm:$0x3]
  %v52 = vlaneseq
  %v53 = vshrl.u32 %v52, 7
  %v54 = vsub.s32 0, %v53
  %v55 = vrot.slane %v50, %v54
  %v56 = vlaneseq
  %v57 = vshrl.u32 %v56, 7
  %v58 = vsub.s32 1, %v57
  %v59 = vrot.slane %v50, %v58
  %v66 = vunpack.c.l.b16 %v46
  %v67 = vunpack.c.h.b16 %v46
  %v68 = vunpack.c.l.b16 %v47
  %v69 = vunpack.c.h.b16 %v47
  %v70 = vunpack.c.l.b16 %v48
  %v71 = vunpack.c.h.b16 %v48
  %v72 = vunpack.c.l.b16 %v49
  %v73 = vunpack.c.h.b16 %v49
  %v74 = vpack.c.b16 %v68, %v66
  %v75 = vpack.c.b16 %v69, %v67
  %v76 = vpack.c.b16 %v72, %v70
  %v77 = vpack.c.b16 %v73, %v71
  %vm82 = vcmask 261120
  %v84 = vsel %vm82, %v42, 0
  %v87 = vsel %vm82, %v43, 0
  %v90 = vsel %vm82, %v44, 0
  %v93 = vsel %vm82, %v45, 0
  %95 = vmatprep.subr.bf16.mxu0 %v75
  %96 = vmatpush1.bf16.msra.mxu0 %v74
  %97 = vmatprep.subr.bf16.mxu0 %v77
  %98 = vmatpush1.bf16.msra.mxu0 %v76
  %99 = vmatprep.subr.bf16.mxu0 0
  %100 = vmatpush1.bf16.msra.mxu0 0
  %101 = vmatprep.subr.bf16.mxu0 0
  %102 = vmatpush1.bf16.msra.mxu0 0
  %103 = vmatprep.subr.bf16.mxu0 0
  %104 = vmatpush1.bf16.msra.mxu0 0
  %105 = vmatprep.subr.bf16.mxu0 0
  %106 = vmatpush1.bf16.msra.mxu0 0
  %107 = vmatprep.subr.bf16.mxu0 0
  %108 = vmatpush1.bf16.msra.mxu0 0
  %109 = vmatprep.subr.bf16.mxu0 0
  %110 = vmatpush1.bf16.msra.mxu0 0
  %111 = vmatprep.subr.bf16.mxu0 0
  %112 = vmatpush1.bf16.msra.mxu0 0
  %113 = vmatprep.subr.bf16.mxu0 0
  %114 = vmatpush1.bf16.msra.mxu0 0
  %115 = vmatprep.subr.bf16.mxu0 0
  %116 = vmatpush1.bf16.msra.mxu0 0
  %117 = vmatprep.subr.bf16.mxu0 0
  %118 = vmatpush1.bf16.msra.mxu0 0
  %119 = vmatprep.subr.bf16.mxu0 0
  %120 = vmatpush1.bf16.msra.mxu0 0
  %121 = vmatprep.subr.bf16.mxu0 0
  %122 = vmatpush1.bf16.msra.mxu0 0
  %123 = vmatprep.subr.bf16.mxu0 0
  %124 = vmatpush1.bf16.msra.mxu0 0
  %125 = vmatprep.subr.bf16.mxu0 0
  %126 = vmatpush1.bf16.msra.mxu0 0
  %127 = vmatprep.mubr.bf16.mxu0 0
  %128 = vmatmul.mubr.bf16.gmra.mrb[0].mxu0 %v84
  %v129 = vpop.f32.mrb[0].mxu0
  %v130 = vadd.f32 %v55, %v129
  %v131 = vpop.f32.mrb[0].mxu0
  %v132 = vadd.f32 %v59, %v131
  %v133 = vpop.f32.mrb[0].mxu0
  %v134 = vadd.f32 %v55, %v133
  %v135 = vpop.f32.mrb[0].mxu0
  %v136 = vadd.f32 %v59, %v135
  %137 = vmatprep.mubr.bf16.mxu0 0
  %138 = vmatmul.mubr.bf16.gmra.mrb[0].mxu0 %v87
  %v139 = vpop.f32.mrb[0].mxu0
  %v140 = vadd.f32 %v55, %v139
  %v141 = vpop.f32.mrb[0].mxu0
  %v142 = vadd.f32 %v59, %v141
  %v143 = vpop.f32.mrb[0].mxu0
  %v144 = vadd.f32 %v55, %v143
  %v145 = vpop.f32.mrb[0].mxu0
  %v146 = vadd.f32 %v59, %v145
  %147 = vmatprep.mubr.bf16.mxu0 0
  %148 = vmatmul.mubr.bf16.gmra.mrb[0].mxu0 %v90
  %v149 = vpop.f32.mrb[0].mxu0
  %v150 = vadd.f32 %v55, %v149
  %v151 = vpop.f32.mrb[0].mxu0
  %v152 = vadd.f32 %v59, %v151
  %v153 = vpop.f32.mrb[0].mxu0
  %v154 = vadd.f32 %v55, %v153
  %v155 = vpop.f32.mrb[0].mxu0
  %v156 = vadd.f32 %v59, %v155
  %157 = vmatprep.mubr.bf16.mxu0 0
  %158 = vmatmul.mubr.bf16.gmra.mrb[0].mxu0 %v93
  %v159 = vpop.f32.mrb[0].mxu0
  %v160 = vadd.f32 %v55, %v159
  %v161 = vpop.f32.mrb[0].mxu0
  %v162 = vadd.f32 %v59, %v161
  %v163 = vpop.f32.mrb[0].mxu0
  %v164 = vadd.f32 %v55, %v163
  %v165 = vpop.f32.mrb[0].mxu0
  %v166 = vadd.f32 %v59, %v165
  %167 = vdwg.mxu0
  %v168 = vsel %vm32, 1, 0
  %vm169 = vcmp.eq.s32.totalorder %v168, 1
  %186 = vrot.lane.b32.xlu0 %v130, 32
  %v187 = vpop.permute.xlu0 %186
  %188 = vrot.lane.b32.xlu0 %v132, 32
  %v189 = vpop.permute.xlu0 %188
  %190 = vrot.lane.b32.xlu0 %v134, 32
  %v191 = vpop.permute.xlu0 %190
  %192 = vrot.lane.b32.xlu0 %v136, 32
  %v193 = vpop.permute.xlu0 %192
  %194 = vrot.lane.b32.xlu0 %v140, 32
  %v195 = vpop.permute.xlu0 %194
  %196 = vrot.lane.b32.xlu0 %v142, 32
  %v197 = vpop.permute.xlu0 %196
  %198 = vrot.lane.b32.xlu0 %v144, 32
  %v199 = vpop.permute.xlu0 %198
  %200 = vrot.lane.b32.xlu0 %v146, 32
  %v201 = vpop.permute.xlu0 %200
  %202 = vrot.lane.b32.xlu0 %v150, 32
  %v203 = vpop.permute.xlu0 %202
  %204 = vrot.lane.b32.xlu0 %v152, 32
  %v205 = vpop.permute.xlu0 %204
  %206 = vrot.lane.b32.xlu0 %v154, 32
  %v207 = vpop.permute.xlu0 %206
  %208 = vrot.lane.b32.xlu0 %v156, 32
  %v209 = vpop.permute.xlu0 %208
  %210 = vrot.lane.b32.xlu0 %v160, 32
  %v211 = vpop.permute.xlu0 %210
  %212 = vrot.lane.b32.xlu0 %v162, 32
  %v213 = vpop.permute.xlu0 %212
  %214 = vrot.lane.b32.xlu0 %v164, 32
  %v215 = vpop.permute.xlu0 %214
  %216 = vrot.lane.b32.xlu0 %v166, 32
  %v217 = vpop.permute.xlu0 %216
  %v218 = vsel %vm82, %v187, %v189
  %v219 = vsel %vm82, %v191, %v193
  %v220 = vsel %vm82, %v195, %v197
  %v221 = vsel %vm82, %v199, %v201
  %v222 = vsel %vm82, %v203, %v205
  %v223 = vsel %vm82, %v207, %v209
  %v224 = vsel %vm82, %v211, %v213
  %v225 = vsel %vm82, %v215, %v217
  %v234 = vsel %vm169, %v130, %v218
  %v235 = vsel %vm169, %v134, %v219
  %v236 = vsel %vm169, %v140, %v220
  %v237 = vsel %vm169, %v144, %v221
  %v238 = vsel %vm169, %v150, %v222
  %v239 = vsel %vm169, %v154, %v223
  %v240 = vsel %vm169, %v160, %v224
  %v241 = vsel %vm169, %v164, %v225
  %vm242 = vcmask 785408
  %243 = vst.msk [vmem:[#allocation3] sm:$0xff] %vm242, %v234
  %244 = vst.msk [vmem:[#allocation3 + $0x8] sm:$0xff] %vm242, %v235
  %245 = vst.msk [vmem:[#allocation3 + $0x10] sm:$0xff] %vm242, %v236
  %246 = vst.msk [vmem:[#allocation3 + $0x18] sm:$0xff] %vm242, %v237
  %247 = vst.msk [vmem:[#allocation3 + $0x20] sm:$0xff] %vm242, %v238
  %248 = vst.msk [vmem:[#allocation3 + $0x28] sm:$0xff] %vm242, %v239
  %249 = vst.msk [vmem:[#allocation3 + $0x30] sm:$0xff] %vm242, %v240
  %250 = vst.msk [vmem:[#allocation3 + $0x38] sm:$0xff] %vm242, %v241
  %v251 = vld [vmem:[%s3] sm:$0xff]
  %v252 = vld [vmem:[%s3 + $0x8] sm:$0xff]
  %v253 = vld [vmem:[%s3 + $0x10] sm:$0xff]
  %v254 = vld [vmem:[%s3 + $0x18] sm:$0xff]
  %v255 = vld [vmem:[%s5] sm:$0x3]
  %v257 = vlaneseq
  %v258 = vshrl.u32 %v257, 7
  %v259 = vsub.s32 0, %v258
  %v260 = vrot.slane %v255, %v259
  %v262 = vlaneseq
  %v263 = vshrl.u32 %v262, 7
  %v264 = vsub.s32 1, %v263
  %v265 = vrot.slane %v255, %v264
  %266 = vrot.lane.b32.xlu0 %v260, 32
  %v267 = vpop.permute.xlu0 %266
  %268 = vrot.lane.b32.xlu0 %v265, 32
  %v269 = vpop.permute.xlu0 %268
  %v270 = vsel %vm82, %v267, %v269
  %v272 = vsel %vm169, %v260, %v270
  %v277 = vunpack.c.l.b16 %v251
  %v278 = vunpack.c.h.b16 %v251
  %v279 = vunpack.c.l.b16 %v252
  %v280 = vunpack.c.h.b16 %v252
  %v281 = vunpack.c.l.b16 %v253
  %v282 = vunpack.c.h.b16 %v253
  %v283 = vunpack.c.l.b16 %v254
  %v284 = vunpack.c.h.b16 %v254
  %v285 = vpack.c.b16 %v279, %v277
  %v286 = vpack.c.b16 %v280, %v278
  %v287 = vpack.c.b16 %v283, %v281
  %v288 = vpack.c.b16 %v284, %v282
  %v294 = vsel %vm82, 0, 0
  %296 = vmatprep.subr.bf16.mxu0 %v286
  %297 = vmatpush1.bf16.msra.mxu0 %v285
  %298 = vmatprep.subr.bf16.mxu0 %v288
  %299 = vmatpush1.bf16.msra.mxu0 %v287
  %300 = vmatprep.subr.bf16.mxu0 0
  %301 = vmatpush1.bf16.msra.mxu0 0
  %302 = vmatprep.subr.bf16.mxu0 0
  %303 = vmatpush1.bf16.msra.mxu0 0
  %304 = vmatprep.subr.bf16.mxu0 0
  %305 = vmatpush1.bf16.msra.mxu0 0
  %306 = vmatprep.subr.bf16.mxu0 0
  %307 = vmatpush1.bf16.msra.mxu0 0
  %308 = vmatprep.subr.bf16.mxu0 0
  %309 = vmatpush1.bf16.msra.mxu0 0
  %310 = vmatprep.subr.bf16.mxu0 0
  %311 = vmatpush1.bf16.msra.mxu0 0
  %312 = vmatprep.subr.bf16.mxu0 0
  %313 = vmatpush1.bf16.msra.mxu0 0
  %314 = vmatprep.subr.bf16.mxu0 0
  %315 = vmatpush1.bf16.msra.mxu0 0
  %316 = vmatprep.subr.bf16.mxu0 0
  %317 = vmatpush1.bf16.msra.mxu0 0
  %318 = vmatprep.subr.bf16.mxu0 0
  %319 = vmatpush1.bf16.msra.mxu0 0
  %320 = vmatprep.subr.bf16.mxu0 0
  %321 = vmatpush1.bf16.msra.mxu0 0
  %322 = vmatprep.subr.bf16.mxu0 0
  %323 = vmatpush1.bf16.msra.mxu0 0
  %324 = vmatprep.subr.bf16.mxu0 0
  %325 = vmatpush1.bf16.msra.mxu0 0
  %326 = vmatprep.subr.bf16.mxu0 0
  %327 = vmatpush1.bf16.msra.mxu0 0
  %328 = vmatprep.mubr.bf16.mxu0 0
  %329 = vmatmul.mubr.bf16.gmra.mrb[0].mxu0 %v294
  %v330 = vpop.f32.mrb[0].mxu0
  %v331 = vadd.f32 0.0, %v330
  %v332 = vpop.f32.mrb[0].mxu0
  %v333 = vadd.f32 0.0, %v332
  %v334 = vpop.f32.mrb[0].mxu0
  %v335 = vpop.f32.mrb[0].mxu0
  %336 = vdwg.mxu0
  %339 = vrot.lane.b32.xlu0 %v331, 32
  %v340 = vpop.permute.xlu0 %339
  %341 = vrot.lane.b32.xlu0 %v333, 32
  %v342 = vpop.permute.xlu0 %341
  %v343 = vsel %vm82, %v340, %v342
  %v345 = vsel %vm169, %v331, %v343
  %v346 = vadd.f32 %v345, %v272
  %v347 = vld [vmem:[#allocation3] sm:$0xff]
  %v348 = vadd.f32 %v347, %v346
  %v349 = vxor.u32 %v348, 2147483648
  %v350 = vmul.f32 %v349, 1.442695
  %v351 = vpow.pop %v350
  %v352 = vadd.f32 %v351, 1.0
  %v353 = vrcp.pop %v352
  %v354 = vmul.f32 1.0, %v353
  %356 = vrot.lane.b32.xlu0 %v346, 64
  %v357 = vpop.permute.xlu0 %356
  %v359 = vmul.f32 %v354, %v357
  %361 = vrot.lane.b32.xlu0 %v359, 64
  %v362 = vpop.permute.xlu0 %361
  %v364 = vadd.f32 %v347, %v362
  %v365 = vtanh.pop %v364
  %v366 = vsub.f32 1.0, %v354
  %368 = vrot.lane.b32.xlu0 %v365, 96
  %v369 = vpop.permute.xlu0 %368
  %v371 = vmul.f32 %v366, %v369
  %v372 = vmul.f32 %v354, 0.0
  %v373 = vadd.f32 %v371, %v372
  %vm374 = vcmp.gt.s32.totalorder %v33, 0
  %v375 = vsel %vm374, 1, 0
  %376 = vset.pattern.permute.xlu0 0
  %377 = vperm.xlu0 %376, %v375
  %v378 = vpop.permute.xlu0 %377
  %vm379 = vcmp.eq.s32.totalorder %v378, 1
  %v380 = vsel %vm379, %v373, 0.0
  %382 = vrot.lane.b32.xlu0 %v380, 96
  %v383 = vpop.permute.xlu0 %382
  %385 = vst.msk [vmem:[#allocation2] sm:$0xff] %vm82, %v383
  %v386 = vpack.c.bf16 %v380, %v380
  %388 = vrot.lane.b32.xlu0 %v386, 96
  %v389 = vpop.permute.xlu0 %388
  %v391 = vsel %vm82, %v389, 0
  %393 = vmatprep.subr.bf16.mxu0 %v286
  %394 = vmatpush1.bf16.msra.mxu0 %v285
  %395 = vmatprep.subr.bf16.mxu0 %v288
  %396 = vmatpush1.bf16.msra.mxu0 %v287
  %397 = vmatprep.subr.bf16.mxu0 0
  %398 = vmatpush1.bf16.msra.mxu0 0
  %399 = vmatprep.subr.bf16.mxu0 0
  %400 = vmatpush1.bf16.msra.mxu0 0
  %401 = vmatprep.subr.bf16.mxu0 0
  %402 = vmatpush1.bf16.msra.mxu0 0
  %403 = vmatprep.subr.bf16.mxu0 0
  %404 = vmatpush1.bf16.msra.mxu0 0
  %405 = vmatprep.subr.bf16.mxu0 0
  %406 = vmatpush1.bf16.msra.mxu0 0
  %407 = vmatprep.subr.bf16.mxu0 0
  %408 = vmatpush1.bf16.msra.mxu0 0
  %409 = vmatprep.subr.bf16.mxu0 0
  %410 = vmatpush1.bf16.msra.mxu0 0
  %411 = vmatprep.subr.bf16.mxu0 0
  %412 = vmatpush1.bf16.msra.mxu0 0
  %413 = vmatprep.subr.bf16.mxu0 0
  %414 = vmatpush1.bf16.msra.mxu0 0
  %415 = vmatprep.subr.bf16.mxu0 0
  %416 = vmatpush1.bf16.msra.mxu0 0
  %417 = vmatprep.subr.bf16.mxu0 0
  %418 = vmatpush1.bf16.msra.mxu0 0
  %419 = vmatprep.subr.bf16.mxu0 0
  %420 = vmatpush1.bf16.msra.mxu0 0
  %421 = vmatprep.subr.bf16.mxu0 0
  %422 = vmatpush1.bf16.msra.mxu0 0
  %423 = vmatprep.subr.bf16.mxu0 0
  %424 = vmatpush1.bf16.msra.mxu0 0
  %425 = vmatprep.mubr.bf16.mxu0 0
  %426 = vmatmul.mubr.bf16.gmra.mrb[0].mxu0 %v391
  %v427 = vpop.f32.mrb[0].mxu0
  %v428 = vadd.f32 0.0, %v427
  %v429 = vpop.f32.mrb[0].mxu0
  %v430 = vadd.f32 0.0, %v429
  %v431 = vpop.f32.mrb[0].mxu0
  %v432 = vpop.f32.mrb[0].mxu0
  %433 = vdwg.mxu0
  %436 = vrot.lane.b32.xlu0 %v428, 32
  %v437 = vpop.permute.xlu0 %436
  %438 = vrot.lane.b32.xlu0 %v430, 32
  %v439 = vpop.permute.xlu0 %438
  %v440 = vsel %vm82, %v437, %v439
  %v442 = vsel %vm169, %v428, %v440
  %v443 = vadd.f32 %v442, %v272
  %s444 = scalar_lea.vmem [#allocation3], 8
  %v445 = vld [vmem:[%s444] sm:$0xff]
  %v446 = vadd.f32 %v445, %v443
  %v447 = vxor.u32 %v446, 2147483648
  %v448 = vmul.f32 %v447, 1.442695
  %v449 = vpow.pop %v448
  %v450 = vadd.f32 %v449, 1.0
  %v451 = vrcp.pop %v450
  %v452 = vmul.f32 1.0, %v451
  %454 = vrot.lane.b32.xlu0 %v443, 64
  %v455 = vpop.permute.xlu0 %454
  %v457 = vmul.f32 %v452, %v455
  %459 = vrot.lane.b32.xlu0 %v457, 64
  %v460 = vpop.permute.xlu0 %459
  %v462 = vadd.f32 %v445, %v460
  %v463 = vtanh.pop %v462
  %v464 = vsub.f32 1.0, %v452
  %466 = vrot.lane.b32.xlu0 %v463, 96
  %v467 = vpop.permute.xlu0 %466
  %v469 = vmul.f32 %v464, %v467
  %v470 = vmul.f32 %v452, %v380
  %v471 = vadd.f32 %v469, %v470
  %vm472 = vcmp.gt.s32.totalorder %v33, 1
  %v473 = vsel %vm472, 1, 0
  %474 = vset.pattern.permute.xlu0 0
  %475 = vperm.xlu0 %474, %v473
  %v476 = vpop.permute.xlu0 %475
  %vm477 = vcmp.eq.s32.totalorder %v476, 1
  %v478 = vsel %vm477, %v471, %v380
  %v479 = vsel %vm477, %v471, 0.0
  %481 = vrot.lane.b32.xlu0 %v479, 96
  %v482 = vpop.permute.xlu0 %481
  %s484 = scalar_lea.vmem [#allocation2], 8
  %485 = vst.msk [vmem:[%s484] sm:$0xff] %vm82, %v482
  %v486 = vpack.c.bf16 %v478, %v478
  %488 = vrot.lane.b32.xlu0 %v486, 96
  %v489 = vpop.permute.xlu0 %488
  %v491 = vsel %vm82, %v489, 0
  %493 = vmatprep.subr.bf16.mxu0 %v286
  %494 = vmatpush1.bf16.msra.mxu0 %v285
  %495 = vmatprep.subr.bf16.mxu0 %v288
  %496 = vmatpush1.bf16.msra.mxu0 %v287
  %497 = vmatprep.subr.bf16.mxu0 0
  %498 = vmatpush1.bf16.msra.mxu0 0
  %499 = vmatprep.subr.bf16.mxu0 0
  %500 = vmatpush1.bf16.msra.mxu0 0
  %501 = vmatprep.subr.bf16.mxu0 0
  %502 = vmatpush1.bf16.msra.mxu0 0
  %503 = vmatprep.subr.bf16.mxu0 0
  %504 = vmatpush1.bf16.msra.mxu0 0
  %505 = vmatprep.subr.bf16.mxu0 0
  %506 = vmatpush1.bf16.msra.mxu0 0
  %507 = vmatprep.subr.bf16.mxu0 0
  %508 = vmatpush1.bf16.msra.mxu0 0
  %509 = vmatprep.subr.bf16.mxu0 0
  %510 = vmatpush1.bf16.msra.mxu0 0
  %511 = vmatprep.subr.bf16.mxu0 0
  %512 = vmatpush1.bf16.msra.mxu0 0
  %513 = vmatprep.subr.bf16.mxu0 0
  %514 = vmatpush1.bf16.msra.mxu0 0
  %515 = vmatprep.subr.bf16.mxu0 0
  %516 = vmatpush1.bf16.msra.mxu0 0
  %517 = vmatprep.subr.bf16.mxu0 0
  %518 = vmatpush1.bf16.msra.mxu0 0
  %519 = vmatprep.subr.bf16.mxu0 0
  %520 = vmatpush1.bf16.msra.mxu0 0
  %521 = vmatprep.subr.bf16.mxu0 0
  %522 = vmatpush1.bf16.msra.mxu0 0
  %523 = vmatprep.subr.bf16.mxu0 0
  %524 = vmatpush1.bf16.msra.mxu0 0
  %525 = vmatprep.mubr.bf16.mxu0 0
  %526 = vmatmul.mubr.bf16.gmra.mrb[0].mxu0 %v491
  %v527 = vpop.f32.mrb[0].mxu0
  %v528 = vadd.f32 0.0, %v527
  %v529 = vpop.f32.mrb[0].mxu0
  %v530 = vadd.f32 0.0, %v529
  %v531 = vpop.f32.mrb[0].mxu0
  %v532 = vpop.f32.mrb[0].mxu0
  %533 = vdwg.mxu0
  %536 = vrot.lane.b32.xlu0 %v528, 32
  %v537 = vpop.permute.xlu0 %536
  %538 = vrot.lane.b32.xlu0 %v530, 32
  %v539 = vpop.permute.xlu0 %538
  %v540 = vsel %vm82, %v537, %v539
  %v542 = vsel %vm169, %v528, %v540
  %v543 = vadd.f32 %v542, %v272
  %s544 = scalar_lea.vmem [#allocation3], 16
  %v545 = vld [vmem:[%s544] sm:$0xff]
  %v546 = vadd.f32 %v545, %v543
  %v547 = vxor.u32 %v546, 2147483648
  %v548 = vmul.f32 %v547, 1.442695
  %v549 = vpow.pop %v548
  %v550 = vadd.f32 %v549, 1.0
  %v551 = vrcp.pop %v550
  %v552 = vmul.f32 1.0, %v551
  %554 = vrot.lane.b32.xlu0 %v543, 64
  %v555 = vpop.permute.xlu0 %554
  %v557 = vmul.f32 %v552, %v555
  %559 = vrot.lane.b32.xlu0 %v557, 64
  %v560 = vpop.permute.xlu0 %559
  %v562 = vadd.f32 %v545, %v560
  %v563 = vtanh.pop %v562
  %v564 = vsub.f32 1.0, %v552
  %566 = vrot.lane.b32.xlu0 %v563, 96
  %v567 = vpop.permute.xlu0 %566
  %v569 = vmul.f32 %v564, %v567
  %v570 = vmul.f32 %v552, %v478
  %v571 = vadd.f32 %v569, %v570
  %vm572 = vcmp.gt.s32.totalorder %v33, 2
  %v573 = vsel %vm572, 1, 0
  %574 = vset.pattern.permute.xlu0 0
  %575 = vperm.xlu0 %574, %v573
  %v576 = vpop.permute.xlu0 %575
  %vm577 = vcmp.eq.s32.totalorder %v576, 1
  %v578 = vsel %vm577, %v571, %v478
  %v579 = vsel %vm577, %v571, 0.0
  %581 = vrot.lane.b32.xlu0 %v579, 96
  %v582 = vpop.permute.xlu0 %581
  %s584 = scalar_lea.vmem [#allocation2], 16
  %585 = vst.msk [vmem:[%s584] sm:$0xff] %vm82, %v582
  %v586 = vpack.c.bf16 %v578, %v578
  %588 = vrot.lane.b32.xlu0 %v586, 96
  %v589 = vpop.permute.xlu0 %588
  %v591 = vsel %vm82, %v589, 0
  %593 = vmatprep.subr.bf16.mxu0 %v286
  %594 = vmatpush1.bf16.msra.mxu0 %v285
  %595 = vmatprep.subr.bf16.mxu0 %v288
  %596 = vmatpush1.bf16.msra.mxu0 %v287
  %597 = vmatprep.subr.bf16.mxu0 0
  %598 = vmatpush1.bf16.msra.mxu0 0
  %599 = vmatprep.subr.bf16.mxu0 0
  %600 = vmatpush1.bf16.msra.mxu0 0
  %601 = vmatprep.subr.bf16.mxu0 0
  %602 = vmatpush1.bf16.msra.mxu0 0
  %603 = vmatprep.subr.bf16.mxu0 0
  %604 = vmatpush1.bf16.msra.mxu0 0
  %605 = vmatprep.subr.bf16.mxu0 0
  %606 = vmatpush1.bf16.msra.mxu0 0
  %607 = vmatprep.subr.bf16.mxu0 0
  %608 = vmatpush1.bf16.msra.mxu0 0
  %609 = vmatprep.subr.bf16.mxu0 0
  %610 = vmatpush1.bf16.msra.mxu0 0
  %611 = vmatprep.subr.bf16.mxu0 0
  %612 = vmatpush1.bf16.msra.mxu0 0
  %613 = vmatprep.subr.bf16.mxu0 0
  %614 = vmatpush1.bf16.msra.mxu0 0
  %615 = vmatprep.subr.bf16.mxu0 0
  %616 = vmatpush1.bf16.msra.mxu0 0
  %617 = vmatprep.subr.bf16.mxu0 0
  %618 = vmatpush1.bf16.msra.mxu0 0
  %619 = vmatprep.subr.bf16.mxu0 0
  %620 = vmatpush1.bf16.msra.mxu0 0
  %621 = vmatprep.subr.bf16.mxu0 0
  %622 = vmatpush1.bf16.msra.mxu0 0
  %623 = vmatprep.subr.bf16.mxu0 0
  %624 = vmatpush1.bf16.msra.mxu0 0
  %625 = vmatprep.mubr.bf16.mxu0 0
  %626 = vmatmul.mubr.bf16.gmra.mrb[0].mxu0 %v591
  %v627 = vpop.f32.mrb[0].mxu0
  %v628 = vadd.f32 0.0, %v627
  %v629 = vpop.f32.mrb[0].mxu0
  %v630 = vadd.f32 0.0, %v629
  %v631 = vpop.f32.mrb[0].mxu0
  %v632 = vpop.f32.mrb[0].mxu0
  %633 = vdwg.mxu0
  %636 = vrot.lane.b32.xlu0 %v628, 32
  %v637 = vpop.permute.xlu0 %636
  %638 = vrot.lane.b32.xlu0 %v630, 32
  %v639 = vpop.permute.xlu0 %638
  %v640 = vsel %vm82, %v637, %v639
  %v642 = vsel %vm169, %v628, %v640
  %v643 = vadd.f32 %v642, %v272
  %s644 = scalar_lea.vmem [#allocation3], 24
  %v645 = vld [vmem:[%s644] sm:$0xff]
  %v646 = vadd.f32 %v645, %v643
  %v647 = vxor.u32 %v646, 2147483648
  %v648 = vmul.f32 %v647, 1.442695
  %v649 = vpow.pop %v648
  %v650 = vadd.f32 %v649, 1.0
  %v651 = vrcp.pop %v650
  %v652 = vmul.f32 1.0, %v651
  %654 = vrot.lane.b32.xlu0 %v643, 64
  %v655 = vpop.permute.xlu0 %654
  %v657 = vmul.f32 %v652, %v655
  %659 = vrot.lane.b32.xlu0 %v657, 64
  %v660 = vpop.permute.xlu0 %659
  %v662 = vadd.f32 %v645, %v660
  %v663 = vtanh.pop %v662
  %v664 = vsub.f32 1.0, %v652
  %666 = vrot.lane.b32.xlu0 %v663, 96
  %v667 = vpop.permute.xlu0 %666
  %v669 = vmul.f32 %v664, %v667
  %v670 = vmul.f32 %v652, %v578
  %v671 = vadd.f32 %v669, %v670
  %vm672 = vcmp.gt.s32.totalorder %v33, 3
  %v673 = vsel %vm672, 1, 0
  %674 = vset.pattern.permute.xlu0 0
  %675 = vperm.xlu0 %674, %v673
  %v676 = vpop.permute.xlu0 %675
  %vm677 = vcmp.eq.s32.totalorder %v676, 1
  %v678 = vsel %vm677, %v671, %v578
  %v679 = vsel %vm677, %v671, 0.0
  %681 = vrot.lane.b32.xlu0 %v679, 96
  %v682 = vpop.permute.xlu0 %681
  %s684 = scalar_lea.vmem [#allocation2], 24
  %685 = vst.msk [vmem:[%s684] sm:$0xff] %vm82, %v682
  %v686 = vpack.c.bf16 %v678, %v678
  %688 = vrot.lane.b32.xlu0 %v686, 96
  %v689 = vpop.permute.xlu0 %688
  %v691 = vsel %vm82, %v689, 0
  %693 = vmatprep.subr.bf16.mxu0 %v286
  %694 = vmatpush1.bf16.msra.mxu0 %v285
  %695 = vmatprep.subr.bf16.mxu0 %v288
  %696 = vmatpush1.bf16.msra.mxu0 %v287
  %697 = vmatprep.subr.bf16.mxu0 0
  %698 = vmatpush1.bf16.msra.mxu0 0
  %699 = vmatprep.subr.bf16.mxu0 0
  %700 = vmatpush1.bf16.msra.mxu0 0
  %701 = vmatprep.subr.bf16.mxu0 0
  %702 = vmatpush1.bf16.msra.mxu0 0
  %703 = vmatprep.subr.bf16.mxu0 0
  %704 = vmatpush1.bf16.msra.mxu0 0
  %705 = vmatprep.subr.bf16.mxu0 0
  %706 = vmatpush1.bf16.msra.mxu0 0
  %707 = vmatprep.subr.bf16.mxu0 0
  %708 = vmatpush1.bf16.msra.mxu0 0
  %709 = vmatprep.subr.bf16.mxu0 0
  %710 = vmatpush1.bf16.msra.mxu0 0
  %711 = vmatprep.subr.bf16.mxu0 0
  %712 = vmatpush1.bf16.msra.mxu0 0
  %713 = vmatprep.subr.bf16.mxu0 0
  %714 = vmatpush1.bf16.msra.mxu0 0
  %715 = vmatprep.subr.bf16.mxu0 0
  %716 = vmatpush1.bf16.msra.mxu0 0
  %717 = vmatprep.subr.bf16.mxu0 0
  %718 = vmatpush1.bf16.msra.mxu0 0
  %719 = vmatprep.subr.bf16.mxu0 0
  %720 = vmatpush1.bf16.msra.mxu0 0
  %721 = vmatprep.subr.bf16.mxu0 0
  %722 = vmatpush1.bf16.msra.mxu0 0
  %723 = vmatprep.subr.bf16.mxu0 0
  %724 = vmatpush1.bf16.msra.mxu0 0
  %725 = vmatprep.mubr.bf16.mxu0 0
  %726 = vmatmul.mubr.bf16.gmra.mrb[0].mxu0 %v691
  %v727 = vpop.f32.mrb[0].mxu0
  %v728 = vadd.f32 0.0, %v727
  %v729 = vpop.f32.mrb[0].mxu0
  %v730 = vadd.f32 0.0, %v729
  %v731 = vpop.f32.mrb[0].mxu0
  %v732 = vpop.f32.mrb[0].mxu0
  %733 = vdwg.mxu0
  %736 = vrot.lane.b32.xlu0 %v728, 32
  %v737 = vpop.permute.xlu0 %736
  %738 = vrot.lane.b32.xlu0 %v730, 32
  %v739 = vpop.permute.xlu0 %738
  %v740 = vsel %vm82, %v737, %v739
  %v742 = vsel %vm169, %v728, %v740
  %v743 = vadd.f32 %v742, %v272
  %s744 = scalar_lea.vmem [#allocation3], 32
  %v745 = vld [vmem:[%s744] sm:$0xff]
  %v746 = vadd.f32 %v745, %v743
  %v747 = vxor.u32 %v746, 2147483648
  %v748 = vmul.f32 %v747, 1.442695
  %v749 = vpow.pop %v748
  %v750 = vadd.f32 %v749, 1.0
  %v751 = vrcp.pop %v750
  %v752 = vmul.f32 1.0, %v751
  %754 = vrot.lane.b32.xlu0 %v743, 64
  %v755 = vpop.permute.xlu0 %754
  %v757 = vmul.f32 %v752, %v755
  %759 = vrot.lane.b32.xlu0 %v757, 64
  %v760 = vpop.permute.xlu0 %759
  %v762 = vadd.f32 %v745, %v760
  %v763 = vtanh.pop %v762
  %v764 = vsub.f32 1.0, %v752
  %766 = vrot.lane.b32.xlu0 %v763, 96
  %v767 = vpop.permute.xlu0 %766
  %v769 = vmul.f32 %v764, %v767
  %v770 = vmul.f32 %v752, %v678
  %v771 = vadd.f32 %v769, %v770
  %vm772 = vcmp.gt.s32.totalorder %v33, 4
  %v773 = vsel %vm772, 1, 0
  %774 = vset.pattern.permute.xlu0 0
  %775 = vperm.xlu0 %774, %v773
  %v776 = vpop.permute.xlu0 %775
  %vm777 = vcmp.eq.s32.totalorder %v776, 1
  %v778 = vsel %vm777, %v771, %v678
  %v779 = vsel %vm777, %v771, 0.0
  %781 = vrot.lane.b32.xlu0 %v779, 96
  %v782 = vpop.permute.xlu0 %781
  %s784 = scalar_lea.vmem [#allocation2], 32
  %785 = vst.msk [vmem:[%s784] sm:$0xff] %vm82, %v782
  %v786 = vpack.c.bf16 %v778, %v778
  %788 = vrot.lane.b32.xlu0 %v786, 96
  %v789 = vpop.permute.xlu0 %788
  %v791 = vsel %vm82, %v789, 0
  %793 = vmatprep.subr.bf16.mxu0 %v286
  %794 = vmatpush1.bf16.msra.mxu0 %v285
  %795 = vmatprep.subr.bf16.mxu0 %v288
  %796 = vmatpush1.bf16.msra.mxu0 %v287
  %797 = vmatprep.subr.bf16.mxu0 0
  %798 = vmatpush1.bf16.msra.mxu0 0
  %799 = vmatprep.subr.bf16.mxu0 0
  %800 = vmatpush1.bf16.msra.mxu0 0
  %801 = vmatprep.subr.bf16.mxu0 0
  %802 = vmatpush1.bf16.msra.mxu0 0
  %803 = vmatprep.subr.bf16.mxu0 0
  %804 = vmatpush1.bf16.msra.mxu0 0
  %805 = vmatprep.subr.bf16.mxu0 0
  %806 = vmatpush1.bf16.msra.mxu0 0
  %807 = vmatprep.subr.bf16.mxu0 0
  %808 = vmatpush1.bf16.msra.mxu0 0
  %809 = vmatprep.subr.bf16.mxu0 0
  %810 = vmatpush1.bf16.msra.mxu0 0
  %811 = vmatprep.subr.bf16.mxu0 0
  %812 = vmatpush1.bf16.msra.mxu0 0
  %813 = vmatprep.subr.bf16.mxu0 0
  %814 = vmatpush1.bf16.msra.mxu0 0
  %815 = vmatprep.subr.bf16.mxu0 0
  %816 = vmatpush1.bf16.msra.mxu0 0
  %817 = vmatprep.subr.bf16.mxu0 0
  %818 = vmatpush1.bf16.msra.mxu0 0
  %819 = vmatprep.subr.bf16.mxu0 0
  %820 = vmatpush1.bf16.msra.mxu0 0
  %821 = vmatprep.subr.bf16.mxu0 0
  %822 = vmatpush1.bf16.msra.mxu0 0
  %823 = vmatprep.subr.bf16.mxu0 0
  %824 = vmatpush1.bf16.msra.mxu0 0
  %825 = vmatprep.mubr.bf16.mxu0 0
  %826 = vmatmul.mubr.bf16.gmra.mrb[0].mxu0 %v791
  %v827 = vpop.f32.mrb[0].mxu0
  %v828 = vadd.f32 0.0, %v827
  %v829 = vpop.f32.mrb[0].mxu0
  %v830 = vadd.f32 0.0, %v829
  %v831 = vpop.f32.mrb[0].mxu0
  %v832 = vpop.f32.mrb[0].mxu0
  %833 = vdwg.mxu0
  %836 = vrot.lane.b32.xlu0 %v828, 32
  %v837 = vpop.permute.xlu0 %836
  %838 = vrot.lane.b32.xlu0 %v830, 32
  %v839 = vpop.permute.xlu0 %838
  %v840 = vsel %vm82, %v837, %v839
  %v842 = vsel %vm169, %v828, %v840
  %v843 = vadd.f32 %v842, %v272
  %s844 = scalar_lea.vmem [#allocation3], 40
  %v845 = vld [vmem:[%s844] sm:$0xff]
  %v846 = vadd.f32 %v845, %v843
  %v847 = vxor.u32 %v846, 2147483648
  %v848 = vmul.f32 %v847, 1.442695
  %v849 = vpow.pop %v848
  %v850 = vadd.f32 %v849, 1.0
  %v851 = vrcp.pop %v850
  %v852 = vmul.f32 1.0, %v851
  %854 = vrot.lane.b32.xlu0 %v843, 64
  %v855 = vpop.permute.xlu0 %854
  %v857 = vmul.f32 %v852, %v855
  %859 = vrot.lane.b32.xlu0 %v857, 64
  %v860 = vpop.permute.xlu0 %859
  %v862 = vadd.f32 %v845, %v860
  %v863 = vtanh.pop %v862
  %v864 = vsub.f32 1.0, %v852
  %866 = vrot.lane.b32.xlu0 %v863, 96
  %v867 = vpop.permute.xlu0 %866
  %v869 = vmul.f32 %v864, %v867
  %v870 = vmul.f32 %v852, %v778
  %v871 = vadd.f32 %v869, %v870
  %vm872 = vcmp.gt.s32.totalorder %v33, 5
  %v873 = vsel %vm872, 1, 0
  %874 = vset.pattern.permute.xlu0 0
  %875 = vperm.xlu0 %874, %v873
  %v876 = vpop.permute.xlu0 %875
  %vm877 = vcmp.eq.s32.totalorder %v876, 1
  %v878 = vsel %vm877, %v871, %v778
  %v879 = vsel %vm877, %v871, 0.0
  %881 = vrot.lane.b32.xlu0 %v879, 96
  %v882 = vpop.permute.xlu0 %881
  %s884 = scalar_lea.vmem [#allocation2], 40
  %885 = vst.msk [vmem:[%s884] sm:$0xff] %vm82, %v882
  %v886 = vpack.c.bf16 %v878, %v878
  %888 = vrot.lane.b32.xlu0 %v886, 96
  %v889 = vpop.permute.xlu0 %888
  %v891 = vsel %vm82, %v889, 0
  %893 = vmatprep.subr.bf16.mxu0 %v286
  %894 = vmatpush1.bf16.msra.mxu0 %v285
  %895 = vmatprep.subr.bf16.mxu0 %v288
  %896 = vmatpush1.bf16.msra.mxu0 %v287
  %897 = vmatprep.subr.bf16.mxu0 0
  %898 = vmatpush1.bf16.msra.mxu0 0
  %899 = vmatprep.subr.bf16.mxu0 0
  %900 = vmatpush1.bf16.msra.mxu0 0
  %901 = vmatprep.subr.bf16.mxu0 0
  %902 = vmatpush1.bf16.msra.mxu0 0
  %903 = vmatprep.subr.bf16.mxu0 0
  %904 = vmatpush1.bf16.msra.mxu0 0
  %905 = vmatprep.subr.bf16.mxu0 0
  %906 = vmatpush1.bf16.msra.mxu0 0
  %907 = vmatprep.subr.bf16.mxu0 0
  %908 = vmatpush1.bf16.msra.mxu0 0
  %909 = vmatprep.subr.bf16.mxu0 0
  %910 = vmatpush1.bf16.msra.mxu0 0
  %911 = vmatprep.subr.bf16.mxu0 0
  %912 = vmatpush1.bf16.msra.mxu0 0
  %913 = vmatprep.subr.bf16.mxu0 0
  %914 = vmatpush1.bf16.msra.mxu0 0
  %915 = vmatprep.subr.bf16.mxu0 0
  %916 = vmatpush1.bf16.msra.mxu0 0
  %917 = vmatprep.subr.bf16.mxu0 0
  %918 = vmatpush1.bf16.msra.mxu0 0
  %919 = vmatprep.subr.bf16.mxu0 0
  %920 = vmatpush1.bf16.msra.mxu0 0
  %921 = vmatprep.subr.bf16.mxu0 0
  %922 = vmatpush1.bf16.msra.mxu0 0
  %923 = vmatprep.subr.bf16.mxu0 0
  %924 = vmatpush1.bf16.msra.mxu0 0
  %925 = vmatprep.mubr.bf16.mxu0 0
  %926 = vmatmul.mubr.bf16.gmra.mrb[0].mxu0 %v891
  %v927 = vpop.f32.mrb[0].mxu0
  %v928 = vadd.f32 0.0, %v927
  %v929 = vpop.f32.mrb[0].mxu0
  %v930 = vadd.f32 0.0, %v929
  %v931 = vpop.f32.mrb[0].mxu0
  %v932 = vpop.f32.mrb[0].mxu0
  %933 = vdwg.mxu0
  %936 = vrot.lane.b32.xlu0 %v928, 32
  %v937 = vpop.permute.xlu0 %936
  %938 = vrot.lane.b32.xlu0 %v930, 32
  %v939 = vpop.permute.xlu0 %938
  %v940 = vsel %vm82, %v937, %v939
  %v942 = vsel %vm169, %v928, %v940
  %v943 = vadd.f32 %v942, %v272
  %s944 = scalar_lea.vmem [#allocation3], 48
  %v945 = vld [vmem:[%s944] sm:$0xff]
  %v946 = vadd.f32 %v945, %v943
  %v947 = vxor.u32 %v946, 2147483648
  %v948 = vmul.f32 %v947, 1.442695
  %v949 = vpow.pop %v948
  %v950 = vadd.f32 %v949, 1.0
  %v951 = vrcp.pop %v950
  %v952 = vmul.f32 1.0, %v951
  %954 = vrot.lane.b32.xlu0 %v943, 64
  %v955 = vpop.permute.xlu0 %954
  %v957 = vmul.f32 %v952, %v955
  %959 = vrot.lane.b32.xlu0 %v957, 64
  %v960 = vpop.permute.xlu0 %959
  %v962 = vadd.f32 %v945, %v960
  %v963 = vtanh.pop %v962
  %v964 = vsub.f32 1.0, %v952
  %966 = vrot.lane.b32.xlu0 %v963, 96
  %v967 = vpop.permute.xlu0 %966
  %v969 = vmul.f32 %v964, %v967
  %v970 = vmul.f32 %v952, %v878
  %v971 = vadd.f32 %v969, %v970
  %vm972 = vcmp.gt.s32.totalorder %v33, 6
  %v973 = vsel %vm972, 1, 0
  %974 = vset.pattern.permute.xlu0 0
  %975 = vperm.xlu0 %974, %v973
  %v976 = vpop.permute.xlu0 %975
  %vm977 = vcmp.eq.s32.totalorder %v976, 1
  %v978 = vsel %vm977, %v971, %v878
  %v979 = vsel %vm977, %v971, 0.0
  %981 = vrot.lane.b32.xlu0 %v979, 96
  %v982 = vpop.permute.xlu0 %981
  %s984 = scalar_lea.vmem [#allocation2], 48
  %985 = vst.msk [vmem:[%s984] sm:$0xff] %vm82, %v982
  %v986 = vpack.c.bf16 %v978, %v978
  %988 = vrot.lane.b32.xlu0 %v986, 96
  %v989 = vpop.permute.xlu0 %988
  %v991 = vsel %vm82, %v989, 0
  %993 = vmatprep.subr.bf16.mxu0 %v286
  %994 = vmatpush1.bf16.msra.mxu0 %v285
  %995 = vmatprep.subr.bf16.mxu0 %v288
  %996 = vmatpush1.bf16.msra.mxu0 %v287
  %997 = vmatprep.subr.bf16.mxu0 0
  %998 = vmatpush1.bf16.msra.mxu0 0
  %999 = vmatprep.subr.bf16.mxu0 0
  %1000 = vmatpush1.bf16.msra.mxu0 0
  %1001 = vmatprep.subr.bf16.mxu0 0
  %1002 = vmatpush1.bf16.msra.mxu0 0
  %1003 = vmatprep.subr.bf16.mxu0 0
  %1004 = vmatpush1.bf16.msra.mxu0 0
  %1005 = vmatprep.subr.bf16.mxu0 0
  %1006 = vmatpush1.bf16.msra.mxu0 0
  %1007 = vmatprep.subr.bf16.mxu0 0
  %1008 = vmatpush1.bf16.msra.mxu0 0
  %1009 = vmatprep.subr.bf16.mxu0 0
  %1010 = vmatpush1.bf16.msra.mxu0 0
  %1011 = vmatprep.subr.bf16.mxu0 0
  %1012 = vmatpush1.bf16.msra.mxu0 0
  %1013 = vmatprep.subr.bf16.mxu0 0
  %1014 = vmatpush1.bf16.msra.mxu0 0
  %1015 = vmatprep.subr.bf16.mxu0 0
  %1016 = vmatpush1.bf16.msra.mxu0 0
  %1017 = vmatprep.subr.bf16.mxu0 0
  %1018 = vmatpush1.bf16.msra.mxu0 0
  %1019 = vmatprep.subr.bf16.mxu0 0
  %1020 = vmatpush1.bf16.msra.mxu0 0
  %1021 = vmatprep.subr.bf16.mxu0 0
  %1022 = vmatpush1.bf16.msra.mxu0 0
  %1023 = vmatprep.subr.bf16.mxu0 0
  %1024 = vmatpush1.bf16.msra.mxu0 0
  %1025 = vmatprep.mubr.bf16.mxu0 0
  %1026 = vmatmul.mubr.bf16.gmra.mrb[0].mxu0 %v991
  %v1027 = vpop.f32.mrb[0].mxu0
  %v1028 = vadd.f32 0.0, %v1027
  %v1029 = vpop.f32.mrb[0].mxu0
  %v1030 = vadd.f32 0.0, %v1029
  %v1031 = vpop.f32.mrb[0].mxu0
  %v1032 = vpop.f32.mrb[0].mxu0
  %1033 = vdwg.mxu0
  %1036 = vrot.lane.b32.xlu0 %v1028, 32
  %v1037 = vpop.permute.xlu0 %1036
  %1038 = vrot.lane.b32.xlu0 %v1030, 32
  %v1039 = vpop.permute.xlu0 %1038
  %v1040 = vsel %vm82, %v1037, %v1039
  %v1042 = vsel %vm169, %v1028, %v1040
  %v1043 = vadd.f32 %v1042, %v272
  %s1044 = scalar_lea.vmem [#allocation3], 56
  %v1045 = vld [vmem:[%s1044] sm:$0xff]
  %v1046 = vadd.f32 %v1045, %v1043
  %v1047 = vxor.u32 %v1046, 2147483648
  %v1048 = vmul.f32 %v1047, 1.442695
  %v1049 = vpow.pop %v1048
  %v1050 = vadd.f32 %v1049, 1.0
  %v1051 = vrcp.pop %v1050
  %v1052 = vmul.f32 1.0, %v1051
  %1054 = vrot.lane.b32.xlu0 %v1043, 64
  %v1055 = vpop.permute.xlu0 %1054
  %v1057 = vmul.f32 %v1052, %v1055
  %1059 = vrot.lane.b32.xlu0 %v1057, 64
  %v1060 = vpop.permute.xlu0 %1059
  %v1062 = vadd.f32 %v1045, %v1060
  %v1063 = vtanh.pop %v1062
  %v1064 = vsub.f32 1.0, %v1052
  %1066 = vrot.lane.b32.xlu0 %v1063, 96
  %v1067 = vpop.permute.xlu0 %1066
  %v1069 = vmul.f32 %v1064, %v1067
  %v1070 = vmul.f32 %v1052, %v978
  %v1071 = vadd.f32 %v1069, %v1070
  %vm1072 = vcmp.gt.s32.totalorder %v33, 7
  %v1073 = vsel %vm1072, 1, 0
  %1074 = vset.pattern.permute.xlu0 0
  %1075 = vperm.xlu0 %1074, %v1073
  %v1076 = vpop.permute.xlu0 %1075
  %vm1077 = vcmp.eq.s32.totalorder %v1076, 1
  %v1078 = vsel %vm1077, %v1071, 0.0
  %1080 = vrot.lane.b32.xlu0 %v1078, 96
  %v1081 = vpop.permute.xlu0 %1080
  %s1083 = scalar_lea.vmem [#allocation2], 56
  %1084 = vst.msk [vmem:[%s1083] sm:$0xff] %vm82, %v1081
  %v1085 = vld [vmem:[#allocation2] sm:$0xff]
  %v1086 = vld [vmem:[#allocation2 + $0x8] sm:$0xff]
  %v1087 = vld [vmem:[#allocation2 + $0x10] sm:$0xff]
  %v1088 = vld [vmem:[#allocation2 + $0x18] sm:$0xff]
  %v1089 = vld [vmem:[#allocation2 + $0x20] sm:$0xff]
  %v1090 = vld [vmem:[#allocation2 + $0x28] sm:$0xff]
  %v1091 = vld [vmem:[#allocation2 + $0x30] sm:$0xff]
  %v1092 = vld [vmem:[#allocation2 + $0x38] sm:$0xff]
  %v1093 = vpack.c.bf16 %v1086, %v1085
  %v1094 = vpack.c.bf16 %v1088, %v1087
  %v1095 = vpack.c.bf16 %v1090, %v1089
  %v1096 = vpack.c.bf16 %v1092, %v1091
  %s1097 = scalar_lea.vmem %s2, 32
  %v1098 = vld [vmem:[%s1097] sm:$0xff]
  %v1099 = vld [vmem:[%s1097 + $0x8] sm:$0xff]
  %v1100 = vld [vmem:[%s1097 + $0x10] sm:$0xff]
  %v1101 = vld [vmem:[%s1097 + $0x18] sm:$0xff]
  %s1102 = scalar_lea.vmem %s4, 2
  %v1103 = vld [vmem:[%s1102] sm:$0x3]
  %v1105 = vlaneseq
  %v1106 = vshrl.u32 %v1105, 7
  %v1107 = vsub.s32 0, %v1106
  %v1108 = vrot.slane %v1103, %v1107
  %v1109 = vlaneseq
  %v1110 = vshrl.u32 %v1109, 7
  %v1111 = vsub.s32 1, %v1110
  %v1112 = vrot.slane %v1103, %v1111
  %v1119 = vunpack.c.l.b16 %v1098
  %v1120 = vunpack.c.h.b16 %v1098
  %v1121 = vunpack.c.l.b16 %v1099
  %v1122 = vunpack.c.h.b16 %v1099
  %v1123 = vunpack.c.l.b16 %v1100
  %v1124 = vunpack.c.h.b16 %v1100
  %v1125 = vunpack.c.l.b16 %v1101
  %v1126 = vunpack.c.h.b16 %v1101
  %v1127 = vpack.c.b16 %v1121, %v1119
  %v1128 = vpack.c.b16 %v1122, %v1120
  %v1129 = vpack.c.b16 %v1125, %v1123
  %v1130 = vpack.c.b16 %v1126, %v1124
  %v1136 = vsel %vm82, %v1093, 0
  %v1139 = vsel %vm82, %v1094, 0
  %v1142 = vsel %vm82, %v1095, 0
  %v1145 = vsel %vm82, %v1096, 0
  %1147 = vmatprep.subr.bf16.mxu0 %v1128
  %1148 = vmatpush1.bf16.msra.mxu0 %v1127
  %1149 = vmatprep.subr.bf16.mxu0 %v1130
  %1150 = vmatpush1.bf16.msra.mxu0 %v1129
  %1151 = vmatprep.subr.bf16.mxu0 0
  %1152 = vmatpush1.bf16.msra.mxu0 0
  %1153 = vmatprep.subr.bf16.mxu0 0
  %1154 = vmatpush1.bf16.msra.mxu0 0
  %1155 = vmatprep.subr.bf16.mxu0 0
  %1156 = vmatpush1.bf16.msra.mxu0 0
  %1157 = vmatprep.subr.bf16.mxu0 0
  %1158 = vmatpush1.bf16.msra.mxu0 0
  %1159 = vmatprep.subr.bf16.mxu0 0
  %1160 = vmatpush1.bf16.msra.mxu0 0
  %1161 = vmatprep.subr.bf16.mxu0 0
  %1162 = vmatpush1.bf16.msra.mxu0 0
  %1163 = vmatprep.subr.bf16.mxu0 0
  %1164 = vmatpush1.bf16.msra.mxu0 0
  %1165 = vmatprep.subr.bf16.mxu0 0
  %1166 = vmatpush1.bf16.msra.mxu0 0
  %1167 = vmatprep.subr.bf16.mxu0 0
  %1168 = vmatpush1.bf16.msra.mxu0 0
  %1169 = vmatprep.subr.bf16.mxu0 0
  %1170 = vmatpush1.bf16.msra.mxu0 0
  %1171 = vmatprep.subr.bf16.mxu0 0
  %1172 = vmatpush1.bf16.msra.mxu0 0
  %1173 = vmatprep.subr.bf16.mxu0 0
  %1174 = vmatpush1.bf16.msra.mxu0 0
  %1175 = vmatprep.subr.bf16.mxu0 0
  %1176 = vmatpush1.bf16.msra.mxu0 0
  %1177 = vmatprep.subr.bf16.mxu0 0
  %1178 = vmatpush1.bf16.msra.mxu0 0
  %1179 = vmatprep.mubr.bf16.mxu0 0
  %1180 = vmatmul.mubr.bf16.gmra.mrb[0].mxu0 %v1136
  %v1181 = vpop.f32.mrb[0].mxu0
  %v1182 = vadd.f32 %v1108, %v1181
  %v1183 = vpop.f32.mrb[0].mxu0
  %v1184 = vadd.f32 %v1112, %v1183
  %v1185 = vpop.f32.mrb[0].mxu0
  %v1186 = vadd.f32 %v1108, %v1185
  %v1187 = vpop.f32.mrb[0].mxu0
  %v1188 = vadd.f32 %v1112, %v1187
  %1189 = vmatprep.mubr.bf16.mxu0 0
  %1190 = vmatmul.mubr.bf16.gmra.mrb[0].mxu0 %v1139
  %v1191 = vpop.f32.mrb[0].mxu0
  %v1192 = vadd.f32 %v1108, %v1191
  %v1193 = vpop.f32.mrb[0].mxu0
  %v1194 = vadd.f32 %v1112, %v1193
  %v1195 = vpop.f32.mrb[0].mxu0
  %v1196 = vadd.f32 %v1108, %v1195
  %v1197 = vpop.f32.mrb[0].mxu0
  %v1198 = vadd.f32 %v1112, %v1197
  %1199 = vmatprep.mubr.bf16.mxu0 0
  %1200 = vmatmul.mubr.bf16.gmra.mrb[0].mxu0 %v1142
  %v1201 = vpop.f32.mrb[0].mxu0
  %v1202 = vadd.f32 %v1108, %v1201
  %v1203 = vpop.f32.mrb[0].mxu0
  %v1204 = vadd.f32 %v1112, %v1203
  %v1205 = vpop.f32.mrb[0].mxu0
  %v1206 = vadd.f32 %v1108, %v1205
  %v1207 = vpop.f32.mrb[0].mxu0
  %v1208 = vadd.f32 %v1112, %v1207
  %1209 = vmatprep.mubr.bf16.mxu0 0
  %1210 = vmatmul.mubr.bf16.gmra.mrb[0].mxu0 %v1145
  %v1211 = vpop.f32.mrb[0].mxu0
  %v1212 = vadd.f32 %v1108, %v1211
  %v1213 = vpop.f32.mrb[0].mxu0
  %v1214 = vadd.f32 %v1112, %v1213
  %v1215 = vpop.f32.mrb[0].mxu0
  %v1216 = vadd.f32 %v1108, %v1215
  %v1217 = vpop.f32.mrb[0].mxu0
  %v1218 = vadd.f32 %v1112, %v1217
  %1219 = vdwg.mxu0
  %1236 = vrot.lane.b32.xlu0 %v1182, 32
  %v1237 = vpop.permute.xlu0 %1236
  %1238 = vrot.lane.b32.xlu0 %v1184, 32
  %v1239 = vpop.permute.xlu0 %1238
  %1240 = vrot.lane.b32.xlu0 %v1186, 32
  %v1241 = vpop.permute.xlu0 %1240
  %1242 = vrot.lane.b32.xlu0 %v1188, 32
  %v1243 = vpop.permute.xlu0 %1242
  %1244 = vrot.lane.b32.xlu0 %v1192, 32
  %v1245 = vpop.permute.xlu0 %1244
  %1246 = vrot.lane.b32.xlu0 %v1194, 32
  %v1247 = vpop.permute.xlu0 %1246
  %1248 = vrot.lane.b32.xlu0 %v1196, 32
  %v1249 = vpop.permute.xlu0 %1248
  %1250 = vrot.lane.b32.xlu0 %v1198, 32
  %v1251 = vpop.permute.xlu0 %1250
  %1252 = vrot.lane.b32.xlu0 %v1202, 32
  %v1253 = vpop.permute.xlu0 %1252
  %1254 = vrot.lane.b32.xlu0 %v1204, 32
  %v1255 = vpop.permute.xlu0 %1254
  %1256 = vrot.lane.b32.xlu0 %v1206, 32
  %v1257 = vpop.permute.xlu0 %1256
  %1258 = vrot.lane.b32.xlu0 %v1208, 32
  %v1259 = vpop.permute.xlu0 %1258
  %1260 = vrot.lane.b32.xlu0 %v1212, 32
  %v1261 = vpop.permute.xlu0 %1260
  %1262 = vrot.lane.b32.xlu0 %v1214, 32
  %v1263 = vpop.permute.xlu0 %1262
  %1264 = vrot.lane.b32.xlu0 %v1216, 32
  %v1265 = vpop.permute.xlu0 %1264
  %1266 = vrot.lane.b32.xlu0 %v1218, 32
  %v1267 = vpop.permute.xlu0 %1266
  %v1268 = vsel %vm82, %v1237, %v1239
  %v1269 = vsel %vm82, %v1241, %v1243
  %v1270 = vsel %vm82, %v1245, %v1247
  %v1271 = vsel %vm82, %v1249, %v1251
  %v1272 = vsel %vm82, %v1253, %v1255
  %v1273 = vsel %vm82, %v1257, %v1259
  %v1274 = vsel %vm82, %v1261, %v1263
  %v1275 = vsel %vm82, %v1265, %v1267
  %v1284 = vsel %vm169, %v1182, %v1268
  %v1285 = vsel %vm169, %v1186, %v1269
  %v1286 = vsel %vm169, %v1192, %v1270
  %v1287 = vsel %vm169, %v1196, %v1271
  %v1288 = vsel %vm169, %v1202, %v1272
  %v1289 = vsel %vm169, %v1206, %v1273
  %v1290 = vsel %vm169, %v1212, %v1274
  %v1291 = vsel %vm169, %v1216, %v1275
  %1292 = vst.msk [vmem:[#allocation3] sm:$0xff] %vm242, %v1284
  %1293 = vst.msk [vmem:[#allocation3 + $0x8] sm:$0xff] %vm242, %v1285
  %1294 = vst.msk [vmem:[#allocation3 + $0x10] sm:$0xff] %vm242, %v1286
  %1295 = vst.msk [vmem:[#allocation3 + $0x18] sm:$0xff] %vm242, %v1287
  %1296 = vst.msk [vmem:[#allocation3 + $0x20] sm:$0xff] %vm242, %v1288
  %1297 = vst.msk [vmem:[#allocation3 + $0x28] sm:$0xff] %vm242, %v1289
  %1298 = vst.msk [vmem:[#allocation3 + $0x30] sm:$0xff] %vm242, %v1290
  %1299 = vst.msk [vmem:[#allocation3 + $0x38] sm:$0xff] %vm242, %v1291
  %s1300 = scalar_lea.vmem %s3, 32
  %v1301 = vld [vmem:[%s1300] sm:$0xff]
  %v1302 = vld [vmem:[%s1300 + $0x8] sm:$0xff]
  %v1303 = vld [vmem:[%s1300 + $0x10] sm:$0xff]
  %v1304 = vld [vmem:[%s1300 + $0x18] sm:$0xff]
  %s1305 = scalar_lea.vmem %s5, 2
  %v1306 = vld [vmem:[%s1305] sm:$0x3]
  %v1308 = vlaneseq
  %v1309 = vshrl.u32 %v1308, 7
  %v1310 = vsub.s32 0, %v1309
  %v1311 = vrot.slane %v1306, %v1310
  %v1313 = vlaneseq
  %v1314 = vshrl.u32 %v1313, 7
  %v1315 = vsub.s32 1, %v1314
  %v1316 = vrot.slane %v1306, %v1315
  %1317 = vrot.lane.b32.xlu0 %v1311, 32
  %v1318 = vpop.permute.xlu0 %1317
  %1319 = vrot.lane.b32.xlu0 %v1316, 32
  %v1320 = vpop.permute.xlu0 %1319
  %v1321 = vsel %vm82, %v1318, %v1320
  %v1323 = vsel %vm169, %v1311, %v1321
  %v1328 = vunpack.c.l.b16 %v1301
  %v1329 = vunpack.c.h.b16 %v1301
  %v1330 = vunpack.c.l.b16 %v1302
  %v1331 = vunpack.c.h.b16 %v1302
  %v1332 = vunpack.c.l.b16 %v1303
  %v1333 = vunpack.c.h.b16 %v1303
  %v1334 = vunpack.c.l.b16 %v1304
  %v1335 = vunpack.c.h.b16 %v1304
  %v1336 = vpack.c.b16 %v1330, %v1328
  %v1337 = vpack.c.b16 %v1331, %v1329
  %v1338 = vpack.c.b16 %v1334, %v1332
  %v1339 = vpack.c.b16 %v1335, %v1333
  %1344 = vmatprep.subr.bf16.mxu0 %v1337
  %1345 = vmatpush1.bf16.msra.mxu0 %v1336
  %1346 = vmatprep.subr.bf16.mxu0 %v1339
  %1347 = vmatpush1.bf16.msra.mxu0 %v1338
  %1348 = vmatprep.subr.bf16.mxu0 0
  %1349 = vmatpush1.bf16.msra.mxu0 0
  %1350 = vmatprep.subr.bf16.mxu0 0
  %1351 = vmatpush1.bf16.msra.mxu0 0
  %1352 = vmatprep.subr.bf16.mxu0 0
  %1353 = vmatpush1.bf16.msra.mxu0 0
  %1354 = vmatprep.subr.bf16.mxu0 0
  %1355 = vmatpush1.bf16.msra.mxu0 0
  %1356 = vmatprep.subr.bf16.mxu0 0
  %1357 = vmatpush1.bf16.msra.mxu0 0
  %1358 = vmatprep.subr.bf16.mxu0 0
  %1359 = vmatpush1.bf16.msra.mxu0 0
  %1360 = vmatprep.subr.bf16.mxu0 0
  %1361 = vmatpush1.bf16.msra.mxu0 0
  %1362 = vmatprep.subr.bf16.mxu0 0
  %1363 = vmatpush1.bf16.msra.mxu0 0
  %1364 = vmatprep.subr.bf16.mxu0 0
  %1365 = vmatpush1.bf16.msra.mxu0 0
  %1366 = vmatprep.subr.bf16.mxu0 0
  %1367 = vmatpush1.bf16.msra.mxu0 0
  %1368 = vmatprep.subr.bf16.mxu0 0
  %1369 = vmatpush1.bf16.msra.mxu0 0
  %1370 = vmatprep.subr.bf16.mxu0 0
  %1371 = vmatpush1.bf16.msra.mxu0 0
  %1372 = vmatprep.subr.bf16.mxu0 0
  %1373 = vmatpush1.bf16.msra.mxu0 0
  %1374 = vmatprep.subr.bf16.mxu0 0
  %1375 = vmatpush1.bf16.msra.mxu0 0
  %1376 = vmatprep.mubr.bf16.mxu0 0
  %1377 = vmatmul.mubr.bf16.gmra.mrb[0].mxu0 %v294
  %v1378 = vpop.f32.mrb[0].mxu0
  %v1379 = vadd.f32 0.0, %v1378
  %v1380 = vpop.f32.mrb[0].mxu0
  %v1381 = vadd.f32 0.0, %v1380
  %v1382 = vpop.f32.mrb[0].mxu0
  %v1383 = vpop.f32.mrb[0].mxu0
  %1384 = vdwg.mxu0
  %1387 = vrot.lane.b32.xlu0 %v1379, 32
  %v1388 = vpop.permute.xlu0 %1387
  %1389 = vrot.lane.b32.xlu0 %v1381, 32
  %v1390 = vpop.permute.xlu0 %1389
  %v1391 = vsel %vm82, %v1388, %v1390
  %v1393 = vsel %vm169, %v1379, %v1391
  %v1394 = vadd.f32 %v1393, %v1323
  %v1395 = vld [vmem:[#allocation3] sm:$0xff]
  %v1396 = vadd.f32 %v1395, %v1394
  %v1397 = vxor.u32 %v1396, 2147483648
  %v1398 = vmul.f32 %v1397, 1.442695
  %v1399 = vpow.pop %v1398
  %v1400 = vadd.f32 %v1399, 1.0
  %v1401 = vrcp.pop %v1400
  %v1402 = vmul.f32 1.0, %v1401
  %1404 = vrot.lane.b32.xlu0 %v1394, 64
  %v1405 = vpop.permute.xlu0 %1404
  %v1407 = vmul.f32 %v1402, %v1405
  %1409 = vrot.lane.b32.xlu0 %v1407, 64
  %v1410 = vpop.permute.xlu0 %1409
  %v1412 = vadd.f32 %v1395, %v1410
  %v1413 = vtanh.pop %v1412
  %v1414 = vsub.f32 1.0, %v1402
  %1416 = vrot.lane.b32.xlu0 %v1413, 96
  %v1417 = vpop.permute.xlu0 %1416
  %v1419 = vmul.f32 %v1414, %v1417
  %v1420 = vmul.f32 %v1402, 0.0
  %v1421 = vadd.f32 %v1419, %v1420
  %v1422 = vsel %vm379, %v1421, 0.0
  %1424 = vrot.lane.b32.xlu0 %v1422, 96
  %v1425 = vpop.permute.xlu0 %1424
  %s1427 = scalar_lea.vmem [#allocation2], 64
  %1428 = vst.msk [vmem:[%s1427] sm:$0xff] %vm82, %v1425
  %v1429 = vpack.c.bf16 %v1422, %v1422
  %1431 = vrot.lane.b32.xlu0 %v1429, 96
  %v1432 = vpop.permute.xlu0 %1431
  %v1434 = vsel %vm82, %v1432, 0
  %1436 = vmatprep.subr.bf16.mxu0 %v1337
  %1437 = vmatpush1.bf16.msra.mxu0 %v1336
  %1438 = vmatprep.subr.bf16.mxu0 %v1339
  %1439 = vmatpush1.bf16.msra.mxu0 %v1338
  %1440 = vmatprep.subr.bf16.mxu0 0
  %1441 = vmatpush1.bf16.msra.mxu0 0
  %1442 = vmatprep.subr.bf16.mxu0 0
  %1443 = vmatpush1.bf16.msra.mxu0 0
  %1444 = vmatprep.subr.bf16.mxu0 0
  %1445 = vmatpush1.bf16.msra.mxu0 0
  %1446 = vmatprep.subr.bf16.mxu0 0
  %1447 = vmatpush1.bf16.msra.mxu0 0
  %1448 = vmatprep.subr.bf16.mxu0 0
  %1449 = vmatpush1.bf16.msra.mxu0 0
  %1450 = vmatprep.subr.bf16.mxu0 0
  %1451 = vmatpush1.bf16.msra.mxu0 0
  %1452 = vmatprep.subr.bf16.mxu0 0
  %1453 = vmatpush1.bf16.msra.mxu0 0
  %1454 = vmatprep.subr.bf16.mxu0 0
  %1455 = vmatpush1.bf16.msra.mxu0 0
  %1456 = vmatprep.subr.bf16.mxu0 0
  %1457 = vmatpush1.bf16.msra.mxu0 0
  %1458 = vmatprep.subr.bf16.mxu0 0
  %1459 = vmatpush1.bf16.msra.mxu0 0
  %1460 = vmatprep.subr.bf16.mxu0 0
  %1461 = vmatpush1.bf16.msra.mxu0 0
  %1462 = vmatprep.subr.bf16.mxu0 0
  %1463 = vmatpush1.bf16.msra.mxu0 0
  %1464 = vmatprep.subr.bf16.mxu0 0
  %1465 = vmatpush1.bf16.msra.mxu0 0
  %1466 = vmatprep.subr.bf16.mxu0 0
  %1467 = vmatpush1.bf16.msra.mxu0 0
  %1468 = vmatprep.mubr.bf16.mxu0 0
  %1469 = vmatmul.mubr.bf16.gmra.mrb[0].mxu0 %v1434
  %v1470 = vpop.f32.mrb[0].mxu0
  %v1471 = vadd.f32 0.0, %v1470
  %v1472 = vpop.f32.mrb[0].mxu0
  %v1473 = vadd.f32 0.0, %v1472
  %v1474 = vpop.f32.mrb[0].mxu0
  %v1475 = vpop.f32.mrb[0].mxu0
  %1476 = vdwg.mxu0
  %1479 = vrot.lane.b32.xlu0 %v1471, 32
  %v1480 = vpop.permute.xlu0 %1479
  %1481 = vrot.lane.b32.xlu0 %v1473, 32
  %v1482 = vpop.permute.xlu0 %1481
  %v1483 = vsel %vm82, %v1480, %v1482
  %v1485 = vsel %vm169, %v1471, %v1483
  %v1486 = vadd.f32 %v1485, %v1323
  %v1487 = vld [vmem:[%s444] sm:$0xff]
  %v1488 = vadd.f32 %v1487, %v1486
  %v1489 = vxor.u32 %v1488, 2147483648
  %v1490 = vmul.f32 %v1489, 1.442695
  %v1491 = vpow.pop %v1490
  %v1492 = vadd.f32 %v1491, 1.0
  %v1493 = vrcp.pop %v1492
  %v1494 = vmul.f32 1.0, %v1493
  %1496 = vrot.lane.b32.xlu0 %v1486, 64
  %v1497 = vpop.permute.xlu0 %1496
  %v1499 = vmul.f32 %v1494, %v1497
  %1501 = vrot.lane.b32.xlu0 %v1499, 64
  %v1502 = vpop.permute.xlu0 %1501
  %v1504 = vadd.f32 %v1487, %v1502
  %v1505 = vtanh.pop %v1504
  %v1506 = vsub.f32 1.0, %v1494
  %1508 = vrot.lane.b32.xlu0 %v1505, 96
  %v1509 = vpop.permute.xlu0 %1508
  %v1511 = vmul.f32 %v1506, %v1509
  %v1512 = vmul.f32 %v1494, %v1422
  %v1513 = vadd.f32 %v1511, %v1512
  %v1514 = vsel %vm477, %v1513, %v1422
  %v1515 = vsel %vm477, %v1513, 0.0
  %1517 = vrot.lane.b32.xlu0 %v1515, 96
  %v1518 = vpop.permute.xlu0 %1517
  %s1520 = scalar_lea.vmem [#allocation2], 72
  %1521 = vst.msk [vmem:[%s1520] sm:$0xff] %vm82, %v1518
  %v1522 = vpack.c.bf16 %v1514, %v1514
  %1524 = vrot.lane.b32.xlu0 %v1522, 96
  %v1525 = vpop.permute.xlu0 %1524
  %v1527 = vsel %vm82, %v1525, 0
  %1529 = vmatprep.subr.bf16.mxu0 %v1337
  %1530 = vmatpush1.bf16.msra.mxu0 %v1336
  %1531 = vmatprep.subr.bf16.mxu0 %v1339
  %1532 = vmatpush1.bf16.msra.mxu0 %v1338
  %1533 = vmatprep.subr.bf16.mxu0 0
  %1534 = vmatpush1.bf16.msra.mxu0 0
  %1535 = vmatprep.subr.bf16.mxu0 0
  %1536 = vmatpush1.bf16.msra.mxu0 0
  %1537 = vmatprep.subr.bf16.mxu0 0
  %1538 = vmatpush1.bf16.msra.mxu0 0
  %1539 = vmatprep.subr.bf16.mxu0 0
  %1540 = vmatpush1.bf16.msra.mxu0 0
  %1541 = vmatprep.subr.bf16.mxu0 0
  %1542 = vmatpush1.bf16.msra.mxu0 0
  %1543 = vmatprep.subr.bf16.mxu0 0
  %1544 = vmatpush1.bf16.msra.mxu0 0
  %1545 = vmatprep.subr.bf16.mxu0 0
  %1546 = vmatpush1.bf16.msra.mxu0 0
  %1547 = vmatprep.subr.bf16.mxu0 0
  %1548 = vmatpush1.bf16.msra.mxu0 0
  %1549 = vmatprep.subr.bf16.mxu0 0
  %1550 = vmatpush1.bf16.msra.mxu0 0
  %1551 = vmatprep.subr.bf16.mxu0 0
  %1552 = vmatpush1.bf16.msra.mxu0 0
  %1553 = vmatprep.subr.bf16.mxu0 0
  %1554 = vmatpush1.bf16.msra.mxu0 0
  %1555 = vmatprep.subr.bf16.mxu0 0
  %1556 = vmatpush1.bf16.msra.mxu0 0
  %1557 = vmatprep.subr.bf16.mxu0 0
  %1558 = vmatpush1.bf16.msra.mxu0 0
  %1559 = vmatprep.subr.bf16.mxu0 0
  %1560 = vmatpush1.bf16.msra.mxu0 0
  %1561 = vmatprep.mubr.bf16.mxu0 0
  %1562 = vmatmul.mubr.bf16.gmra.mrb[0].mxu0 %v1527
  %v1563 = vpop.f32.mrb[0].mxu0
  %v1564 = vadd.f32 0.0, %v1563
  %v1565 = vpop.f32.mrb[0].mxu0
  %v1566 = vadd.f32 0.0, %v1565
  %v1567 = vpop.f32.mrb[0].mxu0
  %v1568 = vpop.f32.mrb[0].mxu0
  %1569 = vdwg.mxu0
  %1572 = vrot.lane.b32.xlu0 %v1564, 32
  %v1573 = vpop.permute.xlu0 %1572
  %1574 = vrot.lane.b32.xlu0 %v1566, 32
  %v1575 = vpop.permute.xlu0 %1574
  %v1576 = vsel %vm82, %v1573, %v1575
  %v1578 = vsel %vm169, %v1564, %v1576
  %v1579 = vadd.f32 %v1578, %v1323
  %v1580 = vld [vmem:[%s544] sm:$0xff]
  %v1581 = vadd.f32 %v1580, %v1579
  %v1582 = vxor.u32 %v1581, 2147483648
  %v1583 = vmul.f32 %v1582, 1.442695
  %v1584 = vpow.pop %v1583
  %v1585 = vadd.f32 %v1584, 1.0
  %v1586 = vrcp.pop %v1585
  %v1587 = vmul.f32 1.0, %v1586
  %1589 = vrot.lane.b32.xlu0 %v1579, 64
  %v1590 = vpop.permute.xlu0 %1589
  %v1592 = vmul.f32 %v1587, %v1590
  %1594 = vrot.lane.b32.xlu0 %v1592, 64
  %v1595 = vpop.permute.xlu0 %1594
  %v1597 = vadd.f32 %v1580, %v1595
  %v1598 = vtanh.pop %v1597
  %v1599 = vsub.f32 1.0, %v1587
  %1601 = vrot.lane.b32.xlu0 %v1598, 96
  %v1602 = vpop.permute.xlu0 %1601
  %v1604 = vmul.f32 %v1599, %v1602
  %v1605 = vmul.f32 %v1587, %v1514
  %v1606 = vadd.f32 %v1604, %v1605
  %v1607 = vsel %vm577, %v1606, %v1514
  %v1608 = vsel %vm577, %v1606, 0.0
  %1610 = vrot.lane.b32.xlu0 %v1608, 96
  %v1611 = vpop.permute.xlu0 %1610
  %s1613 = scalar_lea.vmem [#allocation2], 80
  %1614 = vst.msk [vmem:[%s1613] sm:$0xff] %vm82, %v1611
  %v1615 = vpack.c.bf16 %v1607, %v1607
  %1617 = vrot.lane.b32.xlu0 %v1615, 96
  %v1618 = vpop.permute.xlu0 %1617
  %v1620 = vsel %vm82, %v1618, 0
  %1622 = vmatprep.subr.bf16.mxu0 %v1337
  %1623 = vmatpush1.bf16.msra.mxu0 %v1336
  %1624 = vmatprep.subr.bf16.mxu0 %v1339
  %1625 = vmatpush1.bf16.msra.mxu0 %v1338
  %1626 = vmatprep.subr.bf16.mxu0 0
  %1627 = vmatpush1.bf16.msra.mxu0 0
  %1628 = vmatprep.subr.bf16.mxu0 0
  %1629 = vmatpush1.bf16.msra.mxu0 0
  %1630 = vmatprep.subr.bf16.mxu0 0
  %1631 = vmatpush1.bf16.msra.mxu0 0
  %1632 = vmatprep.subr.bf16.mxu0 0
  %1633 = vmatpush1.bf16.msra.mxu0 0
  %1634 = vmatprep.subr.bf16.mxu0 0
  %1635 = vmatpush1.bf16.msra.mxu0 0
  %1636 = vmatprep.subr.bf16.mxu0 0
  %1637 = vmatpush1.bf16.msra.mxu0 0
  %1638 = vmatprep.subr.bf16.mxu0 0
  %1639 = vmatpush1.bf16.msra.mxu0 0
  %1640 = vmatprep.subr.bf16.mxu0 0
  %1641 = vmatpush1.bf16.msra.mxu0 0
  %1642 = vmatprep.subr.bf16.mxu0 0
  %1643 = vmatpush1.bf16.msra.mxu0 0
  %1644 = vmatprep.subr.bf16.mxu0 0
  %1645 = vmatpush1.bf16.msra.mxu0 0
  %1646 = vmatprep.subr.bf16.mxu0 0
  %1647 = vmatpush1.bf16.msra.mxu0 0
  %1648 = vmatprep.subr.bf16.mxu0 0
  %1649 = vmatpush1.bf16.msra.mxu0 0
  %1650 = vmatprep.subr.bf16.mxu0 0
  %1651 = vmatpush1.bf16.msra.mxu0 0
  %1652 = vmatprep.subr.bf16.mxu0 0
  %1653 = vmatpush1.bf16.msra.mxu0 0
  %1654 = vmatprep.mubr.bf16.mxu0 0
  %1655 = vmatmul.mubr.bf16.gmra.mrb[0].mxu0 %v1620
  %v1656 = vpop.f32.mrb[0].mxu0
  %v1657 = vadd.f32 0.0, %v1656
  %v1658 = vpop.f32.mrb[0].mxu0
  %v1659 = vadd.f32 0.0, %v1658
  %v1660 = vpop.f32.mrb[0].mxu0
  %v1661 = vpop.f32.mrb[0].mxu0
  %1662 = vdwg.mxu0
  %1665 = vrot.lane.b32.xlu0 %v1657, 32
  %v1666 = vpop.permute.xlu0 %1665
  %1667 = vrot.lane.b32.xlu0 %v1659, 32
  %v1668 = vpop.permute.xlu0 %1667
  %v1669 = vsel %vm82, %v1666, %v1668
  %v1671 = vsel %vm169, %v1657, %v1669
  %v1672 = vadd.f32 %v1671, %v1323
  %v1673 = vld [vmem:[%s644] sm:$0xff]
  %v1674 = vadd.f32 %v1673, %v1672
  %v1675 = vxor.u32 %v1674, 2147483648
  %v1676 = vmul.f32 %v1675, 1.442695
  %v1677 = vpow.pop %v1676
  %v1678 = vadd.f32 %v1677, 1.0
  %v1679 = vrcp.pop %v1678
  %v1680 = vmul.f32 1.0, %v1679
  %1682 = vrot.lane.b32.xlu0 %v1672, 64
  %v1683 = vpop.permute.xlu0 %1682
  %v1685 = vmul.f32 %v1680, %v1683
  %1687 = vrot.lane.b32.xlu0 %v1685, 64
  %v1688 = vpop.permute.xlu0 %1687
  %v1690 = vadd.f32 %v1673, %v1688
  %v1691 = vtanh.pop %v1690
  %v1692 = vsub.f32 1.0, %v1680
  %1694 = vrot.lane.b32.xlu0 %v1691, 96
  %v1695 = vpop.permute.xlu0 %1694
  %v1697 = vmul.f32 %v1692, %v1695
  %v1698 = vmul.f32 %v1680, %v1607
  %v1699 = vadd.f32 %v1697, %v1698
  %v1700 = vsel %vm677, %v1699, %v1607
  %v1701 = vsel %vm677, %v1699, 0.0
  %1703 = vrot.lane.b32.xlu0 %v1701, 96
  %v1704 = vpop.permute.xlu0 %1703
  %s1706 = scalar_lea.vmem [#allocation2], 88
  %1707 = vst.msk [vmem:[%s1706] sm:$0xff] %vm82, %v1704
  %v1708 = vpack.c.bf16 %v1700, %v1700
  %1710 = vrot.lane.b32.xlu0 %v1708, 96
  %v1711 = vpop.permute.xlu0 %1710
  %v1713 = vsel %vm82, %v1711, 0
  %1715 = vmatprep.subr.bf16.mxu0 %v1337
  %1716 = vmatpush1.bf16.msra.mxu0 %v1336
  %1717 = vmatprep.subr.bf16.mxu0 %v1339
  %1718 = vmatpush1.bf16.msra.mxu0 %v1338
  %1719 = vmatprep.subr.bf16.mxu0 0
  %1720 = vmatpush1.bf16.msra.mxu0 0
  %1721 = vmatprep.subr.bf16.mxu0 0
  %1722 = vmatpush1.bf16.msra.mxu0 0
  %1723 = vmatprep.subr.bf16.mxu0 0
  %1724 = vmatpush1.bf16.msra.mxu0 0
  %1725 = vmatprep.subr.bf16.mxu0 0
  %1726 = vmatpush1.bf16.msra.mxu0 0
  %1727 = vmatprep.subr.bf16.mxu0 0
  %1728 = vmatpush1.bf16.msra.mxu0 0
  %1729 = vmatprep.subr.bf16.mxu0 0
  %1730 = vmatpush1.bf16.msra.mxu0 0
  %1731 = vmatprep.subr.bf16.mxu0 0
  %1732 = vmatpush1.bf16.msra.mxu0 0
  %1733 = vmatprep.subr.bf16.mxu0 0
  %1734 = vmatpush1.bf16.msra.mxu0 0
  %1735 = vmatprep.subr.bf16.mxu0 0
  %1736 = vmatpush1.bf16.msra.mxu0 0
  %1737 = vmatprep.subr.bf16.mxu0 0
  %1738 = vmatpush1.bf16.msra.mxu0 0
  %1739 = vmatprep.subr.bf16.mxu0 0
  %1740 = vmatpush1.bf16.msra.mxu0 0
  %1741 = vmatprep.subr.bf16.mxu0 0
  %1742 = vmatpush1.bf16.msra.mxu0 0
  %1743 = vmatprep.subr.bf16.mxu0 0
  %1744 = vmatpush1.bf16.msra.mxu0 0
  %1745 = vmatprep.subr.bf16.mxu0 0
  %1746 = vmatpush1.bf16.msra.mxu0 0
  %1747 = vmatprep.mubr.bf16.mxu0 0
  %1748 = vmatmul.mubr.bf16.gmra.mrb[0].mxu0 %v1713
  %v1749 = vpop.f32.mrb[0].mxu0
  %v1750 = vadd.f32 0.0, %v1749
  %v1751 = vpop.f32.mrb[0].mxu0
  %v1752 = vadd.f32 0.0, %v1751
  %v1753 = vpop.f32.mrb[0].mxu0
  %v1754 = vpop.f32.mrb[0].mxu0
  %1755 = vdwg.mxu0
  %1758 = vrot.lane.b32.xlu0 %v1750, 32
  %v1759 = vpop.permute.xlu0 %1758
  %1760 = vrot.lane.b32.xlu0 %v1752, 32
  %v1761 = vpop.permute.xlu0 %1760
  %v1762 = vsel %vm82, %v1759, %v1761
  %v1764 = vsel %vm169, %v1750, %v1762
  %v1765 = vadd.f32 %v1764, %v1323
  %v1766 = vld [vmem:[%s744] sm:$0xff]
  %v1767 = vadd.f32 %v1766, %v1765
  %v1768 = vxor.u32 %v1767, 2147483648
  %v1769 = vmul.f32 %v1768, 1.442695
  %v1770 = vpow.pop %v1769
  %v1771 = vadd.f32 %v1770, 1.0
  %v1772 = vrcp.pop %v1771
  %v1773 = vmul.f32 1.0, %v1772
  %1775 = vrot.lane.b32.xlu0 %v1765, 64
  %v1776 = vpop.permute.xlu0 %1775
  %v1778 = vmul.f32 %v1773, %v1776
  %1780 = vrot.lane.b32.xlu0 %v1778, 64
  %v1781 = vpop.permute.xlu0 %1780
  %v1783 = vadd.f32 %v1766, %v1781
  %v1784 = vtanh.pop %v1783
  %v1785 = vsub.f32 1.0, %v1773
  %1787 = vrot.lane.b32.xlu0 %v1784, 96
  %v1788 = vpop.permute.xlu0 %1787
  %v1790 = vmul.f32 %v1785, %v1788
  %v1791 = vmul.f32 %v1773, %v1700
  %v1792 = vadd.f32 %v1790, %v1791
  %v1793 = vsel %vm777, %v1792, %v1700
  %v1794 = vsel %vm777, %v1792, 0.0
  %1796 = vrot.lane.b32.xlu0 %v1794, 96
  %v1797 = vpop.permute.xlu0 %1796
  %s1799 = scalar_lea.vmem [#allocation2], 96
  %1800 = vst.msk [vmem:[%s1799] sm:$0xff] %vm82, %v1797
  %v1801 = vpack.c.bf16 %v1793, %v1793
  %1803 = vrot.lane.b32.xlu0 %v1801, 96
  %v1804 = vpop.permute.xlu0 %1803
  %v1806 = vsel %vm82, %v1804, 0
  %1808 = vmatprep.subr.bf16.mxu0 %v1337
  %1809 = vmatpush1.bf16.msra.mxu0 %v1336
  %1810 = vmatprep.subr.bf16.mxu0 %v1339
  %1811 = vmatpush1.bf16.msra.mxu0 %v1338
  %1812 = vmatprep.subr.bf16.mxu0 0
  %1813 = vmatpush1.bf16.msra.mxu0 0
  %1814 = vmatprep.subr.bf16.mxu0 0
  %1815 = vmatpush1.bf16.msra.mxu0 0
  %1816 = vmatprep.subr.bf16.mxu0 0
  %1817 = vmatpush1.bf16.msra.mxu0 0
  %1818 = vmatprep.subr.bf16.mxu0 0
  %1819 = vmatpush1.bf16.msra.mxu0 0
  %1820 = vmatprep.subr.bf16.mxu0 0
  %1821 = vmatpush1.bf16.msra.mxu0 0
  %1822 = vmatprep.subr.bf16.mxu0 0
  %1823 = vmatpush1.bf16.msra.mxu0 0
  %1824 = vmatprep.subr.bf16.mxu0 0
  %1825 = vmatpush1.bf16.msra.mxu0 0
  %1826 = vmatprep.subr.bf16.mxu0 0
  %1827 = vmatpush1.bf16.msra.mxu0 0
  %1828 = vmatprep.subr.bf16.mxu0 0
  %1829 = vmatpush1.bf16.msra.mxu0 0
  %1830 = vmatprep.subr.bf16.mxu0 0
  %1831 = vmatpush1.bf16.msra.mxu0 0
  %1832 = vmatprep.subr.bf16.mxu0 0
  %1833 = vmatpush1.bf16.msra.mxu0 0
  %1834 = vmatprep.subr.bf16.mxu0 0
  %1835 = vmatpush1.bf16.msra.mxu0 0
  %1836 = vmatprep.subr.bf16.mxu0 0
  %1837 = vmatpush1.bf16.msra.mxu0 0
  %1838 = vmatprep.subr.bf16.mxu0 0
  %1839 = vmatpush1.bf16.msra.mxu0 0
  %1840 = vmatprep.mubr.bf16.mxu0 0
  %1841 = vmatmul.mubr.bf16.gmra.mrb[0].mxu0 %v1806
  %v1842 = vpop.f32.mrb[0].mxu0
  %v1843 = vadd.f32 0.0, %v1842
  %v1844 = vpop.f32.mrb[0].mxu0
  %v1845 = vadd.f32 0.0, %v1844
  %v1846 = vpop.f32.mrb[0].mxu0
  %v1847 = vpop.f32.mrb[0].mxu0
  %1848 = vdwg.mxu0
  %1851 = vrot.lane.b32.xlu0 %v1843, 32
  %v1852 = vpop.permute.xlu0 %1851
  %1853 = vrot.lane.b32.xlu0 %v1845, 32
  %v1854 = vpop.permute.xlu0 %1853
  %v1855 = vsel %vm82, %v1852, %v1854
  %v1857 = vsel %vm169, %v1843, %v1855
  %v1858 = vadd.f32 %v1857, %v1323
  %v1859 = vld [vmem:[%s844] sm:$0xff]
  %v1860 = vadd.f32 %v1859, %v1858
  %v1861 = vxor.u32 %v1860, 2147483648
  %v1862 = vmul.f32 %v1861, 1.442695
  %v1863 = vpow.pop %v1862
  %v1864 = vadd.f32 %v1863, 1.0
  %v1865 = vrcp.pop %v1864
  %v1866 = vmul.f32 1.0, %v1865
  %1868 = vrot.lane.b32.xlu0 %v1858, 64
  %v1869 = vpop.permute.xlu0 %1868
  %v1871 = vmul.f32 %v1866, %v1869
  %1873 = vrot.lane.b32.xlu0 %v1871, 64
  %v1874 = vpop.permute.xlu0 %1873
  %v1876 = vadd.f32 %v1859, %v1874
  %v1877 = vtanh.pop %v1876
  %v1878 = vsub.f32 1.0, %v1866
  %1880 = vrot.lane.b32.xlu0 %v1877, 96
  %v1881 = vpop.permute.xlu0 %1880
  %v1883 = vmul.f32 %v1878, %v1881
  %v1884 = vmul.f32 %v1866, %v1793
  %v1885 = vadd.f32 %v1883, %v1884
  %v1886 = vsel %vm877, %v1885, %v1793
  %v1887 = vsel %vm877, %v1885, 0.0
  %1889 = vrot.lane.b32.xlu0 %v1887, 96
  %v1890 = vpop.permute.xlu0 %1889
  %s1892 = scalar_lea.vmem [#allocation2], 104
  %1893 = vst.msk [vmem:[%s1892] sm:$0xff] %vm82, %v1890
  %v1894 = vpack.c.bf16 %v1886, %v1886
  %1896 = vrot.lane.b32.xlu0 %v1894, 96
  %v1897 = vpop.permute.xlu0 %1896
  %v1899 = vsel %vm82, %v1897, 0
  %1901 = vmatprep.subr.bf16.mxu0 %v1337
  %1902 = vmatpush1.bf16.msra.mxu0 %v1336
  %1903 = vmatprep.subr.bf16.mxu0 %v1339
  %1904 = vmatpush1.bf16.msra.mxu0 %v1338
  %1905 = vmatprep.subr.bf16.mxu0 0
  %1906 = vmatpush1.bf16.msra.mxu0 0
  %1907 = vmatprep.subr.bf16.mxu0 0
  %1908 = vmatpush1.bf16.msra.mxu0 0
  %1909 = vmatprep.subr.bf16.mxu0 0
  %1910 = vmatpush1.bf16.msra.mxu0 0
  %1911 = vmatprep.subr.bf16.mxu0 0
  %1912 = vmatpush1.bf16.msra.mxu0 0
  %1913 = vmatprep.subr.bf16.mxu0 0
  %1914 = vmatpush1.bf16.msra.mxu0 0
  %1915 = vmatprep.subr.bf16.mxu0 0
  %1916 = vmatpush1.bf16.msra.mxu0 0
  %1917 = vmatprep.subr.bf16.mxu0 0
  %1918 = vmatpush1.bf16.msra.mxu0 0
  %1919 = vmatprep.subr.bf16.mxu0 0
  %1920 = vmatpush1.bf16.msra.mxu0 0
  %1921 = vmatprep.subr.bf16.mxu0 0
  %1922 = vmatpush1.bf16.msra.mxu0 0
  %1923 = vmatprep.subr.bf16.mxu0 0
  %1924 = vmatpush1.bf16.msra.mxu0 0
  %1925 = vmatprep.subr.bf16.mxu0 0
  %1926 = vmatpush1.bf16.msra.mxu0 0
  %1927 = vmatprep.subr.bf16.mxu0 0
  %1928 = vmatpush1.bf16.msra.mxu0 0
  %1929 = vmatprep.subr.bf16.mxu0 0
  %1930 = vmatpush1.bf16.msra.mxu0 0
  %1931 = vmatprep.subr.bf16.mxu0 0
  %1932 = vmatpush1.bf16.msra.mxu0 0
  %1933 = vmatprep.mubr.bf16.mxu0 0
  %1934 = vmatmul.mubr.bf16.gmra.mrb[0].mxu0 %v1899
  %v1935 = vpop.f32.mrb[0].mxu0
  %v1936 = vadd.f32 0.0, %v1935
  %v1937 = vpop.f32.mrb[0].mxu0
  %v1938 = vadd.f32 0.0, %v1937
  %v1939 = vpop.f32.mrb[0].mxu0
  %v1940 = vpop.f32.mrb[0].mxu0
  %1941 = vdwg.mxu0
  %1944 = vrot.lane.b32.xlu0 %v1936, 32
  %v1945 = vpop.permute.xlu0 %1944
  %1946 = vrot.lane.b32.xlu0 %v1938, 32
  %v1947 = vpop.permute.xlu0 %1946
  %v1948 = vsel %vm82, %v1945, %v1947
  %v1950 = vsel %vm169, %v1936, %v1948
  %v1951 = vadd.f32 %v1950, %v1323
  %v1952 = vld [vmem:[%s944] sm:$0xff]
  %v1953 = vadd.f32 %v1952, %v1951
  %v1954 = vxor.u32 %v1953, 2147483648
  %v1955 = vmul.f32 %v1954, 1.442695
  %v1956 = vpow.pop %v1955
  %v1957 = vadd.f32 %v1956, 1.0
  %v1958 = vrcp.pop %v1957
  %v1959 = vmul.f32 1.0, %v1958
  %1961 = vrot.lane.b32.xlu0 %v1951, 64
  %v1962 = vpop.permute.xlu0 %1961
  %v1964 = vmul.f32 %v1959, %v1962
  %1966 = vrot.lane.b32.xlu0 %v1964, 64
  %v1967 = vpop.permute.xlu0 %1966
  %v1969 = vadd.f32 %v1952, %v1967
  %v1970 = vtanh.pop %v1969
  %v1971 = vsub.f32 1.0, %v1959
  %1973 = vrot.lane.b32.xlu0 %v1970, 96
  %v1974 = vpop.permute.xlu0 %1973
  %v1976 = vmul.f32 %v1971, %v1974
  %v1977 = vmul.f32 %v1959, %v1886
  %v1978 = vadd.f32 %v1976, %v1977
  %v1979 = vsel %vm977, %v1978, %v1886
  %v1980 = vsel %vm977, %v1978, 0.0
  %1982 = vrot.lane.b32.xlu0 %v1980, 96
  %v1983 = vpop.permute.xlu0 %1982
  %s1985 = scalar_lea.vmem [#allocation2], 112
  %1986 = vst.msk [vmem:[%s1985] sm:$0xff] %vm82, %v1983
  %v1987 = vpack.c.bf16 %v1979, %v1979
  %1989 = vrot.lane.b32.xlu0 %v1987, 96
  %v1990 = vpop.permute.xlu0 %1989
  %v1992 = vsel %vm82, %v1990, 0
  %1994 = vmatprep.subr.bf16.mxu0 %v1337
  %1995 = vmatpush1.bf16.msra.mxu0 %v1336
  %1996 = vmatprep.subr.bf16.mxu0 %v1339
  %1997 = vmatpush1.bf16.msra.mxu0 %v1338
  %1998 = vmatprep.subr.bf16.mxu0 0
  %1999 = vmatpush1.bf16.msra.mxu0 0
  %2000 = vmatprep.subr.bf16.mxu0 0
  %2001 = vmatpush1.bf16.msra.mxu0 0
  %2002 = vmatprep.subr.bf16.mxu0 0
  %2003 = vmatpush1.bf16.msra.mxu0 0
  %2004 = vmatprep.subr.bf16.mxu0 0
  %2005 = vmatpush1.bf16.msra.mxu0 0
  %2006 = vmatprep.subr.bf16.mxu0 0
  %2007 = vmatpush1.bf16.msra.mxu0 0
  %2008 = vmatprep.subr.bf16.mxu0 0
  %2009 = vmatpush1.bf16.msra.mxu0 0
  %2010 = vmatprep.subr.bf16.mxu0 0
  %2011 = vmatpush1.bf16.msra.mxu0 0
  %2012 = vmatprep.subr.bf16.mxu0 0
  %2013 = vmatpush1.bf16.msra.mxu0 0
  %2014 = vmatprep.subr.bf16.mxu0 0
  %2015 = vmatpush1.bf16.msra.mxu0 0
  %2016 = vmatprep.subr.bf16.mxu0 0
  %2017 = vmatpush1.bf16.msra.mxu0 0
  %2018 = vmatprep.subr.bf16.mxu0 0
  %2019 = vmatpush1.bf16.msra.mxu0 0
  %2020 = vmatprep.subr.bf16.mxu0 0
  %2021 = vmatpush1.bf16.msra.mxu0 0
  %2022 = vmatprep.subr.bf16.mxu0 0
  %2023 = vmatpush1.bf16.msra.mxu0 0
  %2024 = vmatprep.subr.bf16.mxu0 0
  %2025 = vmatpush1.bf16.msra.mxu0 0
  %2026 = vmatprep.mubr.bf16.mxu0 0
  %2027 = vmatmul.mubr.bf16.gmra.mrb[0].mxu0 %v1992
  %v2028 = vpop.f32.mrb[0].mxu0
  %v2029 = vadd.f32 0.0, %v2028
  %v2030 = vpop.f32.mrb[0].mxu0
  %v2031 = vadd.f32 0.0, %v2030
  %v2032 = vpop.f32.mrb[0].mxu0
  %v2033 = vpop.f32.mrb[0].mxu0
  %2034 = vdwg.mxu0
  %2037 = vrot.lane.b32.xlu0 %v2029, 32
  %v2038 = vpop.permute.xlu0 %2037
  %2039 = vrot.lane.b32.xlu0 %v2031, 32
  %v2040 = vpop.permute.xlu0 %2039
  %v2041 = vsel %vm82, %v2038, %v2040
  %v2043 = vsel %vm169, %v2029, %v2041
  %v2044 = vadd.f32 %v2043, %v1323
  %v2045 = vld [vmem:[%s1044] sm:$0xff]
  %v2046 = vadd.f32 %v2045, %v2044
  %v2047 = vxor.u32 %v2046, 2147483648
  %v2048 = vmul.f32 %v2047, 1.442695
  %v2049 = vpow.pop %v2048
  %v2050 = vadd.f32 %v2049, 1.0
  %v2051 = vrcp.pop %v2050
  %v2052 = vmul.f32 1.0, %v2051
  %2054 = vrot.lane.b32.xlu0 %v2044, 64
  %v2055 = vpop.permute.xlu0 %2054
  %v2057 = vmul.f32 %v2052, %v2055
  %2059 = vrot.lane.b32.xlu0 %v2057, 64
  %v2060 = vpop.permute.xlu0 %2059
  %v2062 = vadd.f32 %v2045, %v2060
  %v2063 = vtanh.pop %v2062
  %v2064 = vsub.f32 1.0, %v2052
  %2066 = vrot.lane.b32.xlu0 %v2063, 96
  %v2067 = vpop.permute.xlu0 %2066
  %v2069 = vmul.f32 %v2064, %v2067
  %v2070 = vmul.f32 %v2052, %v1979
  %v2071 = vadd.f32 %v2069, %v2070
  %v2072 = vsel %vm1077, %v2071, 0.0
  %2074 = vrot.lane.b32.xlu0 %v2072, 96
  %v2075 = vpop.permute.xlu0 %2074
  %s2077 = scalar_lea.vmem [#allocation2], 120
  %2078 = vst.msk [vmem:[%s2077] sm:$0xff] %vm82, %v2075
  %v2079 = vld [vmem:[%s6] sm:$0xf]
  %v2080 = vld [vmem:[%s6 + $0x4] sm:$0xf]
  %v2081 = vld [vmem:[%s6 + $0x8] sm:$0xf]
  %v2082 = vld [vmem:[%s6 + $0xc] sm:$0xf]
  %v2083 = vld [vmem:[%s6 + $0x10] sm:$0xf]
  %v2084 = vld [vmem:[%s6 + $0x14] sm:$0xf]
  %v2085 = vld [vmem:[%s6 + $0x18] sm:$0xf]
  %v2086 = vld [vmem:[%s6 + $0x1c] sm:$0xf]
  %v2087 = vld [vmem:[%s7] sm:$0x1]
  %v2088 = vld [vmem:[#allocation2] sm:$0xff]
  %v2089 = vld [vmem:[#allocation2 + $0x8] sm:$0xff]
  %v2090 = vld [vmem:[#allocation2 + $0x10] sm:$0xff]
  %v2091 = vld [vmem:[#allocation2 + $0x18] sm:$0xff]
  %v2092 = vld [vmem:[#allocation2 + $0x20] sm:$0xff]
  %v2093 = vld [vmem:[#allocation2 + $0x28] sm:$0xff]
  %v2094 = vld [vmem:[#allocation2 + $0x30] sm:$0xff]
  %v2095 = vld [vmem:[#allocation2 + $0x38] sm:$0xff]
  %v2096 = vld [vmem:[%s1427] sm:$0xff]
  %v2097 = vld [vmem:[%s1427 + $0x8] sm:$0xff]
  %v2098 = vld [vmem:[%s1427 + $0x10] sm:$0xff]
  %v2099 = vld [vmem:[%s1427 + $0x18] sm:$0xff]
  %v2100 = vld [vmem:[%s1427 + $0x20] sm:$0xff]
  %v2101 = vld [vmem:[%s1427 + $0x28] sm:$0xff]
  %v2102 = vld [vmem:[%s1427 + $0x30] sm:$0xff]
  %v2103 = vld [vmem:[%s1427 + $0x38] sm:$0xff]
  %v2112 = vrot.slane %v2096, 4
  %v2113 = vrot.slane %v2097, 4
  %v2114 = vrot.slane %v2098, 4
  %v2115 = vrot.slane %v2099, 4
  %v2116 = vrot.slane %v2100, 4
  %v2117 = vrot.slane %v2101, 4
  %v2118 = vrot.slane %v2102, 4
  %v2119 = vrot.slane %v2103, 4
  %2120 = vrot.lane.b32.xlu0 %v2112, 32
  %v2121 = vpop.permute.xlu0 %2120
  %2122 = vrot.lane.b32.xlu0 %v2113, 32
  %v2123 = vpop.permute.xlu0 %2122
  %2124 = vrot.lane.b32.xlu0 %v2114, 32
  %v2125 = vpop.permute.xlu0 %2124
  %2126 = vrot.lane.b32.xlu0 %v2115, 32
  %v2127 = vpop.permute.xlu0 %2126
  %2128 = vrot.lane.b32.xlu0 %v2116, 32
  %v2129 = vpop.permute.xlu0 %2128
  %2130 = vrot.lane.b32.xlu0 %v2117, 32
  %v2131 = vpop.permute.xlu0 %2130
  %2132 = vrot.lane.b32.xlu0 %v2118, 32
  %v2133 = vpop.permute.xlu0 %2132
  %2134 = vrot.lane.b32.xlu0 %v2119, 32
  %v2135 = vpop.permute.xlu0 %2134
  %v2144 = vsel %vm82, %v2088, %v2121
  %v2145 = vsel %vm82, %v2089, %v2123
  %v2146 = vsel %vm82, %v2090, %v2125
  %v2147 = vsel %vm82, %v2091, %v2127
  %v2148 = vsel %vm82, %v2092, %v2129
  %v2149 = vsel %vm82, %v2093, %v2131
  %v2150 = vsel %vm82, %v2094, %v2133
  %v2151 = vsel %vm82, %v2095, %v2135
  %v2160 = vcombine.low %v2144, %v2145
  %v2161 = vcombine.low %v2146, %v2147
  %v2162 = vcombine.low %v2148, %v2149
  %v2163 = vcombine.low %v2150, %v2151
  %v2168 = vpack.c.bf16 %v2161, %v2160
  %v2169 = vpack.c.bf16 %v2163, %v2162
  %v2171 = vlaneseq
  %v2172 = vshrl.u32 %v2171, 7
  %v2173 = vsub.s32 0, %v2172
  %v2174 = vrot.slane %v2087, %v2173
  %v2184 = vunpack.c.l.b16 %v2079
  %v2185 = vunpack.c.l.b16 %v2080
  %v2186 = vunpack.c.l.b16 %v2081
  %v2187 = vunpack.c.l.b16 %v2082
  %v2188 = vunpack.c.l.b16 %v2083
  %v2189 = vunpack.c.l.b16 %v2084
  %v2190 = vunpack.c.l.b16 %v2085
  %v2191 = vunpack.c.l.b16 %v2086
  %v2192 = vpack.c.b16 %v2185, %v2184
  %v2193 = vpack.c.b16 %v2187, %v2186
  %v2194 = vpack.c.b16 %v2189, %v2188
  %v2195 = vpack.c.b16 %v2191, %v2190
  %vm2200 = vcmask 523264
  %v2202 = vsel %vm2200, %v2168, 0
  %v2205 = vsel %vm2200, %v2169, 0
  %2207 = vmatprep.subr.bf16.mxu0 0
  %2208 = vmatpush1.bf16.msra.mxu0 %v2192
  %2209 = vmatprep.subr.bf16.mxu0 0
  %2210 = vmatpush1.bf16.msra.mxu0 %v2193
  %2211 = vmatprep.subr.bf16.mxu0 0
  %2212 = vmatpush1.bf16.msra.mxu0 %v2194
  %2213 = vmatprep.subr.bf16.mxu0 0
  %2214 = vmatpush1.bf16.msra.mxu0 %v2195
  %2215 = vmatprep.subr.bf16.mxu0 0
  %2216 = vmatpush1.bf16.msra.mxu0 0
  %2217 = vmatprep.subr.bf16.mxu0 0
  %2218 = vmatpush1.bf16.msra.mxu0 0
  %2219 = vmatprep.subr.bf16.mxu0 0
  %2220 = vmatpush1.bf16.msra.mxu0 0
  %2221 = vmatprep.subr.bf16.mxu0 0
  %2222 = vmatpush1.bf16.msra.mxu0 0
  %2223 = vmatprep.subr.bf16.mxu0 0
  %2224 = vmatpush1.bf16.msra.mxu0 0
  %2225 = vmatprep.subr.bf16.mxu0 0
  %2226 = vmatpush1.bf16.msra.mxu0 0
  %2227 = vmatprep.subr.bf16.mxu0 0
  %2228 = vmatpush1.bf16.msra.mxu0 0
  %2229 = vmatprep.subr.bf16.mxu0 0
  %2230 = vmatpush1.bf16.msra.mxu0 0
  %2231 = vmatprep.subr.bf16.mxu0 0
  %2232 = vmatpush1.bf16.msra.mxu0 0
  %2233 = vmatprep.subr.bf16.mxu0 0
  %2234 = vmatpush1.bf16.msra.mxu0 0
  %2235 = vmatprep.subr.bf16.mxu0 0
  %2236 = vmatpush1.bf16.msra.mxu0 0
  %2237 = vmatprep.subr.bf16.mxu0 0
  %2238 = vmatpush1.bf16.msra.mxu0 0
  %2239 = vmatprep.mubr.bf16.mxu0 0
  %2240 = vmatmul.mubr.bf16.gmra.mrb[0].mxu0 %v2202
  %v2241 = vpop.f32.mrb[0].mxu0
  %v2242 = vadd.f32 %v2174, %v2241
  %v2243 = vpop.f32.mrb[0].mxu0
  %v2244 = vpop.f32.mrb[0].mxu0
  %v2245 = vadd.f32 %v2174, %v2244
  %v2246 = vpop.f32.mrb[0].mxu0
  %2247 = vmatprep.mubr.bf16.mxu0 0
  %2248 = vmatmul.mubr.bf16.gmra.mrb[0].mxu0 %v2205
  %v2249 = vpop.f32.mrb[0].mxu0
  %v2250 = vadd.f32 %v2174, %v2249
  %v2251 = vpop.f32.mrb[0].mxu0
  %v2252 = vpop.f32.mrb[0].mxu0
  %v2253 = vadd.f32 %v2174, %v2252
  %v2254 = vpop.f32.mrb[0].mxu0
  %2255 = vdwg.mxu0
  %v2260 = vcombine.high %v2242, %v2242
  %v2261 = vcombine.high %v2245, %v2245
  %v2262 = vcombine.high %v2250, %v2250
  %v2263 = vcombine.high %v2253, %v2253
  %vm2268 = vcmask 519168
  %2269 = vst.msk [vmem:[%s8] sm:$0xf] %vm2268, %v2242
  %2270 = vst.msk [vmem:[%s8 + $0x4] sm:$0xf] %vm2268, %v2260
  %2271 = vst.msk [vmem:[%s8 + $0x8] sm:$0xf] %vm2268, %v2245
  %2272 = vst.msk [vmem:[%s8 + $0xc] sm:$0xf] %vm2268, %v2261
  %2273 = vst.msk [vmem:[%s8 + $0x10] sm:$0xf] %vm2268, %v2250
  %2274 = vst.msk [vmem:[%s8 + $0x14] sm:$0xf] %vm2268, %v2262
  %2275 = vst.msk [vmem:[%s8 + $0x18] sm:$0xf] %vm2268, %v2253
  %2276 = vst.msk [vmem:[%s8 + $0x1c] sm:$0xf] %vm2268, %v2263
  %v2277 = vld [vmem:[%s1427] sm:$0xff]
  %v2278 = vld [vmem:[%s1427 + $0x8] sm:$0xff]
  %v2279 = vld [vmem:[%s1427 + $0x10] sm:$0xff]
  %v2280 = vld [vmem:[%s1427 + $0x18] sm:$0xff]
  %v2281 = vld [vmem:[%s1427 + $0x20] sm:$0xff]
  %v2282 = vld [vmem:[%s1427 + $0x28] sm:$0xff]
  %v2283 = vld [vmem:[%s1427 + $0x30] sm:$0xff]
  %v2284 = vld [vmem:[%s1427 + $0x38] sm:$0xff]
  %v2285 = vld [vmem:[#allocation2] sm:$0xff]
  %v2286 = vld [vmem:[#allocation2 + $0x8] sm:$0xff]
  %v2287 = vld [vmem:[#allocation2 + $0x10] sm:$0xff]
  %v2288 = vld [vmem:[#allocation2 + $0x18] sm:$0xff]
  %v2289 = vld [vmem:[#allocation2 + $0x20] sm:$0xff]
  %v2290 = vld [vmem:[#allocation2 + $0x28] sm:$0xff]
  %v2291 = vld [vmem:[#allocation2 + $0x30] sm:$0xff]
  %v2292 = vld [vmem:[#allocation2 + $0x38] sm:$0xff]
  %v2301 = vrot.slane %v2285, 4
  %v2302 = vrot.slane %v2286, 4
  %v2303 = vrot.slane %v2287, 4
  %v2304 = vrot.slane %v2288, 4
  %v2305 = vrot.slane %v2289, 4
  %v2306 = vrot.slane %v2290, 4
  %v2307 = vrot.slane %v2291, 4
  %v2308 = vrot.slane %v2292, 4
  %2309 = vrot.lane.b32.xlu0 %v2301, 32
  %v2310 = vpop.permute.xlu0 %2309
  %2311 = vrot.lane.b32.xlu0 %v2302, 32
  %v2312 = vpop.permute.xlu0 %2311
  %2313 = vrot.lane.b32.xlu0 %v2303, 32
  %v2314 = vpop.permute.xlu0 %2313
  %2315 = vrot.lane.b32.xlu0 %v2304, 32
  %v2316 = vpop.permute.xlu0 %2315
  %2317 = vrot.lane.b32.xlu0 %v2305, 32
  %v2318 = vpop.permute.xlu0 %2317
  %2319 = vrot.lane.b32.xlu0 %v2306, 32
  %v2320 = vpop.permute.xlu0 %2319
  %2321 = vrot.lane.b32.xlu0 %v2307, 32
  %v2322 = vpop.permute.xlu0 %2321
  %2323 = vrot.lane.b32.xlu0 %v2308, 32
  %v2324 = vpop.permute.xlu0 %2323
  %v2333 = vsel %vm82, %v2277, %v2310
  %v2334 = vsel %vm82, %v2278, %v2312
  %v2335 = vsel %vm82, %v2279, %v2314
  %v2336 = vsel %vm82, %v2280, %v2316
  %v2337 = vsel %vm82, %v2281, %v2318
  %v2338 = vsel %vm82, %v2282, %v2320
  %v2339 = vsel %vm82, %v2283, %v2322
  %v2340 = vsel %vm82, %v2284, %v2324
  %v2349 = vcombine.low %v2333, %v2334
  %v2350 = vcombine.low %v2335, %v2336
  %v2351 = vcombine.low %v2337, %v2338
  %v2352 = vcombine.low %v2339, %v2340
  %v2357 = vpack.c.bf16 %v2350, %v2349
  %v2358 = vpack.c.bf16 %v2352, %v2351
  %v2360 = vsel %vm2200, %v2357, 0
  %v2363 = vsel %vm2200, %v2358, 0
  %2365 = vmatprep.subr.bf16.mxu0 0
  %2366 = vmatpush1.bf16.msra.mxu0 %v2192
  %2367 = vmatprep.subr.bf16.mxu0 0
  %2368 = vmatpush1.bf16.msra.mxu0 %v2193
  %2369 = vmatprep.subr.bf16.mxu0 0
  %2370 = vmatpush1.bf16.msra.mxu0 %v2194
  %2371 = vmatprep.subr.bf16.mxu0 0
  %2372 = vmatpush1.bf16.msra.mxu0 %v2195
  %2373 = vmatprep.subr.bf16.mxu0 0
  %2374 = vmatpush1.bf16.msra.mxu0 0
  %2375 = vmatprep.subr.bf16.mxu0 0
  %2376 = vmatpush1.bf16.msra.mxu0 0
  %2377 = vmatprep.subr.bf16.mxu0 0
  %2378 = vmatpush1.bf16.msra.mxu0 0
  %2379 = vmatprep.subr.bf16.mxu0 0
  %2380 = vmatpush1.bf16.msra.mxu0 0
  %2381 = vmatprep.subr.bf16.mxu0 0
  %2382 = vmatpush1.bf16.msra.mxu0 0
  %2383 = vmatprep.subr.bf16.mxu0 0
  %2384 = vmatpush1.bf16.msra.mxu0 0
  %2385 = vmatprep.subr.bf16.mxu0 0
  %2386 = vmatpush1.bf16.msra.mxu0 0
  %2387 = vmatprep.subr.bf16.mxu0 0
  %2388 = vmatpush1.bf16.msra.mxu0 0
  %2389 = vmatprep.subr.bf16.mxu0 0
  %2390 = vmatpush1.bf16.msra.mxu0 0
  %2391 = vmatprep.subr.bf16.mxu0 0
  %2392 = vmatpush1.bf16.msra.mxu0 0
  %2393 = vmatprep.subr.bf16.mxu0 0
  %2394 = vmatpush1.bf16.msra.mxu0 0
  %2395 = vmatprep.subr.bf16.mxu0 0
  %2396 = vmatpush1.bf16.msra.mxu0 0
  %2397 = vmatprep.mubr.bf16.mxu0 0
  %2398 = vmatmul.mubr.bf16.gmra.mrb[0].mxu0 %v2360
  %v2399 = vpop.f32.mrb[0].mxu0
  %v2400 = vadd.f32 %v2174, %v2399
  %v2401 = vpop.f32.mrb[0].mxu0
  %v2402 = vpop.f32.mrb[0].mxu0
  %v2403 = vadd.f32 %v2174, %v2402
  %v2404 = vpop.f32.mrb[0].mxu0
  %2405 = vmatprep.mubr.bf16.mxu0 0
  %2406 = vmatmul.mubr.bf16.gmra.mrb[0].mxu0 %v2363
  %v2407 = vpop.f32.mrb[0].mxu0
  %v2408 = vadd.f32 %v2174, %v2407
  %v2409 = vpop.f32.mrb[0].mxu0
  %v2410 = vpop.f32.mrb[0].mxu0
  %v2411 = vadd.f32 %v2174, %v2410
  %v2412 = vpop.f32.mrb[0].mxu0
  %2413 = vdwg.mxu0
  %v2418 = vcombine.high %v2400, %v2400
  %v2419 = vcombine.high %v2403, %v2403
  %v2420 = vcombine.high %v2408, %v2408
  %v2421 = vcombine.high %v2411, %v2411
  %s2426 = scalar_lea.vmem %s8, 32
  %2427 = vst.msk [vmem:[%s2426] sm:$0xf] %vm2268, %v2400
  %2428 = vst.msk [vmem:[%s2426 + $0x4] sm:$0xf] %vm2268, %v2418
  %2429 = vst.msk [vmem:[%s2426 + $0x8] sm:$0xf] %vm2268, %v2403
  %2430 = vst.msk [vmem:[%s2426 + $0xc] sm:$0xf] %vm2268, %v2419
  %2431 = vst.msk [vmem:[%s2426 + $0x10] sm:$0xf] %vm2268, %v2408
  %2432 = vst.msk [vmem:[%s2426 + $0x14] sm:$0xf] %vm2268, %v2420
  %2433 = vst.msk [vmem:[%s2426 + $0x18] sm:$0xf] %vm2268, %v2411
  %2434 = vst.msk [vmem:[%s2426 + $0x1c] sm:$0xf] %vm2268, %v2421
  // Predicated region
  $region34: #{encoder_forward.1} parent=0 // pred_check
    _
  $region35: #{encoder_forward.1} parent=0 // pred_check_branch
    %2436 = sbr.rel (0) target = $region37
  $region36: #{encoder_forward.1} parent=0 // pred_region
    _
  $region37: #{encoder_forward.1} parent=0 // pred_fallthru
    _
  // Predicated region
  $region38: #{encoder_forward.1} parent=0 // pred_check
    _
  $region39: #{encoder_forward.1} parent=0 // pred_check_branch
    %2438 = sbr.rel (0) target = $region41
  $region40: #{encoder_forward.1} parent=0 // pred_region
    _
  $region41: #{encoder_forward.1} parent=0 // pred_fallthru
    _

</llo_original>
